<compile_context>
chip_gen: v5e
topology: v5e:2x2
jax: 0.10.0
libtpu: 0.0.40
codegen_flags: <defaults>
</compile_context>

<pallas_src>
import functools
import math

import numpy as np
import jax
import jax.numpy as jnp
from jax import lax
from jax.experimental import pallas as pl
from jax.experimental.pallas import tpu as pltpu


# ---------------------------------------------------------------------------
# Embedder: out[n] = emb_table[ids[n]] * sqrt(d_model)
# ---------------------------------------------------------------------------

_RESIDENT_TABLE_MAX_BYTES = 40 * 1024 * 1024  # safe even for v7x's 64 MiB VMEM


def _embed_block_kernel(ids_smem, emb_ref, out_ref, *, scale, block_tokens):
    """Gather `block_tokens` rows from the VMEM-resident table, scale, store."""
    base = pl.program_id(0) * block_tokens

    def body(t, carry):
        tok = ids_smem[base + t]
        out_ref[pl.ds(t, 1), :] = emb_ref[pl.ds(tok, 1), :] * scale
        return carry

    lax.fori_loop(0, block_tokens, body, 0, unroll=block_tokens <= 64)


def _embed_row_kernel(ids_smem, row_ref, out_ref, *, scale):
    # Fallback path: the gather is expressed through the BlockSpec index_map.
    del ids_smem
    out_ref[...] = row_ref[...] * scale


def embedder_forward(ids, emb_table, *, block_tokens=256):
    """Pallas equivalent of Embedder.forward: emb_table[ids] * sqrt(d_model)."""
    B, S = ids.shape
    voc_size, d_model = emb_table.shape
    N = B * S
    scale = float(math.sqrt(d_model))
    flat_ids = ids.reshape(N).astype(jnp.int32)

    table_bytes = voc_size * d_model * emb_table.dtype.itemsize
    if table_bytes <= _RESIDENT_TABLE_MAX_BYTES:
        # ---- fast path: table resident in VMEM, T tokens per grid step -----
        T = min(block_tokens, max(8, ((N + 7) // 8) * 8))
        T = ((T + 7) // 8) * 8                      # sublane-dense f32 tiles
        n_blocks = (N + T - 1) // T
        N_pad = n_blocks * T
        if N_pad != N:
            flat_ids = jnp.pad(flat_ids, (0, N_pad - N))

        out_block_bytes = T * d_model * 4
        vmem_needed = table_bytes + 4 * out_block_bytes + (1 << 20)
        vmem_limit = None if vmem_needed <= (32 << 20) else int(vmem_needed * 1.25)

        kernel = functools.partial(_embed_block_kernel, scale=scale,
                                   block_tokens=T)
        out = pl.pallas_call(
            kernel,
            out_shape=jax.ShapeDtypeStruct((N_pad, d_model), emb_table.dtype),
            grid_spec=pltpu.PrefetchScalarGridSpec(
                num_scalar_prefetch=1,              # flat_ids -> SMEM
                grid=(n_blocks,),
                in_specs=[
                    # table resident across the grid (constant block index)
                    pl.BlockSpec((voc_size, d_model), lambda i, ids_ref: (0, 0)),
                ],
                out_specs=pl.BlockSpec((T, d_model), lambda i, ids_ref: (i, 0)),
            ),
            compiler_params=pltpu.CompilerParams(
                dimension_semantics=("parallel",),  # shard tokens on v7x TCs
                vmem_limit_bytes=vmem_limit,
            ),
        )(flat_ids, emb_table)
        out = out[:N]
    else:
        # ---- fallback: data-dependent row gather via index_map -------------
        # TODO(synk): replace with a manual double-buffered DMA gather for
        # very large vocabularies.
        kernel = functools.partial(_embed_row_kernel, scale=scale)
        out = pl.pallas_call(
            kernel,
            out_shape=jax.ShapeDtypeStruct((N, d_model), emb_table.dtype),
            grid_spec=pltpu.PrefetchScalarGridSpec(
                num_scalar_prefetch=1,
                grid=(N,),
                in_specs=[
                    pl.BlockSpec((1, d_model), lambda i, ids_ref: (ids_ref[i], 0),
                                 pipeline_mode=pl.Buffered(3)),
                ],
                out_specs=pl.BlockSpec((1, d_model), lambda i, ids_ref: (i, 0)),
            ),
            compiler_params=pltpu.CompilerParams(
                dimension_semantics=("arbitrary",)),
        )(flat_ids, emb_table)

    return out.reshape(B, S, d_model)


# ---------------------------------------------------------------------------
# Linear (+ bias, optional ReLU)
# ---------------------------------------------------------------------------

def _linear_kernel(x_ref, w_ref, b_ref, o_ref, *, act):
    y = jnp.dot(x_ref[...], w_ref[...], preferred_element_type=jnp.float32)
    y = y + b_ref[...]
    if act == "relu":
        y = jnp.maximum(y, 0.0)
    o_ref[...] = y.astype(o_ref.dtype)


def pallas_linear(x, w, b, act=None):
    lead = x.shape[:-1]
    K = x.shape[-1]
    N = w.shape[1]
    M = int(np.prod(lead)) if lead else 1
    # TODO(synk): tile over rows / K for shapes that exceed VMEM.
    out = pl.pallas_call(
        functools.partial(_linear_kernel, act=act),
        out_shape=jax.ShapeDtypeStruct((M, N), x.dtype),
    )(x.reshape(M, K), w, b.reshape(1, N))
    return out.reshape(*lead, N)


# ---------------------------------------------------------------------------
# nn.LayerNorm (biased var, eps inside sqrt) and the custom `Norm`
# ---------------------------------------------------------------------------

def _layer_norm_kernel(x_ref, g_ref, b_ref, o_ref, *, eps):
    x = x_ref[...]
    mu = jnp.mean(x, axis=-1, keepdims=True)
    xc = x - mu
    var = jnp.mean(xc * xc, axis=-1, keepdims=True)
    o_ref[...] = (xc / jnp.sqrt(var + eps) * g_ref[...] + b_ref[...]).astype(o_ref.dtype)


def pallas_layer_norm(x, gamma, beta, eps=1e-5):
    lead = x.shape[:-1]
    D = x.shape[-1]
    M = int(np.prod(lead))
    out = pl.pallas_call(
        functools.partial(_layer_norm_kernel, eps=eps),
        out_shape=jax.ShapeDtypeStruct((M, D), x.dtype),
    )(x.reshape(M, D), gamma.reshape(1, D), beta.reshape(1, D))
    return out.reshape(*lead, D)


def _custom_norm_kernel(x_ref, a_ref, b_ref, o_ref, *, eps, dim):
    x = x_ref[...]
    mu = jnp.mean(x, axis=-1, keepdims=True)
    xc = x - mu
    var = jnp.sum(xc * xc, axis=-1, keepdims=True) / (dim - 1)  # unbiased (torch.std)
    std = jnp.sqrt(var)
    o_ref[...] = (a_ref[...] * xc / (std + eps) + b_ref[...]).astype(o_ref.dtype)


def pallas_custom_norm(x, alpha, bias, eps=1e-6):
    lead = x.shape[:-1]
    D = x.shape[-1]
    M = int(np.prod(lead))
    out = pl.pallas_call(
        functools.partial(_custom_norm_kernel, eps=eps, dim=D),
        out_shape=jax.ShapeDtypeStruct((M, D), x.dtype),
    )(x.reshape(M, D), alpha.reshape(1, D), bias.reshape(1, D))
    return out.reshape(*lead, D)


# ---------------------------------------------------------------------------
# Fused scaled-dot-product attention, one (batch*head) per grid step
# ---------------------------------------------------------------------------

def _attention_kernel(q_ref, k_ref, v_ref, m_ref, o_ref, *, inv_scale):
    e = jnp.einsum("bqd,bkd->bqk", q_ref[...], k_ref[...],
                   preferred_element_type=jnp.float32) * inv_scale
    e = jnp.where(m_ref[...] == 0, -1e10, e)
    e = e - jnp.max(e, axis=-1, keepdims=True)
    p = jnp.exp(e)
    p = p / jnp.sum(p, axis=-1, keepdims=True)
    o_ref[...] = jnp.einsum("bqk,bkd->bqd", p, v_ref[...],
                            preferred_element_type=jnp.float32).astype(o_ref.dtype)


def pallas_attention(q, k, v, mask, scale):
    BH, Sq, Dh = q.shape
    Sk = k.shape[1]
    kernel = functools.partial(_attention_kernel, inv_scale=1.0 / scale)
    return pl.pallas_call(
        kernel,
        out_shape=jax.ShapeDtypeStruct((BH, Sq, Dh), q.dtype),
        grid=(BH,),
        in_specs=[
            pl.BlockSpec((1, Sq, Dh), lambda i: (i, 0, 0)),
            pl.BlockSpec((1, Sk, Dh), lambda i: (i, 0, 0)),
            pl.BlockSpec((1, Sk, Dh), lambda i: (i, 0, 0)),
            pl.BlockSpec((1, Sq, Sk), lambda i: (i, 0, 0)),
        ],
        out_specs=pl.BlockSpec((1, Sq, Dh), lambda i: (i, 0, 0)),
        compiler_params=pltpu.CompilerParams(dimension_semantics=("parallel",)),
    )(q, k, v, mask)


def pallas_multihead_attention(p, q, k, v, mask, num_heads):
    B, Sq, D = q.shape
    Sk = k.shape[1]
    Dh = D // num_heads
    Q = pallas_linear(q, p["wq"], p["bq"])
    K = pallas_linear(k, p["wk"], p["bk"])
    V = pallas_linear(v, p["wv"], p["bv"])

    def to_heads(x, S):
        return x.reshape(B, S, num_heads, Dh).transpose(0, 2, 1, 3).reshape(
            B * num_heads, S, Dh)

    Qh, Kh, Vh = to_heads(Q, Sq), to_heads(K, Sk), to_heads(V, Sk)

    if mask is None:
        mask = jnp.ones((B, Sq, Sk), jnp.int32)
    m4 = jnp.broadcast_to(mask[:, None, :, :].astype(jnp.int32),
                          (B, num_heads, Sq, Sk))
    mask_bh = m4.reshape(B * num_heads, Sq, Sk)

    ctx = pallas_attention(Qh, Kh, Vh, mask_bh, scale=math.sqrt(Dh))
    x = ctx.reshape(B, num_heads, Sq, Dh).transpose(0, 2, 1, 3).reshape(B, Sq, D)
    return pallas_linear(x, p["wo"], p["bo"])


# ---------------------------------------------------------------------------
# Feed-forward, encoder/decoder layers, generator
# ---------------------------------------------------------------------------

def pallas_feed_forward(p, x):
    h = pallas_linear(x, p["w1"], p["b1"], act="relu")
    return pallas_linear(h, p["w2"], p["b2"])


def pure_encoder_layer_fwd(p, x, src_mask, H):
    n = pallas_layer_norm(x, p["ln1"]["g"], p["ln1"]["b"])
    x = x + pallas_multihead_attention(p["self_attn"], n, n, n, src_mask, H)
    n = pallas_layer_norm(x, p["ln2"]["g"], p["ln2"]["b"])
    x = x + pallas_feed_forward(p["ffn"], n)
    return x


def decoder_layer_fwd(p, x, memory, src_mask, trg_mask, H):
    n = pallas_layer_norm(x, p["ln1"]["g"], p["ln1"]["b"])
    x = x + pallas_multihead_attention(p["self_attn"], n, n, n, trg_mask, H)
    n = pallas_layer_norm(x, p["ln2"]["g"], p["ln2"]["b"])
    x = x + pallas_multihead_attention(p["enc_attn"], n, memory, memory, src_mask, H)
    n = pallas_layer_norm(x, p["ln3"]["g"], p["ln3"]["b"])
    x = x + pallas_feed_forward(p["ffn"], n)
    return x


def _generator_kernel(x_ref, w1_ref, b1_ref, w2_ref, b2_ref, o_ref):
    h = jnp.dot(x_ref[...], w1_ref[...], preferred_element_type=jnp.float32) + b1_ref[...]
    h = jnp.maximum(h, 0.0)
    y = jnp.dot(h, w2_ref[...], preferred_element_type=jnp.float32) + b2_ref[...]
    y = y - jnp.max(y, axis=-1, keepdims=True)
    o_ref[...] = (y - jnp.log(jnp.sum(jnp.exp(y), axis=-1, keepdims=True))).astype(o_ref.dtype)


def pallas_generator(p, x):
    lead = x.shape[:-1]
    D = x.shape[-1]
    V = p["w1"].shape[1]
    M = int(np.prod(lead))
    out = pl.pallas_call(
        _generator_kernel,
        out_shape=jax.ShapeDtypeStruct((M, V), x.dtype),
    )(x.reshape(M, D), p["w1"], p["b1"].reshape(1, V), p["w2"], p["b2"].reshape(1, V))
    return out.reshape(*lead, V)


# ---------------------------------------------------------------------------
# Full model forward
# ---------------------------------------------------------------------------

def positional_encoding(seq_len, d_model):
    pe = np.zeros((seq_len, d_model), dtype=np.float32)
    odds = np.arange(0, d_model, 2)
    evens = np.arange(1, d_model, 2)
    for pos in range(seq_len):
        pe[pos, odds] = np.sin(pos / 10000 ** (odds / d_model))
        pe[pos, evens] = np.cos(pos / 10000 ** (evens / d_model))
    return jnp.asarray(pe)


def encoder_fwd(p, src, src_mask, H, pe):
    x = src + pe[None, :src.shape[1], :]
    for lp in p["layers"]:
        x = pure_encoder_layer_fwd(lp, x, src_mask, H)
    return pallas_custom_norm(x, p["norm"]["alpha"], p["norm"]["bias"], eps=1e-6)


def decoder_fwd(p, trg, memory, trg_mask, src_mask, H, pe):
    x = embedder_forward(trg, p["emb"])
    x = x + pe[None, :trg.shape[1], :]
    for lp in p["layers"]:
        x = decoder_layer_fwd(lp, x, memory, src_mask, trg_mask, H)
    return pallas_custom_norm(x, p["norm"]["alpha"], p["norm"]["bias"], eps=1e-6)


def rgb_only_transformer_fwd(params, src_rgb, trg, src_rgb_mask, trg_mask, *, H, pe):
    memory = encoder_fwd(params["encoder"], src_rgb, src_rgb_mask, H, pe)
    dec = decoder_fwd(params["decoder"], trg, memory, trg_mask, src_rgb_mask, H, pe)
    return pallas_generator(params["generator"], dec)


# ---------------------------------------------------------------------------
# Pure-JAX reference (mirrors the PyTorch module in eval mode)
# ---------------------------------------------------------------------------

def _ref_linear(x, w, b):
    return x @ w + b


def _ref_layer_norm(x, g, b, eps=1e-5):
    mu = x.mean(-1, keepdims=True)
    var = ((x - mu) ** 2).mean(-1, keepdims=True)
    return (x - mu) / jnp.sqrt(var + eps) * g + b


def _ref_custom_norm(x, a, b, eps=1e-6):
    mu = x.mean(-1, keepdims=True)
    std = jnp.std(x, axis=-1, keepdims=True, ddof=1)
    return a * (x - mu) / (std + eps) + b


def _ref_mha(p, q, k, v, mask, H):
    B, Sq, D = q.shape
    Sk = k.shape[1]
    Dh = D // H
    Q = _ref_linear(q, p["wq"], p["bq"]).reshape(B, Sq, H, Dh).transpose(0, 2, 1, 3)
    K = _ref_linear(k, p["wk"], p["bk"]).reshape(B, Sk, H, Dh).transpose(0, 2, 1, 3)
    V = _ref_linear(v, p["wv"], p["bv"]).reshape(B, Sk, H, Dh).transpose(0, 2, 1, 3)
    e = jnp.einsum("bhqd,bhkd->bhqk", Q, K) / math.sqrt(Dh)
    e = jnp.where(mask[:, None].astype(jnp.int32) == 0, -1e10, e)
    a = jax.nn.softmax(e, axis=-1)
    x = jnp.einsum("bhqk,bhkd->bhqd", a, V).transpose(0, 2, 1, 3).reshape(B, Sq, D)
    return _ref_linear(x, p["wo"], p["bo"])


def _ref_ffn(p, x):
    return _ref_linear(jnp.maximum(_ref_linear(x, p["w1"], p["b1"]), 0.0),
                       p["w2"], p["b2"])


def reference_forward(params, src_rgb, trg, src_mask, trg_mask, *, H, pe):
    x = src_rgb + pe[None, :src_rgb.shape[1], :]
    for lp in params["encoder"]["layers"]:
        n = _ref_layer_norm(x, lp["ln1"]["g"], lp["ln1"]["b"])
        x = x + _ref_mha(lp["self_attn"], n, n, n, src_mask, H)
        n = _ref_layer_norm(x, lp["ln2"]["g"], lp["ln2"]["b"])
        x = x + _ref_ffn(lp["ffn"], n)
    memory = _ref_custom_norm(x, params["encoder"]["norm"]["alpha"],
                              params["encoder"]["norm"]["bias"])

    d = params["decoder"]
    x = jnp.take(d["emb"], trg, axis=0) * math.sqrt(d["emb"].shape[1])
    x = x + pe[None, :trg.shape[1], :]
    for lp in d["layers"]:
        n = _ref_layer_norm(x, lp["ln1"]["g"], lp["ln1"]["b"])
        x = x + _ref_mha(lp["self_attn"], n, n, n, trg_mask, H)
        n = _ref_layer_norm(x, lp["ln2"]["g"], lp["ln2"]["b"])
        x = x + _ref_mha(lp["enc_attn"], n, memory, memory, src_mask, H)
        n = _ref_layer_norm(x, lp["ln3"]["g"], lp["ln3"]["b"])
        x = x + _ref_ffn(lp["ffn"], n)
    x = _ref_custom_norm(x, d["norm"]["alpha"], d["norm"]["bias"])

    g = params["generator"]
    h = jnp.maximum(_ref_linear(x, g["w1"], g["b1"]), 0.0)
    y = _ref_linear(h, g["w2"], g["b2"])
    return jax.nn.log_softmax(y, axis=-1)


# ---------------------------------------------------------------------------
# Parameter init (xavier for matrices, ones/zeros for norms & biases)
# ---------------------------------------------------------------------------

def init_params(key, *, voc, d_model, H, N, d_ff):
    keys = iter(jax.random.split(key, 256))

    def xavier(shape):
        fan_in, fan_out = shape
        lim = math.sqrt(6.0 / (fan_in + fan_out))
        return jax.random.uniform(next(keys), shape, jnp.float32, -lim, lim)

    def mha_p():
        return {
            "wq": xavier((d_model, d_model)), "bq": jnp.zeros((d_model,), jnp.float32),
            "wk": xavier((d_model, d_model)), "bk": jnp.zeros((d_model,), jnp.float32),
            "wv": xavier((d_model, d_model)), "bv": jnp.zeros((d_model,), jnp.float32),
            "wo": xavier((d_model, d_model)), "bo": jnp.zeros((d_model,), jnp.float32),
        }

    def ln_p():
        return {"g": jnp.ones((d_model,), jnp.float32),
                "b": jnp.zeros((d_model,), jnp.float32)}

    def ffn_p():
        return {"w1": xavier((d_model, d_ff)), "b1": jnp.zeros((d_ff,), jnp.float32),
                "w2": xavier((d_ff, d_model)), "b2": jnp.zeros((d_model,), jnp.float32)}

    def norm_p():
        return {"alpha": jnp.ones((d_model,), jnp.float32),
                "bias": jnp.zeros((d_model,), jnp.float32)}

    enc_layers = [{"ln1": ln_p(), "ln2": ln_p(),
                   "self_attn": mha_p(), "ffn": ffn_p()} for _ in range(N)]
    dec_layers = [{"ln1": ln_p(), "ln2": ln_p(), "ln3": ln_p(),
                   "self_attn": mha_p(), "enc_attn": mha_p(), "ffn": ffn_p()}
                  for _ in range(N)]
    return {
        "encoder": {"layers": enc_layers, "norm": norm_p()},
        "decoder": {"emb": xavier((voc, d_model)),
                    "layers": dec_layers, "norm": norm_p()},
        "generator": {"w1": xavier((d_model, voc)), "b1": jnp.zeros((voc,), jnp.float32),
                      "w2": xavier((voc, voc)), "b2": jnp.zeros((voc,), jnp.float32)},
    }


# ---------------------------------------------------------------------------
# Demo
# ---------------------------------------------------------------------------

if __name__ == "__main__":
    d_model, H, N_layers, d_ff = 128, 4, 2, 256
    voc = 64
    B, S_src, S_trg = 2, 10, 8
    seq_len = 16
    pad_idx = 0

    key = jax.random.PRNGKey(0)
    k_par, k_src, k_trg = jax.random.split(key, 3)

    params = init_params(k_par, voc=voc, d_model=d_model, H=H, N=N_layers, d_ff=d_ff)
    pe = positional_encoding(seq_len, d_model)

    src_rgb = jax.random.normal(k_src, (B, S_src, d_model), dtype=jnp.float32)
    trg = jax.random.randint(k_trg, (B, S_trg), 1, voc, dtype=jnp.int32)

    src_mask = jnp.ones((B, 1, S_src), dtype=jnp.int32)
    causal = jnp.tril(jnp.ones((S_trg, S_trg), dtype=jnp.int32))
    trg_mask = (trg != pad_idx)[:, None, :].astype(jnp.int32) * causal[None, :, :]

    fwd = jax.jit(lambda p, s, t, sm, tm: rgb_only_transformer_fwd(
        p, s, t, sm, tm, H=H, pe=pe))
    out = jax.block_until_ready(fwd(params, src_rgb, trg, src_mask, trg_mask))

    ref = jax.block_until_ready(
        reference_forward(params, src_rgb, trg, src_mask, trg_mask, H=H, pe=pe))

    assert out.shape == (B, S_trg, voc)
    max_err = float(jnp.max(jnp.abs(out - ref)))
    assert jnp.allclose(out, ref, atol=1e-2, rtol=1e-2), f"max_abs_err={max_err}"

    print("KERNEL_OK")
</pallas_src>

<mosaic_0001>
module attributes {stable_mosaic.version = 11 : i64} {
  func.func @_linear_kernel(%arg0: memref<20x128xf32, #tpu.memory_space<vmem>>, %arg1: memref<128x128xf32, #tpu.memory_space<vmem>>, %arg2: memref<1x128xf32, #tpu.memory_space<vmem>>, %arg3: memref<20x128xf32, #tpu.memory_space<vmem>>) attributes {dimension_semantics = [], scalar_prefetch = 0 : i64, scratch_operands = 0 : i64, tpu.core_type = #tpu.core_type<tc>} {
    %c0 = arith.constant 0 : index
    %c0_0 = arith.constant 0 : index
    %0 = vector.load %arg0[%c0, %c0_0] : memref<20x128xf32, #tpu.memory_space<vmem>>, vector<20x128xf32>
    %c0_1 = arith.constant 0 : index
    %c0_2 = arith.constant 0 : index
    %1 = vector.load %arg1[%c0_1, %c0_2] : memref<128x128xf32, #tpu.memory_space<vmem>>, vector<128x128xf32>
    %cst = arith.constant dense<0.000000e+00> : vector<20x128xf32>
    %2 = tpu.matmul %0, %1, %cst {dimension_numbers = #tpu.dot_dimension_numbers<[1], [0], [0], [1], [0, 0, 1, 1], [], []>} : vector<20x128xf32>, vector<128x128xf32>, vector<20x128xf32> -> vector<20x128xf32>
    %c0_3 = arith.constant 0 : index
    %c0_4 = arith.constant 0 : index
    %3 = vector.load %arg2[%c0_3, %c0_4] : memref<1x128xf32, #tpu.memory_space<vmem>>, vector<1x128xf32>
    %4 = vector.broadcast %3 : vector<1x128xf32> to vector<20x128xf32>
    %5 = arith.addf %2, %4 : vector<20x128xf32>
    %c0_5 = arith.constant 0 : index
    %c0_6 = arith.constant 0 : index
    %6 = vector.load %arg3[%c0_5, %c0_6] : memref<20x128xf32, #tpu.memory_space<vmem>>, vector<20x128xf32>
    tpu.vector_store %arg3[%c0_5, %c0_6], %5 {strides = array<i32>} : memref<20x128xf32, #tpu.memory_space<vmem>>, vector<20x128xf32>,
    return
  }
}

module attributes {stable_mosaic.version = 11 : i64} {
  func.func @_layer_norm_kernel(%arg0: memref<20x128xf32, #tpu.memory_space<vmem>>, %arg1: memref<1x128xf32, #tpu.memory_space<vmem>>, %arg2: memref<1x128xf32, #tpu.memory_space<vmem>>, %arg3: memref<20x128xf32, #tpu.memory_space<vmem>>) attributes {dimension_semantics = [], scalar_prefetch = 0 : i64, scratch_operands = 0 : i64, tpu.core_type = #tpu.core_type<tc>} {
    %c0 = arith.constant 0 : index
    %c0_0 = arith.constant 0 : index
    %0 = vector.load %arg0[%c0, %c0_0] : memref<20x128xf32, #tpu.memory_space<vmem>>, vector<20x128xf32>
    %cst = arith.constant dense<0.000000e+00> : vector<20xf32>
    %1 = vector.multi_reduction <add>, %0, %cst [1] : vector<20x128xf32> to vector<20xf32>
    %2 = vector.shape_cast %1 : vector<20xf32> to vector<20x1xf32>
    %cst_1 = arith.constant 1.280000e+02 : f32
    %3 = vector.broadcast %cst_1 : f32 to vector<20x1xf32>
    %4 = arith.divf %2, %3 : vector<20x1xf32>
    %5 = vector.broadcast %4 : vector<20x1xf32> to vector<20x128xf32>
    %6 = arith.subf %0, %5 : vector<20x128xf32>
    %7 = arith.mulf %6, %6 : vector<20x128xf32>
    %cst_2 = arith.constant dense<0.000000e+00> : vector<20xf32>
    %8 = vector.multi_reduction <add>, %7, %cst_2 [1] : vector<20x128xf32> to vector<20xf32>
    %9 = vector.shape_cast %8 : vector<20xf32> to vector<20x1xf32>
    %cst_3 = arith.constant 1.280000e+02 : f32
    %10 = vector.broadcast %cst_3 : f32 to vector<20x1xf32>
    %11 = arith.divf %9, %10 : vector<20x1xf32>
    %cst_4 = arith.constant 9.99999974E-6 : f32
    %12 = vector.broadcast %cst_4 : f32 to vector<20x1xf32>
    %13 = arith.addf %11, %12 : vector<20x1xf32>
    %14 = math.sqrt %13 : vector<20x1xf32>
    %15 = vector.broadcast %14 : vector<20x1xf32> to vector<20x128xf32>
    %16 = arith.divf %6, %15 : vector<20x128xf32>
    %c0_5 = arith.constant 0 : index
    %c0_6 = arith.constant 0 : index
    %17 = vector.load %arg1[%c0_5, %c0_6] : memref<1x128xf32, #tpu.memory_space<vmem>>, vector<1x128xf32>
    %18 = vector.broadcast %17 : vector<1x128xf32> to vector<20x128xf32>
    %19 = arith.mulf %16, %18 : vector<20x128xf32>
    %c0_7 = arith.constant 0 : index
    %c0_8 = arith.constant 0 : index
    %20 = vector.load %arg2[%c0_7, %c0_8] : memref<1x128xf32, #tpu.memory_space<vmem>>, vector<1x128xf32>
    %21 = vector.broadcast %20 : vector<1x128xf32> to vector<20x128xf32>
    %22 = arith.addf %19, %21 : vector<20x128xf32>
    %c0_9 = arith.constant 0 : index
    %c0_10 = arith.constant 0 : index
    %23 = vector.load %arg3[%c0_9, %c0_10] : memref<20x128xf32, #tpu.memory_space<vmem>>, vector<20x128xf32>
    tpu.vector_store %arg3[%c0_9, %c0_10], %22 {strides = array<i32>} : memref<20x128xf32, #tpu.memory_space<vmem>>, vector<20x128xf32>,
    return
  }
}

module attributes {stable_mosaic.version = 11 : i64} {
  func.func @_attention_kernel(%arg0: i32, %arg1: memref<1x10x32xf32, #tpu.memory_space<vmem>>, %arg2: memref<1x10x32xf32, #tpu.memory_space<vmem>>, %arg3: memref<1x10x32xf32, #tpu.memory_space<vmem>>, %arg4: memref<1x10x10xi32, #tpu.memory_space<vmem>>, %arg5: memref<1x10x32xf32, #tpu.memory_space<vmem>>) attributes {dimension_semantics = [#tpu.dimension_semantics<parallel>], iteration_bounds = array<i64: 8>, scalar_prefetch = 0 : i64, scratch_operands = 0 : i64, tpu.core_type = #tpu.core_type<tc>, window_params = [{transform_indices = @transform_0, window_bounds = array<i64: 1, 10, 32>}, {transform_indices = @transform_1, window_bounds = array<i64: 1, 10, 32>}, {transform_indices = @transform_2, window_bounds = array<i64: 1, 10, 32>}, {transform_indices = @transform_3, window_bounds = array<i64: 1, 10, 10>}, {transform_indices = @transform_4, window_bounds = array<i64: 1, 10, 32>}]} {
    %c0 = arith.constant 0 : index
    %c0_0 = arith.constant 0 : index
    %c0_1 = arith.constant 0 : index
    %0 = vector.load %arg1[%c0, %c0_0, %c0_1] : memref<1x10x32xf32, #tpu.memory_space<vmem>>, vector<1x10x32xf32>
    %c0_2 = arith.constant 0 : index
    %c0_3 = arith.constant 0 : index
    %c0_4 = arith.constant 0 : index
    %1 = vector.load %arg2[%c0_2, %c0_3, %c0_4] : memref<1x10x32xf32, #tpu.memory_space<vmem>>, vector<1x10x32xf32>
    "tpu.trace_start"() <{level = 10 : i32, message = "bqd,bkd->bqk"}> : () -> ()
    %cst = arith.constant dense<0.000000e+00> : vector<1x10x10xf32>
    %2 = tpu.matmul %0, %1, %cst {dimension_numbers = #tpu.dot_dimension_numbers<[2], [2], [1], [1], [0, 0, 0, 1, 1, 1], [0], [0]>} : vector<1x10x32xf32>, vector<1x10x32xf32>, vector<1x10x10xf32> -> vector<1x10x10xf32>
    "tpu.trace_stop"() : () -> ()
    %cst_5 = arith.constant 0.176776692 : f32
    %3 = vector.broadcast %cst_5 : f32 to vector<1x10x10xf32>
    %4 = arith.mulf %2, %3 : vector<1x10x10xf32>
    %c0_6 = arith.constant 0 : index
    %c0_7 = arith.constant 0 : index
    %c0_8 = arith.constant 0 : index
    %5 = vector.load %arg4[%c0_6, %c0_7, %c0_8] : memref<1x10x10xi32, #tpu.memory_space<vmem>>, vector<1x10x10xi32>
    %c0_i32 = arith.constant 0 : i32
    %6 = vector.broadcast %c0_i32 : i32 to vector<1x10x10xi32>
    %7 = arith.cmpi eq, %5, %6 : vector<1x10x10xi32>
    %cst_9 = arith.constant -1.000000e+10 : f32
    %8 = vector.broadcast %cst_9 : f32 to vector<1x10x10xf32>
    %9 = arith.select %7, %8, %4 : vector<1x10x10xi1>, vector<1x10x10xf32>
    %cst_10 = arith.constant dense<0xFF800000> : vector<1x10xf32>
    %10 = vector.multi_reduction <maximumf>, %9, %cst_10 [2] : vector<1x10x10xf32> to vector<1x10xf32>
    %11 = vector.shape_cast %10 : vector<1x10xf32> to vector<1x10x1xf32>
    %12 = vector.broadcast %11 : vector<1x10x1xf32> to vector<1x10x10xf32>
    %13 = arith.subf %9, %12 : vector<1x10x10xf32>
    %14 = math.exp %13 : vector<1x10x10xf32>
    %cst_11 = arith.constant dense<0.000000e+00> : vector<1x10xf32>
    %15 = vector.multi_reduction <add>, %14, %cst_11 [2] : vector<1x10x10xf32> to vector<1x10xf32>
    %16 = vector.shape_cast %15 : vector<1x10xf32> to vector<1x10x1xf32>
    %17 = vector.broadcast %16 : vector<1x10x1xf32> to vector<1x10x10xf32>
    %18 = arith.divf %14, %17 : vector<1x10x10xf32>
    %c0_12 = arith.constant 0 : index
    %c0_13 = arith.constant 0 : index
    %c0_14 = arith.constant 0 : index
    %19 = vector.load %arg3[%c0_12, %c0_13, %c0_14] : memref<1x10x32xf32, #tpu.memory_space<vmem>>, vector<1x10x32xf32>
    "tpu.trace_start"() <{level = 10 : i32, message = "bqk,bkd->bqd"}> : () -> ()
    %cst_15 = arith.constant dense<0.000000e+00> : vector<1x10x32xf32>
    %20 = tpu.matmul %18, %19, %cst_15 {dimension_numbers = #tpu.dot_dimension_numbers<[2], [1], [1], [2], [0, 0, 0, 1, 1, 2], [0], [0]>} : vector<1x10x10xf32>, vector<1x10x32xf32>, vector<1x10x32xf32> -> vector<1x10x32xf32>
    "tpu.trace_stop"() : () -> ()
    %c0_16 = arith.constant 0 : index
    %c0_17 = arith.constant 0 : index
    %c0_18 = arith.constant 0 : index
    %21 = vector.load %arg5[%c0_16, %c0_17, %c0_18] : memref<1x10x32xf32, #tpu.memory_space<vmem>>, vector<1x10x32xf32>
    tpu.vector_store %arg5[%c0_16, %c0_17, %c0_18], %20 {strides = array<i32>} : memref<1x10x32xf32, #tpu.memory_space<vmem>>, vector<1x10x32xf32>,
    return
  }
  func.func @transform_0(%arg0: i32) -> (i32, i32, i32) {
    %c0_i32 = arith.constant 0 : i32
    %c0_i32_0 = arith.constant 0 : i32
    %c0_i32_1 = arith.constant 0 : i32
    return %arg0, %c0_i32, %c0_i32_0 : i32, i32, i32
  }
  func.func @transform_1(%arg0: i32) -> (i32, i32, i32) {
    %c0_i32 = arith.constant 0 : i32
    %c0_i32_0 = arith.constant 0 : i32
    %c0_i32_1 = arith.constant 0 : i32
    return %arg0, %c0_i32, %c0_i32_0 : i32, i32, i32
  }
  func.func @transform_2(%arg0: i32) -> (i32, i32, i32) {
    %c0_i32 = arith.constant 0 : i32
    %c0_i32_0 = arith.constant 0 : i32
    %c0_i32_1 = arith.constant 0 : i32
    return %arg0, %c0_i32, %c0_i32_0 : i32, i32, i32
  }
  func.func @transform_3(%arg0: i32) -> (i32, i32, i32) {
    %c0_i32 = arith.constant 0 : i32
    %c0_i32_0 = arith.constant 0 : i32
    %c0_i32_1 = arith.constant 0 : i32
    return %arg0, %c0_i32, %c0_i32_0 : i32, i32, i32
  }
  func.func @transform_4(%arg0: i32) -> (i32, i32, i32) {
    %c0_i32 = arith.constant 0 : i32
    %c0_i32_0 = arith.constant 0 : i32
    %c0_i32_1 = arith.constant 0 : i32
    return %arg0, %c0_i32, %c0_i32_0 : i32, i32, i32
  }
}

module attributes {stable_mosaic.version = 11 : i64} {
  func.func @_linear_kernel(%arg0: memref<20x128xf32, #tpu.memory_space<vmem>>, %arg1: memref<128x256xf32, #tpu.memory_space<vmem>>, %arg2: memref<1x256xf32, #tpu.memory_space<vmem>>, %arg3: memref<20x256xf32, #tpu.memory_space<vmem>>) attributes {dimension_semantics = [], scalar_prefetch = 0 : i64, scratch_operands = 0 : i64, tpu.core_type = #tpu.core_type<tc>} {
    %c0 = arith.constant 0 : index
    %c0_0 = arith.constant 0 : index
    %0 = vector.load %arg0[%c0, %c0_0] : memref<20x128xf32, #tpu.memory_space<vmem>>, vector<20x128xf32>
    %c0_1 = arith.constant 0 : index
    %c0_2 = arith.constant 0 : index
    %1 = vector.load %arg1[%c0_1, %c0_2] : memref<128x256xf32, #tpu.memory_space<vmem>>, vector<128x256xf32>
    %cst = arith.constant dense<0.000000e+00> : vector<20x256xf32>
    %2 = tpu.matmul %0, %1, %cst {dimension_numbers = #tpu.dot_dimension_numbers<[1], [0], [0], [1], [0, 0, 1, 1], [], []>} : vector<20x128xf32>, vector<128x256xf32>, vector<20x256xf32> -> vector<20x256xf32>
    %c0_3 = arith.constant 0 : index
    %c0_4 = arith.constant 0 : index
    %3 = vector.load %arg2[%c0_3, %c0_4] : memref<1x256xf32, #tpu.memory_space<vmem>>, vector<1x256xf32>
    %4 = vector.broadcast %3 : vector<1x256xf32> to vector<20x256xf32>
    %5 = arith.addf %2, %4 : vector<20x256xf32>
    %cst_5 = arith.constant 0.000000e+00 : f32
    %6 = vector.broadcast %cst_5 : f32 to vector<20x256xf32>
    %7 = arith.maximumf %5, %6 : vector<20x256xf32>
    %c0_6 = arith.constant 0 : index
    %c0_7 = arith.constant 0 : index
    %8 = vector.load %arg3[%c0_6, %c0_7] : memref<20x256xf32, #tpu.memory_space<vmem>>, vector<20x256xf32>
    tpu.vector_store %arg3[%c0_6, %c0_7], %7 {strides = array<i32>} : memref<20x256xf32, #tpu.memory_space<vmem>>, vector<20x256xf32>,
    return
  }
}

module attributes {stable_mosaic.version = 11 : i64} {
  func.func @_linear_kernel(%arg0: memref<20x256xf32, #tpu.memory_space<vmem>>, %arg1: memref<256x128xf32, #tpu.memory_space<vmem>>, %arg2: memref<1x128xf32, #tpu.memory_space<vmem>>, %arg3: memref<20x128xf32, #tpu.memory_space<vmem>>) attributes {dimension_semantics = [], scalar_prefetch = 0 : i64, scratch_operands = 0 : i64, tpu.core_type = #tpu.core_type<tc>} {
    %c0 = arith.constant 0 : index
    %c0_0 = arith.constant 0 : index
    %0 = vector.load %arg0[%c0, %c0_0] : memref<20x256xf32, #tpu.memory_space<vmem>>, vector<20x256xf32>
    %c0_1 = arith.constant 0 : index
    %c0_2 = arith.constant 0 : index
    %1 = vector.load %arg1[%c0_1, %c0_2] : memref<256x128xf32, #tpu.memory_space<vmem>>, vector<256x128xf32>
    %cst = arith.constant dense<0.000000e+00> : vector<20x128xf32>
    %2 = tpu.matmul %0, %1, %cst {dimension_numbers = #tpu.dot_dimension_numbers<[1], [0], [0], [1], [0, 0, 1, 1], [], []>} : vector<20x256xf32>, vector<256x128xf32>, vector<20x128xf32> -> vector<20x128xf32>
    %c0_3 = arith.constant 0 : index
    %c0_4 = arith.constant 0 : index
    %3 = vector.load %arg2[%c0_3, %c0_4] : memref<1x128xf32, #tpu.memory_space<vmem>>, vector<1x128xf32>
    %4 = vector.broadcast %3 : vector<1x128xf32> to vector<20x128xf32>
    %5 = arith.addf %2, %4 : vector<20x128xf32>
    %c0_5 = arith.constant 0 : index
    %c0_6 = arith.constant 0 : index
    %6 = vector.load %arg3[%c0_5, %c0_6] : memref<20x128xf32, #tpu.memory_space<vmem>>, vector<20x128xf32>
    tpu.vector_store %arg3[%c0_5, %c0_6], %5 {strides = array<i32>} : memref<20x128xf32, #tpu.memory_space<vmem>>, vector<20x128xf32>,
    return
  }
}

module attributes {stable_mosaic.version = 11 : i64} {
  func.func @_custom_norm_kernel(%arg0: memref<20x128xf32, #tpu.memory_space<vmem>>, %arg1: memref<1x128xf32, #tpu.memory_space<vmem>>, %arg2: memref<1x128xf32, #tpu.memory_space<vmem>>, %arg3: memref<20x128xf32, #tpu.memory_space<vmem>>) attributes {dimension_semantics = [], scalar_prefetch = 0 : i64, scratch_operands = 0 : i64, tpu.core_type = #tpu.core_type<tc>} {
    %c0 = arith.constant 0 : index
    %c0_0 = arith.constant 0 : index
    %0 = vector.load %arg0[%c0, %c0_0] : memref<20x128xf32, #tpu.memory_space<vmem>>, vector<20x128xf32>
    %cst = arith.constant dense<0.000000e+00> : vector<20xf32>
    %1 = vector.multi_reduction <add>, %0, %cst [1] : vector<20x128xf32> to vector<20xf32>
    %2 = vector.shape_cast %1 : vector<20xf32> to vector<20x1xf32>
    %cst_1 = arith.constant 1.280000e+02 : f32
    %3 = vector.broadcast %cst_1 : f32 to vector<20x1xf32>
    %4 = arith.divf %2, %3 : vector<20x1xf32>
    %5 = vector.broadcast %4 : vector<20x1xf32> to vector<20x128xf32>
    %6 = arith.subf %0, %5 : vector<20x128xf32>
    %7 = arith.mulf %6, %6 : vector<20x128xf32>
    %cst_2 = arith.constant dense<0.000000e+00> : vector<20xf32>
    %8 = vector.multi_reduction <add>, %7, %cst_2 [1] : vector<20x128xf32> to vector<20xf32>
    %9 = vector.shape_cast %8 : vector<20xf32> to vector<20x1xf32>
    %cst_3 = arith.constant 1.270000e+02 : f32
    %10 = vector.broadcast %cst_3 : f32 to vector<20x1xf32>
    %11 = arith.divf %9, %10 : vector<20x1xf32>
    %12 = math.sqrt %11 : vector<20x1xf32>
    %c0_4 = arith.constant 0 : index
    %c0_5 = arith.constant 0 : index
    %13 = vector.load %arg1[%c0_4, %c0_5] : memref<1x128xf32, #tpu.memory_space<vmem>>, vector<1x128xf32>
    %14 = vector.broadcast %13 : vector<1x128xf32> to vector<20x128xf32>
    %15 = arith.mulf %14, %6 : vector<20x128xf32>
    %cst_6 = arith.constant 9.99999997E-7 : f32
    %16 = vector.broadcast %cst_6 : f32 to vector<20x1xf32>
    %17 = arith.addf %12, %16 : vector<20x1xf32>
    %18 = vector.broadcast %17 : vector<20x1xf32> to vector<20x128xf32>
    %19 = arith.divf %15, %18 : vector<20x128xf32>
    %c0_7 = arith.constant 0 : index
    %c0_8 = arith.constant 0 : index
    %20 = vector.load %arg2[%c0_7, %c0_8] : memref<1x128xf32, #tpu.memory_space<vmem>>, vector<1x128xf32>
    %21 = vector.broadcast %20 : vector<1x128xf32> to vector<20x128xf32>
    %22 = arith.addf %19, %21 : vector<20x128xf32>
    %c0_9 = arith.constant 0 : index
    %c0_10 = arith.constant 0 : index
    %23 = vector.load %arg3[%c0_9, %c0_10] : memref<20x128xf32, #tpu.memory_space<vmem>>, vector<20x128xf32>
    tpu.vector_store %arg3[%c0_9, %c0_10], %22 {strides = array<i32>} : memref<20x128xf32, #tpu.memory_space<vmem>>, vector<20x128xf32>,
    return
  }
}

module attributes {stable_mosaic.version = 11 : i64} {
  func.func @_embed_block_kernel(%arg0: i32, %arg1: memref<16xi32, #tpu.memory_space<smem>>, %arg2: memref<64x128xf32, #tpu.memory_space<vmem>>, %arg3: memref<16x128xf32, #tpu.memory_space<vmem>>) attributes {dimension_semantics = [#tpu.dimension_semantics<parallel>], iteration_bounds = array<i64: 1>, scalar_prefetch = 1 : i64, scratch_operands = 0 : i64, tpu.core_type = #tpu.core_type<tc>, window_params = [{pipeline_mode = #tpu.pipeline_mode<synchronous>, transform_indices = @transform_0, window_bounds = array<i64: 64, 128>}, {transform_indices = @transform_1, window_bounds = array<i64: 16, 128>}]} {
    %c16_i32 = arith.constant 16 : i32
    %0 = arith.muli %arg0, %c16_i32 : i32
    %c0_i32 = arith.constant 0 : i32
    %1 = arith.addi %0, %c0_i32 : i32
    %2 = arith.index_cast %1 : i32 to index
    %3 = memref.load %arg1[%2] : memref<16xi32, #tpu.memory_space<smem>>
    %4 = arith.index_cast %3 : i32 to index
    %c0 = arith.constant 0 : index
    %5 = vector.load %arg2[%4, %c0] : memref<64x128xf32, #tpu.memory_space<vmem>>, vector<1x128xf32>
    %cst = arith.constant 11.3137083 : f32
    %6 = vector.broadcast %cst : f32 to vector<1x128xf32>
    %7 = arith.mulf %5, %6 : vector<1x128xf32>
    %8 = arith.index_cast %c0_i32 : i32 to index
    %c0_0 = arith.constant 0 : index
    %9 = vector.load %arg3[%8, %c0_0] : memref<16x128xf32, #tpu.memory_space<vmem>>, vector<1x128xf32>
    tpu.vector_store %arg3[%8, %c0_0], %7 {strides = array<i32>} : memref<16x128xf32, #tpu.memory_space<vmem>>, vector<1x128xf32>,
    %c1_i32 = arith.constant 1 : i32
    %10 = arith.addi %0, %c1_i32 : i32
    %11 = arith.index_cast %10 : i32 to index
    %12 = memref.load %arg1[%11] : memref<16xi32, #tpu.memory_space<smem>>
    %13 = arith.index_cast %12 : i32 to index
    %c0_1 = arith.constant 0 : index
    %14 = vector.load %arg2[%13, %c0_1] : memref<64x128xf32, #tpu.memory_space<vmem>>, vector<1x128xf32>
    %cst_2 = arith.constant 11.3137083 : f32
    %15 = vector.broadcast %cst_2 : f32 to vector<1x128xf32>
    %16 = arith.mulf %14, %15 : vector<1x128xf32>
    %17 = arith.index_cast %c1_i32 : i32 to index
    %c0_3 = arith.constant 0 : index
    %18 = vector.load %arg3[%17, %c0_3] : memref<16x128xf32, #tpu.memory_space<vmem>>, vector<1x128xf32>
    tpu.vector_store %arg3[%17, %c0_3], %16 {strides = array<i32>} : memref<16x128xf32, #tpu.memory_space<vmem>>, vector<1x128xf32>,
    %c2_i32 = arith.constant 2 : i32
    %19 = arith.addi %0, %c2_i32 : i32
    %20 = arith.index_cast %19 : i32 to index
    %21 = memref.load %arg1[%20] : memref<16xi32, #tpu.memory_space<smem>>
    %22 = arith.index_cast %21 : i32 to index
    %c0_4 = arith.constant 0 : index
    %23 = vector.load %arg2[%22, %c0_4] : memref<64x128xf32, #tpu.memory_space<vmem>>, vector<1x128xf32>
    %cst_5 = arith.constant 11.3137083 : f32
    %24 = vector.broadcast %cst_5 : f32 to vector<1x128xf32>
    %25 = arith.mulf %23, %24 : vector<1x128xf32>
    %26 = arith.index_cast %c2_i32 : i32 to index
    %c0_6 = arith.constant 0 : index
    %27 = vector.load %arg3[%26, %c0_6] : memref<16x128xf32, #tpu.memory_space<vmem>>, vector<1x128xf32>
    tpu.vector_store %arg3[%26, %c0_6], %25 {strides = array<i32>} : memref<16x128xf32, #tpu.memory_space<vmem>>, vector<1x128xf32>,
    %c3_i32 = arith.constant 3 : i32
    %28 = arith.addi %0, %c3_i32 : i32
    %29 = arith.index_cast %28 : i32 to index
    %30 = memref.load %arg1[%29] : memref<16xi32, #tpu.memory_space<smem>>
    %31 = arith.index_cast %30 : i32 to index
    %c0_7 = arith.constant 0 : index
    %32 = vector.load %arg2[%31, %c0_7] : memref<64x128xf32, #tpu.memory_space<vmem>>, vector<1x128xf32>
    %cst_8 = arith.constant 11.3137083 : f32
    %33 = vector.broadcast %cst_8 : f32 to vector<1x128xf32>
    %34 = arith.mulf %32, %33 : vector<1x128xf32>
    %35 = arith.index_cast %c3_i32 : i32 to index
    %c0_9 = arith.constant 0 : index
    %36 = vector.load %arg3[%35, %c0_9] : memref<16x128xf32, #tpu.memory_space<vmem>>, vector<1x128xf32>
    tpu.vector_store %arg3[%35, %c0_9], %34 {strides = array<i32>} : memref<16x128xf32, #tpu.memory_space<vmem>>, vector<1x128xf32>,
    %c4_i32 = arith.constant 4 : i32
    %37 = arith.addi %0, %c4_i32 : i32
    %38 = arith.index_cast %37 : i32 to index
    %39 = memref.load %arg1[%38] : memref<16xi32, #tpu.memory_space<smem>>
    %40 = arith.index_cast %39 : i32 to index
    %c0_10 = arith.constant 0 : index
    %41 = vector.load %arg2[%40, %c0_10] : memref<64x128xf32, #tpu.memory_space<vmem>>, vector<1x128xf32>
    %cst_11 = arith.constant 11.3137083 : f32
    %42 = vector.broadcast %cst_11 : f32 to vector<1x128xf32>
    %43 = arith.mulf %41, %42 : vector<1x128xf32>
    %44 = arith.index_cast %c4_i32 : i32 to index
    %c0_12 = arith.constant 0 : index
    %45 = vector.load %arg3[%44, %c0_12] : memref<16x128xf32, #tpu.memory_space<vmem>>, vector<1x128xf32>
    tpu.vector_store %arg3[%44, %c0_12], %43 {strides = array<i32>} : memref<16x128xf32, #tpu.memory_space<vmem>>, vector<1x128xf32>,
    %c5_i32 = arith.constant 5 : i32
    %46 = arith.addi %0, %c5_i32 : i32
    %47 = arith.index_cast %46 : i32 to index
    %48 = memref.load %arg1[%47] : memref<16xi32, #tpu.memory_space<smem>>
    %49 = arith.index_cast %48 : i32 to index
    %c0_13 = arith.constant 0 : index
    %50 = vector.load %arg2[%49, %c0_13] : memref<64x128xf32, #tpu.memory_space<vmem>>, vector<1x128xf32>
    %cst_14 = arith.constant 11.3137083 : f32
    %51 = vector.broadcast %cst_14 : f32 to vector<1x128xf32>
    %52 = arith.mulf %50, %51 : vector<1x128xf32>
    %53 = arith.index_cast %c5_i32 : i32 to index
    %c0_15 = arith.constant 0 : index
    %54 = vector.load %arg3[%53, %c0_15] : memref<16x128xf32, #tpu.memory_space<vmem>>, vector<1x128xf32>
    tpu.vector_store %arg3[%53, %c0_15], %52 {strides = array<i32>} : memref<16x128xf32, #tpu.memory_space<vmem>>, vector<1x128xf32>,
    %c6_i32 = arith.constant 6 : i32
    %55 = arith.addi %0, %c6_i32 : i32
    %56 = arith.index_cast %55 : i32 to index
    %57 = memref.load %arg1[%56] : memref<16xi32, #tpu.memory_space<smem>>
    %58 = arith.index_cast %57 : i32 to index
    %c0_16 = arith.constant 0 : index
    %59 = vector.load %arg2[%58, %c0_16] : memref<64x128xf32, #tpu.memory_space<vmem>>, vector<1x128xf32>
    %cst_17 = arith.constant 11.3137083 : f32
    %60 = vector.broadcast %cst_17 : f32 to vector<1x128xf32>
    %61 = arith.mulf %59, %60 : vector<1x128xf32>
    %62 = arith.index_cast %c6_i32 : i32 to index
    %c0_18 = arith.constant 0 : index
    %63 = vector.load %arg3[%62, %c0_18] : memref<16x128xf32, #tpu.memory_space<vmem>>, vector<1x128xf32>
    tpu.vector_store %arg3[%62, %c0_18], %61 {strides = array<i32>} : memref<16x128xf32, #tpu.memory_space<vmem>>, vector<1x128xf32>,
    %c7_i32 = arith.constant 7 : i32
    %64 = arith.addi %0, %c7_i32 : i32
    %65 = arith.index_cast %64 : i32 to index
    %66 = memref.load %arg1[%65] : memref<16xi32, #tpu.memory_space<smem>>
    %67 = arith.index_cast %66 : i32 to index
    %c0_19 = arith.constant 0 : index
    %68 = vector.load %arg2[%67, %c0_19] : memref<64x128xf32, #tpu.memory_space<vmem>>, vector<1x128xf32>
    %cst_20 = arith.constant 11.3137083 : f32
    %69 = vector.broadcast %cst_20 : f32 to vector<1x128xf32>
    %70 = arith.mulf %68, %69 : vector<1x128xf32>
    %71 = arith.index_cast %c7_i32 : i32 to index
    %c0_21 = arith.constant 0 : index
    %72 = vector.load %arg3[%71, %c0_21] : memref<16x128xf32, #tpu.memory_space<vmem>>, vector<1x128xf32>
    tpu.vector_store %arg3[%71, %c0_21], %70 {strides = array<i32>} : memref<16x128xf32, #tpu.memory_space<vmem>>, vector<1x128xf32>,
    %c8_i32 = arith.constant 8 : i32
    %73 = arith.addi %0, %c8_i32 : i32
    %74 = arith.index_cast %73 : i32 to index
    %75 = memref.load %arg1[%74] : memref<16xi32, #tpu.memory_space<smem>>
    %76 = arith.index_cast %75 : i32 to index
    %c0_22 = arith.constant 0 : index
    %77 = vector.load %arg2[%76, %c0_22] : memref<64x128xf32, #tpu.memory_space<vmem>>, vector<1x128xf32>
    %cst_23 = arith.constant 11.3137083 : f32
    %78 = vector.broadcast %cst_23 : f32 to vector<1x128xf32>
    %79 = arith.mulf %77, %78 : vector<1x128xf32>
    %80 = arith.index_cast %c8_i32 : i32 to index
    %c0_24 = arith.constant 0 : index
    %81 = vector.load %arg3[%80, %c0_24] : memref<16x128xf32, #tpu.memory_space<vmem>>, vector<1x128xf32>
    tpu.vector_store %arg3[%80, %c0_24], %79 {strides = array<i32>} : memref<16x128xf32, #tpu.memory_space<vmem>>, vector<1x128xf32>,
    %c9_i32 = arith.constant 9 : i32
    %82 = arith.addi %0, %c9_i32 : i32
    %83 = arith.index_cast %82 : i32 to index
    %84 = memref.load %arg1[%83] : memref<16xi32, #tpu.memory_space<smem>>
    %85 = arith.index_cast %84 : i32 to index
    %c0_25 = arith.constant 0 : index
    %86 = vector.load %arg2[%85, %c0_25] : memref<64x128xf32, #tpu.memory_space<vmem>>, vector<1x128xf32>
    %cst_26 = arith.constant 11.3137083 : f32
    %87 = vector.broadcast %cst_26 : f32 to vector<1x128xf32>
    %88 = arith.mulf %86, %87 : vector<1x128xf32>
    %89 = arith.index_cast %c9_i32 : i32 to index
    %c0_27 = arith.constant 0 : index
    %90 = vector.load %arg3[%89, %c0_27] : memref<16x128xf32, #tpu.memory_space<vmem>>, vector<1x128xf32>
    tpu.vector_store %arg3[%89, %c0_27], %88 {strides = array<i32>} : memref<16x128xf32, #tpu.memory_space<vmem>>, vector<1x128xf32>,
    %c10_i32 = arith.constant 10 : i32
    %91 = arith.addi %0, %c10_i32 : i32
    %92 = arith.index_cast %91 : i32 to index
    %93 = memref.load %arg1[%92] : memref<16xi32, #tpu.memory_space<smem>>
    %94 = arith.index_cast %93 : i32 to index
    %c0_28 = arith.constant 0 : index
    %95 = vector.load %arg2[%94, %c0_28] : memref<64x128xf32, #tpu.memory_space<vmem>>, vector<1x128xf32>
    %cst_29 = arith.constant 11.3137083 : f32
    %96 = vector.broadcast %cst_29 : f32 to vector<1x128xf32>
    %97 = arith.mulf %95, %96 : vector<1x128xf32>
    %98 = arith.index_cast %c10_i32 : i32 to index
    %c0_30 = arith.constant 0 : index
    %99 = vector.load %arg3[%98, %c0_30] : memref<16x128xf32, #tpu.memory_space<vmem>>, vector<1x128xf32>
    tpu.vector_store %arg3[%98, %c0_30], %97 {strides = array<i32>} : memref<16x128xf32, #tpu.memory_space<vmem>>, vector<1x128xf32>,
    %c11_i32 = arith.constant 11 : i32
    %100 = arith.addi %0, %c11_i32 : i32
    %101 = arith.index_cast %100 : i32 to index
    %102 = memref.load %arg1[%101] : memref<16xi32, #tpu.memory_space<smem>>
    %103 = arith.index_cast %102 : i32 to index
    %c0_31 = arith.constant 0 : index
    %104 = vector.load %arg2[%103, %c0_31] : memref<64x128xf32, #tpu.memory_space<vmem>>, vector<1x128xf32>
    %cst_32 = arith.constant 11.3137083 : f32
    %105 = vector.broadcast %cst_32 : f32 to vector<1x128xf32>
    %106 = arith.mulf %104, %105 : vector<1x128xf32>
    %107 = arith.index_cast %c11_i32 : i32 to index
    %c0_33 = arith.constant 0 : index
    %108 = vector.load %arg3[%107, %c0_33] : memref<16x128xf32, #tpu.memory_space<vmem>>, vector<1x128xf32>
    tpu.vector_store %arg3[%107, %c0_33], %106 {strides = array<i32>} : memref<16x128xf32, #tpu.memory_space<vmem>>, vector<1x128xf32>,
    %c12_i32 = arith.constant 12 : i32
    %109 = arith.addi %0, %c12_i32 : i32
    %110 = arith.index_cast %109 : i32 to index
    %111 = memref.load %arg1[%110] : memref<16xi32, #tpu.memory_space<smem>>
    %112 = arith.index_cast %111 : i32 to index
    %c0_34 = arith.constant 0 : index
    %113 = vector.load %arg2[%112, %c0_34] : memref<64x128xf32, #tpu.memory_space<vmem>>, vector<1x128xf32>
    %cst_35 = arith.constant 11.3137083 : f32
    %114 = vector.broadcast %cst_35 : f32 to vector<1x128xf32>
    %115 = arith.mulf %113, %114 : vector<1x128xf32>
    %116 = arith.index_cast %c12_i32 : i32 to index
    %c0_36 = arith.constant 0 : index
    %117 = vector.load %arg3[%116, %c0_36] : memref<16x128xf32, #tpu.memory_space<vmem>>, vector<1x128xf32>
    tpu.vector_store %arg3[%116, %c0_36], %115 {strides = array<i32>} : memref<16x128xf32, #tpu.memory_space<vmem>>, vector<1x128xf32>,
    %c13_i32 = arith.constant 13 : i32
    %118 = arith.addi %0, %c13_i32 : i32
    %119 = arith.index_cast %118 : i32 to index
    %120 = memref.load %arg1[%119] : memref<16xi32, #tpu.memory_space<smem>>
    %121 = arith.index_cast %120 : i32 to index
    %c0_37 = arith.constant 0 : index
    %122 = vector.load %arg2[%121, %c0_37] : memref<64x128xf32, #tpu.memory_space<vmem>>, vector<1x128xf32>
    %cst_38 = arith.constant 11.3137083 : f32
    %123 = vector.broadcast %cst_38 : f32 to vector<1x128xf32>
    %124 = arith.mulf %122, %123 : vector<1x128xf32>
    %125 = arith.index_cast %c13_i32 : i32 to index
    %c0_39 = arith.constant 0 : index
    %126 = vector.load %arg3[%125, %c0_39] : memref<16x128xf32, #tpu.memory_space<vmem>>, vector<1x128xf32>
    tpu.vector_store %arg3[%125, %c0_39], %124 {strides = array<i32>} : memref<16x128xf32, #tpu.memory_space<vmem>>, vector<1x128xf32>,
    %c14_i32 = arith.constant 14 : i32
    %127 = arith.addi %0, %c14_i32 : i32
    %128 = arith.index_cast %127 : i32 to index
    %129 = memref.load %arg1[%128] : memref<16xi32, #tpu.memory_space<smem>>
    %130 = arith.index_cast %129 : i32 to index
    %c0_40 = arith.constant 0 : index
    %131 = vector.load %arg2[%130, %c0_40] : memref<64x128xf32, #tpu.memory_space<vmem>>, vector<1x128xf32>
    %cst_41 = arith.constant 11.3137083 : f32
    %132 = vector.broadcast %cst_41 : f32 to vector<1x128xf32>
    %133 = arith.mulf %131, %132 : vector<1x128xf32>
    %134 = arith.index_cast %c14_i32 : i32 to index
    %c0_42 = arith.constant 0 : index
    %135 = vector.load %arg3[%134, %c0_42] : memref<16x128xf32, #tpu.memory_space<vmem>>, vector<1x128xf32>
    tpu.vector_store %arg3[%134, %c0_42], %133 {strides = array<i32>} : memref<16x128xf32, #tpu.memory_space<vmem>>, vector<1x128xf32>,
    %c15_i32 = arith.constant 15 : i32
    %136 = arith.addi %0, %c15_i32 : i32
    %137 = arith.index_cast %136 : i32 to index
    %138 = memref.load %arg1[%137] : memref<16xi32, #tpu.memory_space<smem>>
    %139 = arith.index_cast %138 : i32 to index
    %c0_43 = arith.constant 0 : index
    %140 = vector.load %arg2[%139, %c0_43] : memref<64x128xf32, #tpu.memory_space<vmem>>, vector<1x128xf32>
    %cst_44 = arith.constant 11.3137083 : f32
    %141 = vector.broadcast %cst_44 : f32 to vector<1x128xf32>
    %142 = arith.mulf %140, %141 : vector<1x128xf32>
    %143 = arith.index_cast %c15_i32 : i32 to index
    %c0_45 = arith.constant 0 : index
    %144 = vector.load %arg3[%143, %c0_45] : memref<16x128xf32, #tpu.memory_space<vmem>>, vector<1x128xf32>
    tpu.vector_store %arg3[%143, %c0_45], %142 {strides = array<i32>} : memref<16x128xf32, #tpu.memory_space<vmem>>, vector<1x128xf32>,
    %c16_i32_46 = arith.constant 16 : i32
    return
  }
  func.func @transform_0(%arg0: i32, %arg1: memref<16xi32, #tpu.memory_space<smem>>) -> (i32, i32) {
    %c0_i32 = arith.constant 0 : i32
    %c0_i32_0 = arith.constant 0 : i32
    %c0_i32_1 = arith.constant 0 : i32
    return %c0_i32, %c0_i32_0 : i32, i32
  }
  func.func @transform_1(%arg0: i32, %arg1: memref<16xi32, #tpu.memory_space<smem>>) -> (i32, i32) {
    %c0_i32 = arith.constant 0 : i32
    %c0_i32_0 = arith.constant 0 : i32
    return %arg0, %c0_i32 : i32, i32
  }
}

module attributes {stable_mosaic.version = 11 : i64} {
  func.func @_layer_norm_kernel(%arg0: memref<16x128xf32, #tpu.memory_space<vmem>>, %arg1: memref<1x128xf32, #tpu.memory_space<vmem>>, %arg2: memref<1x128xf32, #tpu.memory_space<vmem>>, %arg3: memref<16x128xf32, #tpu.memory_space<vmem>>) attributes {dimension_semantics = [], scalar_prefetch = 0 : i64, scratch_operands = 0 : i64, tpu.core_type = #tpu.core_type<tc>} {
    %c0 = arith.constant 0 : index
    %c0_0 = arith.constant 0 : index
    %0 = vector.load %arg0[%c0, %c0_0] : memref<16x128xf32, #tpu.memory_space<vmem>>, vector<16x128xf32>
    %cst = arith.constant dense<0.000000e+00> : vector<16xf32>
    %1 = vector.multi_reduction <add>, %0, %cst [1] : vector<16x128xf32> to vector<16xf32>
    %2 = vector.shape_cast %1 : vector<16xf32> to vector<16x1xf32>
    %cst_1 = arith.constant 1.280000e+02 : f32
    %3 = vector.broadcast %cst_1 : f32 to vector<16x1xf32>
    %4 = arith.divf %2, %3 : vector<16x1xf32>
    %5 = vector.broadcast %4 : vector<16x1xf32> to vector<16x128xf32>
    %6 = arith.subf %0, %5 : vector<16x128xf32>
    %7 = arith.mulf %6, %6 : vector<16x128xf32>
    %cst_2 = arith.constant dense<0.000000e+00> : vector<16xf32>
    %8 = vector.multi_reduction <add>, %7, %cst_2 [1] : vector<16x128xf32> to vector<16xf32>
    %9 = vector.shape_cast %8 : vector<16xf32> to vector<16x1xf32>
    %cst_3 = arith.constant 1.280000e+02 : f32
    %10 = vector.broadcast %cst_3 : f32 to vector<16x1xf32>
    %11 = arith.divf %9, %10 : vector<16x1xf32>
    %cst_4 = arith.constant 9.99999974E-6 : f32
    %12 = vector.broadcast %cst_4 : f32 to vector<16x1xf32>
    %13 = arith.addf %11, %12 : vector<16x1xf32>
    %14 = math.sqrt %13 : vector<16x1xf32>
    %15 = vector.broadcast %14 : vector<16x1xf32> to vector<16x128xf32>
    %16 = arith.divf %6, %15 : vector<16x128xf32>
    %c0_5 = arith.constant 0 : index
    %c0_6 = arith.constant 0 : index
    %17 = vector.load %arg1[%c0_5, %c0_6] : memref<1x128xf32, #tpu.memory_space<vmem>>, vector<1x128xf32>
    %18 = vector.broadcast %17 : vector<1x128xf32> to vector<16x128xf32>
    %19 = arith.mulf %16, %18 : vector<16x128xf32>
    %c0_7 = arith.constant 0 : index
    %c0_8 = arith.constant 0 : index
    %20 = vector.load %arg2[%c0_7, %c0_8] : memref<1x128xf32, #tpu.memory_space<vmem>>, vector<1x128xf32>
    %21 = vector.broadcast %20 : vector<1x128xf32> to vector<16x128xf32>
    %22 = arith.addf %19, %21 : vector<16x128xf32>
    %c0_9 = arith.constant 0 : index
    %c0_10 = arith.constant 0 : index
    %23 = vector.load %arg3[%c0_9, %c0_10] : memref<16x128xf32, #tpu.memory_space<vmem>>, vector<16x128xf32>
    tpu.vector_store %arg3[%c0_9, %c0_10], %22 {strides = array<i32>} : memref<16x128xf32, #tpu.memory_space<vmem>>, vector<16x128xf32>,
    return
  }
}

module attributes {stable_mosaic.version = 11 : i64} {
  func.func @_linear_kernel(%arg0: memref<16x128xf32, #tpu.memory_space<vmem>>, %arg1: memref<128x128xf32, #tpu.memory_space<vmem>>, %arg2: memref<1x128xf32, #tpu.memory_space<vmem>>, %arg3: memref<16x128xf32, #tpu.memory_space<vmem>>) attributes {dimension_semantics = [], scalar_prefetch = 0 : i64, scratch_operands = 0 : i64, tpu.core_type = #tpu.core_type<tc>} {
    %c0 = arith.constant 0 : index
    %c0_0 = arith.constant 0 : index
    %0 = vector.load %arg0[%c0, %c0_0] : memref<16x128xf32, #tpu.memory_space<vmem>>, vector<16x128xf32>
    %c0_1 = arith.constant 0 : index
    %c0_2 = arith.constant 0 : index
    %1 = vector.load %arg1[%c0_1, %c0_2] : memref<128x128xf32, #tpu.memory_space<vmem>>, vector<128x128xf32>
    %cst = arith.constant dense<0.000000e+00> : vector<16x128xf32>
    %2 = tpu.matmul %0, %1, %cst {dimension_numbers = #tpu.dot_dimension_numbers<[1], [0], [0], [1], [0, 0, 1, 1], [], []>} : vector<16x128xf32>, vector<128x128xf32>, vector<16x128xf32> -> vector<16x128xf32>
    %c0_3 = arith.constant 0 : index
    %c0_4 = arith.constant 0 : index
    %3 = vector.load %arg2[%c0_3, %c0_4] : memref<1x128xf32, #tpu.memory_space<vmem>>, vector<1x128xf32>
    %4 = vector.broadcast %3 : vector<1x128xf32> to vector<16x128xf32>
    %5 = arith.addf %2, %4 : vector<16x128xf32>
    %c0_5 = arith.constant 0 : index
    %c0_6 = arith.constant 0 : index
    %6 = vector.load %arg3[%c0_5, %c0_6] : memref<16x128xf32, #tpu.memory_space<vmem>>, vector<16x128xf32>
    tpu.vector_store %arg3[%c0_5, %c0_6], %5 {strides = array<i32>} : memref<16x128xf32, #tpu.memory_space<vmem>>, vector<16x128xf32>,
    return
  }
}

module attributes {stable_mosaic.version = 11 : i64} {
  func.func @_attention_kernel(%arg0: i32, %arg1: memref<1x8x32xf32, #tpu.memory_space<vmem>>, %arg2: memref<1x8x32xf32, #tpu.memory_space<vmem>>, %arg3: memref<1x8x32xf32, #tpu.memory_space<vmem>>, %arg4: memref<1x8x8xi32, #tpu.memory_space<vmem>>, %arg5: memref<1x8x32xf32, #tpu.memory_space<vmem>>) attributes {dimension_semantics = [#tpu.dimension_semantics<parallel>], iteration_bounds = array<i64: 8>, scalar_prefetch = 0 : i64, scratch_operands = 0 : i64, tpu.core_type = #tpu.core_type<tc>, window_params = [{transform_indices = @transform_0, window_bounds = array<i64: 1, 8, 32>}, {transform_indices = @transform_1, window_bounds = array<i64: 1, 8, 32>}, {transform_indices = @transform_2, window_bounds = array<i64: 1, 8, 32>}, {transform_indices = @transform_3, window_bounds = array<i64: 1, 8, 8>}, {transform_indices = @transform_4, window_bounds = array<i64: 1, 8, 32>}]} {
    %c0 = arith.constant 0 : index
    %c0_0 = arith.constant 0 : index
    %c0_1 = arith.constant 0 : index
    %0 = vector.load %arg1[%c0, %c0_0, %c0_1] : memref<1x8x32xf32, #tpu.memory_space<vmem>>, vector<1x8x32xf32>
    %c0_2 = arith.constant 0 : index
    %c0_3 = arith.constant 0 : index
    %c0_4 = arith.constant 0 : index
    %1 = vector.load %arg2[%c0_2, %c0_3, %c0_4] : memref<1x8x32xf32, #tpu.memory_space<vmem>>, vector<1x8x32xf32>
    "tpu.trace_start"() <{level = 10 : i32, message = "bqd,bkd->bqk"}> : () -> ()
    %cst = arith.constant dense<0.000000e+00> : vector<1x8x8xf32>
    %2 = tpu.matmul %0, %1, %cst {dimension_numbers = #tpu.dot_dimension_numbers<[2], [2], [1], [1], [0, 0, 0, 1, 1, 1], [0], [0]>} : vector<1x8x32xf32>, vector<1x8x32xf32>, vector<1x8x8xf32> -> vector<1x8x8xf32>
    "tpu.trace_stop"() : () -> ()
    %cst_5 = arith.constant 0.176776692 : f32
    %3 = vector.broadcast %cst_5 : f32 to vector<1x8x8xf32>
    %4 = arith.mulf %2, %3 : vector<1x8x8xf32>
    %c0_6 = arith.constant 0 : index
    %c0_7 = arith.constant 0 : index
    %c0_8 = arith.constant 0 : index
    %5 = vector.load %arg4[%c0_6, %c0_7, %c0_8] : memref<1x8x8xi32, #tpu.memory_space<vmem>>, vector<1x8x8xi32>
    %c0_i32 = arith.constant 0 : i32
    %6 = vector.broadcast %c0_i32 : i32 to vector<1x8x8xi32>
    %7 = arith.cmpi eq, %5, %6 : vector<1x8x8xi32>
    %cst_9 = arith.constant -1.000000e+10 : f32
    %8 = vector.broadcast %cst_9 : f32 to vector<1x8x8xf32>
    %9 = arith.select %7, %8, %4 : vector<1x8x8xi1>, vector<1x8x8xf32>
    %cst_10 = arith.constant dense<0xFF800000> : vector<1x8xf32>
    %10 = vector.multi_reduction <maximumf>, %9, %cst_10 [2] : vector<1x8x8xf32> to vector<1x8xf32>
    %11 = vector.shape_cast %10 : vector<1x8xf32> to vector<1x8x1xf32>
    %12 = vector.broadcast %11 : vector<1x8x1xf32> to vector<1x8x8xf32>
    %13 = arith.subf %9, %12 : vector<1x8x8xf32>
    %14 = math.exp %13 : vector<1x8x8xf32>
    %cst_11 = arith.constant dense<0.000000e+00> : vector<1x8xf32>
    %15 = vector.multi_reduction <add>, %14, %cst_11 [2] : vector<1x8x8xf32> to vector<1x8xf32>
    %16 = vector.shape_cast %15 : vector<1x8xf32> to vector<1x8x1xf32>
    %17 = vector.broadcast %16 : vector<1x8x1xf32> to vector<1x8x8xf32>
    %18 = arith.divf %14, %17 : vector<1x8x8xf32>
    %c0_12 = arith.constant 0 : index
    %c0_13 = arith.constant 0 : index
    %c0_14 = arith.constant 0 : index
    %19 = vector.load %arg3[%c0_12, %c0_13, %c0_14] : memref<1x8x32xf32, #tpu.memory_space<vmem>>, vector<1x8x32xf32>
    "tpu.trace_start"() <{level = 10 : i32, message = "bqk,bkd->bqd"}> : () -> ()
    %cst_15 = arith.constant dense<0.000000e+00> : vector<1x8x32xf32>
    %20 = tpu.matmul %18, %19, %cst_15 {dimension_numbers = #tpu.dot_dimension_numbers<[2], [1], [1], [2], [0, 0, 0, 1, 1, 2], [0], [0]>} : vector<1x8x8xf32>, vector<1x8x32xf32>, vector<1x8x32xf32> -> vector<1x8x32xf32>
    "tpu.trace_stop"() : () -> ()
    %c0_16 = arith.constant 0 : index
    %c0_17 = arith.constant 0 : index
    %c0_18 = arith.constant 0 : index
    %21 = vector.load %arg5[%c0_16, %c0_17, %c0_18] : memref<1x8x32xf32, #tpu.memory_space<vmem>>, vector<1x8x32xf32>
    tpu.vector_store %arg5[%c0_16, %c0_17, %c0_18], %20 {strides = array<i32>} : memref<1x8x32xf32, #tpu.memory_space<vmem>>, vector<1x8x32xf32>,
    return
  }
  func.func @transform_0(%arg0: i32) -> (i32, i32, i32) {
    %c0_i32 = arith.constant 0 : i32
    %c0_i32_0 = arith.constant 0 : i32
    %c0_i32_1 = arith.constant 0 : i32
    return %arg0, %c0_i32, %c0_i32_0 : i32, i32, i32
  }
  func.func @transform_1(%arg0: i32) -> (i32, i32, i32) {
    %c0_i32 = arith.constant 0 : i32
    %c0_i32_0 = arith.constant 0 : i32
    %c0_i32_1 = arith.constant 0 : i32
    return %arg0, %c0_i32, %c0_i32_0 : i32, i32, i32
  }
  func.func @transform_2(%arg0: i32) -> (i32, i32, i32) {
    %c0_i32 = arith.constant 0 : i32
    %c0_i32_0 = arith.constant 0 : i32
    %c0_i32_1 = arith.constant 0 : i32
    return %arg0, %c0_i32, %c0_i32_0 : i32, i32, i32
  }
  func.func @transform_3(%arg0: i32) -> (i32, i32, i32) {
    %c0_i32 = arith.constant 0 : i32
    %c0_i32_0 = arith.constant 0 : i32
    %c0_i32_1 = arith.constant 0 : i32
    return %arg0, %c0_i32, %c0_i32_0 : i32, i32, i32
  }
  func.func @transform_4(%arg0: i32) -> (i32, i32, i32) {
    %c0_i32 = arith.constant 0 : i32
    %c0_i32_0 = arith.constant 0 : i32
    %c0_i32_1 = arith.constant 0 : i32
    return %arg0, %c0_i32, %c0_i32_0 : i32, i32, i32
  }
}

module attributes {stable_mosaic.version = 11 : i64} {
  func.func @_attention_kernel(%arg0: i32, %arg1: memref<1x8x32xf32, #tpu.memory_space<vmem>>, %arg2: memref<1x10x32xf32, #tpu.memory_space<vmem>>, %arg3: memref<1x10x32xf32, #tpu.memory_space<vmem>>, %arg4: memref<1x8x10xi32, #tpu.memory_space<vmem>>, %arg5: memref<1x8x32xf32, #tpu.memory_space<vmem>>) attributes {dimension_semantics = [#tpu.dimension_semantics<parallel>], iteration_bounds = array<i64: 8>, scalar_prefetch = 0 : i64, scratch_operands = 0 : i64, tpu.core_type = #tpu.core_type<tc>, window_params = [{transform_indices = @transform_0, window_bounds = array<i64: 1, 8, 32>}, {transform_indices = @transform_1, window_bounds = array<i64: 1, 10, 32>}, {transform_indices = @transform_2, window_bounds = array<i64: 1, 10, 32>}, {transform_indices = @transform_3, window_bounds = array<i64: 1, 8, 10>}, {transform_indices = @transform_4, window_bounds = array<i64: 1, 8, 32>}]} {
    %c0 = arith.constant 0 : index
    %c0_0 = arith.constant 0 : index
    %c0_1 = arith.constant 0 : index
    %0 = vector.load %arg1[%c0, %c0_0, %c0_1] : memref<1x8x32xf32, #tpu.memory_space<vmem>>, vector<1x8x32xf32>
    %c0_2 = arith.constant 0 : index
    %c0_3 = arith.constant 0 : index
    %c0_4 = arith.constant 0 : index
    %1 = vector.load %arg2[%c0_2, %c0_3, %c0_4] : memref<1x10x32xf32, #tpu.memory_space<vmem>>, vector<1x10x32xf32>
    "tpu.trace_start"() <{level = 10 : i32, message = "bqd,bkd->bqk"}> : () -> ()
    %cst = arith.constant dense<0.000000e+00> : vector<1x8x10xf32>
    %2 = tpu.matmul %0, %1, %cst {dimension_numbers = #tpu.dot_dimension_numbers<[2], [2], [1], [1], [0, 0, 0, 1, 1, 1], [0], [0]>} : vector<1x8x32xf32>, vector<1x10x32xf32>, vector<1x8x10xf32> -> vector<1x8x10xf32>
    "tpu.trace_stop"() : () -> ()
    %cst_5 = arith.constant 0.176776692 : f32
    %3 = vector.broadcast %cst_5 : f32 to vector<1x8x10xf32>
    %4 = arith.mulf %2, %3 : vector<1x8x10xf32>
    %c0_6 = arith.constant 0 : index
    %c0_7 = arith.constant 0 : index
    %c0_8 = arith.constant 0 : index
    %5 = vector.load %arg4[%c0_6, %c0_7, %c0_8] : memref<1x8x10xi32, #tpu.memory_space<vmem>>, vector<1x8x10xi32>
    %c0_i32 = arith.constant 0 : i32
    %6 = vector.broadcast %c0_i32 : i32 to vector<1x8x10xi32>
    %7 = arith.cmpi eq, %5, %6 : vector<1x8x10xi32>
    %cst_9 = arith.constant -1.000000e+10 : f32
    %8 = vector.broadcast %cst_9 : f32 to vector<1x8x10xf32>
    %9 = arith.select %7, %8, %4 : vector<1x8x10xi1>, vector<1x8x10xf32>
    %cst_10 = arith.constant dense<0xFF800000> : vector<1x8xf32>
    %10 = vector.multi_reduction <maximumf>, %9, %cst_10 [2] : vector<1x8x10xf32> to vector<1x8xf32>
    %11 = vector.shape_cast %10 : vector<1x8xf32> to vector<1x8x1xf32>
    %12 = vector.broadcast %11 : vector<1x8x1xf32> to vector<1x8x10xf32>
    %13 = arith.subf %9, %12 : vector<1x8x10xf32>
    %14 = math.exp %13 : vector<1x8x10xf32>
    %cst_11 = arith.constant dense<0.000000e+00> : vector<1x8xf32>
    %15 = vector.multi_reduction <add>, %14, %cst_11 [2] : vector<1x8x10xf32> to vector<1x8xf32>
    %16 = vector.shape_cast %15 : vector<1x8xf32> to vector<1x8x1xf32>
    %17 = vector.broadcast %16 : vector<1x8x1xf32> to vector<1x8x10xf32>
    %18 = arith.divf %14, %17 : vector<1x8x10xf32>
    %c0_12 = arith.constant 0 : index
    %c0_13 = arith.constant 0 : index
    %c0_14 = arith.constant 0 : index
    %19 = vector.load %arg3[%c0_12, %c0_13, %c0_14] : memref<1x10x32xf32, #tpu.memory_space<vmem>>, vector<1x10x32xf32>
    "tpu.trace_start"() <{level = 10 : i32, message = "bqk,bkd->bqd"}> : () -> ()
    %cst_15 = arith.constant dense<0.000000e+00> : vector<1x8x32xf32>
    %20 = tpu.matmul %18, %19, %cst_15 {dimension_numbers = #tpu.dot_dimension_numbers<[2], [1], [1], [2], [0, 0, 0, 1, 1, 2], [0], [0]>} : vector<1x8x10xf32>, vector<1x10x32xf32>, vector<1x8x32xf32> -> vector<1x8x32xf32>
    "tpu.trace_stop"() : () -> ()
    %c0_16 = arith.constant 0 : index
    %c0_17 = arith.constant 0 : index
    %c0_18 = arith.constant 0 : index
    %21 = vector.load %arg5[%c0_16, %c0_17, %c0_18] : memref<1x8x32xf32, #tpu.memory_space<vmem>>, vector<1x8x32xf32>
    tpu.vector_store %arg5[%c0_16, %c0_17, %c0_18], %20 {strides = array<i32>} : memref<1x8x32xf32, #tpu.memory_space<vmem>>, vector<1x8x32xf32>,
    return
  }
  func.func @transform_0(%arg0: i32) -> (i32, i32, i32) {
    %c0_i32 = arith.constant 0 : i32
    %c0_i32_0 = arith.constant 0 : i32
    %c0_i32_1 = arith.constant 0 : i32
    return %arg0, %c0_i32, %c0_i32_0 : i32, i32, i32
  }
  func.func @transform_1(%arg0: i32) -> (i32, i32, i32) {
    %c0_i32 = arith.constant 0 : i32
    %c0_i32_0 = arith.constant 0 : i32
    %c0_i32_1 = arith.constant 0 : i32
    return %arg0, %c0_i32, %c0_i32_0 : i32, i32, i32
  }
  func.func @transform_2(%arg0: i32) -> (i32, i32, i32) {
    %c0_i32 = arith.constant 0 : i32
    %c0_i32_0 = arith.constant 0 : i32
    %c0_i32_1 = arith.constant 0 : i32
    return %arg0, %c0_i32, %c0_i32_0 : i32, i32, i32
  }
  func.func @transform_3(%arg0: i32) -> (i32, i32, i32) {
    %c0_i32 = arith.constant 0 : i32
    %c0_i32_0 = arith.constant 0 : i32
    %c0_i32_1 = arith.constant 0 : i32
    return %arg0, %c0_i32, %c0_i32_0 : i32, i32, i32
  }
  func.func @transform_4(%arg0: i32) -> (i32, i32, i32) {
    %c0_i32 = arith.constant 0 : i32
    %c0_i32_0 = arith.constant 0 : i32
    %c0_i32_1 = arith.constant 0 : i32
    return %arg0, %c0_i32, %c0_i32_0 : i32, i32, i32
  }
}

module attributes {stable_mosaic.version = 11 : i64} {
  func.func @_linear_kernel(%arg0: memref<16x128xf32, #tpu.memory_space<vmem>>, %arg1: memref<128x256xf32, #tpu.memory_space<vmem>>, %arg2: memref<1x256xf32, #tpu.memory_space<vmem>>, %arg3: memref<16x256xf32, #tpu.memory_space<vmem>>) attributes {dimension_semantics = [], scalar_prefetch = 0 : i64, scratch_operands = 0 : i64, tpu.core_type = #tpu.core_type<tc>} {
    %c0 = arith.constant 0 : index
    %c0_0 = arith.constant 0 : index
    %0 = vector.load %arg0[%c0, %c0_0] : memref<16x128xf32, #tpu.memory_space<vmem>>, vector<16x128xf32>
    %c0_1 = arith.constant 0 : index
    %c0_2 = arith.constant 0 : index
    %1 = vector.load %arg1[%c0_1, %c0_2] : memref<128x256xf32, #tpu.memory_space<vmem>>, vector<128x256xf32>
    %cst = arith.constant dense<0.000000e+00> : vector<16x256xf32>
    %2 = tpu.matmul %0, %1, %cst {dimension_numbers = #tpu.dot_dimension_numbers<[1], [0], [0], [1], [0, 0, 1, 1], [], []>} : vector<16x128xf32>, vector<128x256xf32>, vector<16x256xf32> -> vector<16x256xf32>
    %c0_3 = arith.constant 0 : index
    %c0_4 = arith.constant 0 : index
    %3 = vector.load %arg2[%c0_3, %c0_4] : memref<1x256xf32, #tpu.memory_space<vmem>>, vector<1x256xf32>
    %4 = vector.broadcast %3 : vector<1x256xf32> to vector<16x256xf32>
    %5 = arith.addf %2, %4 : vector<16x256xf32>
    %cst_5 = arith.constant 0.000000e+00 : f32
    %6 = vector.broadcast %cst_5 : f32 to vector<16x256xf32>
    %7 = arith.maximumf %5, %6 : vector<16x256xf32>
    %c0_6 = arith.constant 0 : index
    %c0_7 = arith.constant 0 : index
    %8 = vector.load %arg3[%c0_6, %c0_7] : memref<16x256xf32, #tpu.memory_space<vmem>>, vector<16x256xf32>
    tpu.vector_store %arg3[%c0_6, %c0_7], %7 {strides = array<i32>} : memref<16x256xf32, #tpu.memory_space<vmem>>, vector<16x256xf32>,
    return
  }
}

module attributes {stable_mosaic.version = 11 : i64} {
  func.func @_linear_kernel(%arg0: memref<16x256xf32, #tpu.memory_space<vmem>>, %arg1: memref<256x128xf32, #tpu.memory_space<vmem>>, %arg2: memref<1x128xf32, #tpu.memory_space<vmem>>, %arg3: memref<16x128xf32, #tpu.memory_space<vmem>>) attributes {dimension_semantics = [], scalar_prefetch = 0 : i64, scratch_operands = 0 : i64, tpu.core_type = #tpu.core_type<tc>} {
    %c0 = arith.constant 0 : index
    %c0_0 = arith.constant 0 : index
    %0 = vector.load %arg0[%c0, %c0_0] : memref<16x256xf32, #tpu.memory_space<vmem>>, vector<16x256xf32>
    %c0_1 = arith.constant 0 : index
    %c0_2 = arith.constant 0 : index
    %1 = vector.load %arg1[%c0_1, %c0_2] : memref<256x128xf32, #tpu.memory_space<vmem>>, vector<256x128xf32>
    %cst = arith.constant dense<0.000000e+00> : vector<16x128xf32>
    %2 = tpu.matmul %0, %1, %cst {dimension_numbers = #tpu.dot_dimension_numbers<[1], [0], [0], [1], [0, 0, 1, 1], [], []>} : vector<16x256xf32>, vector<256x128xf32>, vector<16x128xf32> -> vector<16x128xf32>
    %c0_3 = arith.constant 0 : index
    %c0_4 = arith.constant 0 : index
    %3 = vector.load %arg2[%c0_3, %c0_4] : memref<1x128xf32, #tpu.memory_space<vmem>>, vector<1x128xf32>
    %4 = vector.broadcast %3 : vector<1x128xf32> to vector<16x128xf32>
    %5 = arith.addf %2, %4 : vector<16x128xf32>
    %c0_5 = arith.constant 0 : index
    %c0_6 = arith.constant 0 : index
    %6 = vector.load %arg3[%c0_5, %c0_6] : memref<16x128xf32, #tpu.memory_space<vmem>>, vector<16x128xf32>
    tpu.vector_store %arg3[%c0_5, %c0_6], %5 {strides = array<i32>} : memref<16x128xf32, #tpu.memory_space<vmem>>, vector<16x128xf32>,
    return
  }
}

module attributes {stable_mosaic.version = 11 : i64} {
  func.func @_custom_norm_kernel(%arg0: memref<16x128xf32, #tpu.memory_space<vmem>>, %arg1: memref<1x128xf32, #tpu.memory_space<vmem>>, %arg2: memref<1x128xf32, #tpu.memory_space<vmem>>, %arg3: memref<16x128xf32, #tpu.memory_space<vmem>>) attributes {dimension_semantics = [], scalar_prefetch = 0 : i64, scratch_operands = 0 : i64, tpu.core_type = #tpu.core_type<tc>} {
    %c0 = arith.constant 0 : index
    %c0_0 = arith.constant 0 : index
    %0 = vector.load %arg0[%c0, %c0_0] : memref<16x128xf32, #tpu.memory_space<vmem>>, vector<16x128xf32>
    %cst = arith.constant dense<0.000000e+00> : vector<16xf32>
    %1 = vector.multi_reduction <add>, %0, %cst [1] : vector<16x128xf32> to vector<16xf32>
    %2 = vector.shape_cast %1 : vector<16xf32> to vector<16x1xf32>
    %cst_1 = arith.constant 1.280000e+02 : f32
    %3 = vector.broadcast %cst_1 : f32 to vector<16x1xf32>
    %4 = arith.divf %2, %3 : vector<16x1xf32>
    %5 = vector.broadcast %4 : vector<16x1xf32> to vector<16x128xf32>
    %6 = arith.subf %0, %5 : vector<16x128xf32>
    %7 = arith.mulf %6, %6 : vector<16x128xf32>
    %cst_2 = arith.constant dense<0.000000e+00> : vector<16xf32>
    %8 = vector.multi_reduction <add>, %7, %cst_2 [1] : vector<16x128xf32> to vector<16xf32>
    %9 = vector.shape_cast %8 : vector<16xf32> to vector<16x1xf32>
    %cst_3 = arith.constant 1.270000e+02 : f32
    %10 = vector.broadcast %cst_3 : f32 to vector<16x1xf32>
    %11 = arith.divf %9, %10 : vector<16x1xf32>
    %12 = math.sqrt %11 : vector<16x1xf32>
    %c0_4 = arith.constant 0 : index
    %c0_5 = arith.constant 0 : index
    %13 = vector.load %arg1[%c0_4, %c0_5] : memref<1x128xf32, #tpu.memory_space<vmem>>, vector<1x128xf32>
    %14 = vector.broadcast %13 : vector<1x128xf32> to vector<16x128xf32>
    %15 = arith.mulf %14, %6 : vector<16x128xf32>
    %cst_6 = arith.constant 9.99999997E-7 : f32
    %16 = vector.broadcast %cst_6 : f32 to vector<16x1xf32>
    %17 = arith.addf %12, %16 : vector<16x1xf32>
    %18 = vector.broadcast %17 : vector<16x1xf32> to vector<16x128xf32>
    %19 = arith.divf %15, %18 : vector<16x128xf32>
    %c0_7 = arith.constant 0 : index
    %c0_8 = arith.constant 0 : index
    %20 = vector.load %arg2[%c0_7, %c0_8] : memref<1x128xf32, #tpu.memory_space<vmem>>, vector<1x128xf32>
    %21 = vector.broadcast %20 : vector<1x128xf32> to vector<16x128xf32>
    %22 = arith.addf %19, %21 : vector<16x128xf32>
    %c0_9 = arith.constant 0 : index
    %c0_10 = arith.constant 0 : index
    %23 = vector.load %arg3[%c0_9, %c0_10] : memref<16x128xf32, #tpu.memory_space<vmem>>, vector<16x128xf32>
    tpu.vector_store %arg3[%c0_9, %c0_10], %22 {strides = array<i32>} : memref<16x128xf32, #tpu.memory_space<vmem>>, vector<16x128xf32>,
    return
  }
}

module attributes {stable_mosaic.version = 11 : i64} {
  func.func @_generator_kernel(%arg0: memref<16x128xf32, #tpu.memory_space<vmem>>, %arg1: memref<128x64xf32, #tpu.memory_space<vmem>>, %arg2: memref<1x64xf32, #tpu.memory_space<vmem>>, %arg3: memref<64x64xf32, #tpu.memory_space<vmem>>, %arg4: memref<1x64xf32, #tpu.memory_space<vmem>>, %arg5: memref<16x64xf32, #tpu.memory_space<vmem>>) attributes {dimension_semantics = [], scalar_prefetch = 0 : i64, scratch_operands = 0 : i64, tpu.core_type = #tpu.core_type<tc>} {
    %c0 = arith.constant 0 : index
    %c0_0 = arith.constant 0 : index
    %0 = vector.load %arg0[%c0, %c0_0] : memref<16x128xf32, #tpu.memory_space<vmem>>, vector<16x128xf32>
    %c0_1 = arith.constant 0 : index
    %c0_2 = arith.constant 0 : index
    %1 = vector.load %arg1[%c0_1, %c0_2] : memref<128x64xf32, #tpu.memory_space<vmem>>, vector<128x64xf32>
    %cst = arith.constant dense<0.000000e+00> : vector<16x64xf32>
    %2 = tpu.matmul %0, %1, %cst {dimension_numbers = #tpu.dot_dimension_numbers<[1], [0], [0], [1], [0, 0, 1, 1], [], []>} : vector<16x128xf32>, vector<128x64xf32>, vector<16x64xf32> -> vector<16x64xf32>
    %c0_3 = arith.constant 0 : index
    %c0_4 = arith.constant 0 : index
    %3 = vector.load %arg2[%c0_3, %c0_4] : memref<1x64xf32, #tpu.memory_space<vmem>>, vector<1x64xf32>
    %4 = vector.broadcast %3 : vector<1x64xf32> to vector<16x64xf32>
    %5 = arith.addf %2, %4 : vector<16x64xf32>
    %cst_5 = arith.constant 0.000000e+00 : f32
    %6 = vector.broadcast %cst_5 : f32 to vector<16x64xf32>
    %7 = arith.maximumf %5, %6 : vector<16x64xf32>
    %c0_6 = arith.constant 0 : index
    %c0_7 = arith.constant 0 : index
    %8 = vector.load %arg3[%c0_6, %c0_7] : memref<64x64xf32, #tpu.memory_space<vmem>>, vector<64x64xf32>
    %cst_8 = arith.constant dense<0.000000e+00> : vector<16x64xf32>
    %9 = tpu.matmul %7, %8, %cst_8 {dimension_numbers = #tpu.dot_dimension_numbers<[1], [0], [0], [1], [0, 0, 1, 1], [], []>} : vector<16x64xf32>, vector<64x64xf32>, vector<16x64xf32> -> vector<16x64xf32>
    %c0_9 = arith.constant 0 : index
    %c0_10 = arith.constant 0 : index
    %10 = vector.load %arg4[%c0_9, %c0_10] : memref<1x64xf32, #tpu.memory_space<vmem>>, vector<1x64xf32>
    %11 = vector.broadcast %10 : vector<1x64xf32> to vector<16x64xf32>
    %12 = arith.addf %9, %11 : vector<16x64xf32>
    %cst_11 = arith.constant dense<0xFF800000> : vector<16xf32>
    %13 = vector.multi_reduction <maximumf>, %12, %cst_11 [1] : vector<16x64xf32> to vector<16xf32>
    %14 = vector.shape_cast %13 : vector<16xf32> to vector<16x1xf32>
    %15 = vector.broadcast %14 : vector<16x1xf32> to vector<16x64xf32>
    %16 = arith.subf %12, %15 : vector<16x64xf32>
    %17 = math.exp %16 : vector<16x64xf32>
    %cst_12 = arith.constant dense<0.000000e+00> : vector<16xf32>
    %18 = vector.multi_reduction <add>, %17, %cst_12 [1] : vector<16x64xf32> to vector<16xf32>
    %19 = vector.shape_cast %18 : vector<16xf32> to vector<16x1xf32>
    %20 = math.log %19 : vector<16x1xf32>
    %21 = vector.broadcast %20 : vector<16x1xf32> to vector<16x64xf32>
    %22 = arith.subf %16, %21 : vector<16x64xf32>
    %c0_13 = arith.constant 0 : index
    %c0_14 = arith.constant 0 : index
    %23 = vector.load %arg5[%c0_13, %c0_14] : memref<16x64xf32, #tpu.memory_space<vmem>>, vector<16x64xf32>
    tpu.vector_store %arg5[%c0_13, %c0_14], %22 {strides = array<i32>} : memref<16x64xf32, #tpu.memory_space<vmem>>, vector<16x64xf32>,
    return
  }
}

</mosaic_0001>

<llo_original>
// kernel: _lambda_.53
$region0: #{_lambda_.53}
  #allocation0 [shape = 'u32[]', space=smem, size = 0x4, offset = 0x4, fixed_abs, tag = 'smem constant byte address 0x4 - core index']
  #allocation1 [shape = 'u32[72,128]{1,0:T(1,128)}', space=vmem, size = 0x9000, scoped, tag = 'internal scratch']
  %s0 = inlined_call_operand.vmem [shape: f32[20,128], index: 0, kind: input, shape index: {}]
  %s1 = inlined_call_operand.vmem [shape: f32[128,128], index: 1, kind: input, shape index: {}]
  %s2 = inlined_call_operand.vmem [shape: f32[1,128], index: 2, kind: input, shape index: {}]
  %s3 = inlined_call_operand.vmem [shape: f32[20,128], index: 3, kind: output, shape index: {}]
  %s4 = sld [smem:[#allocation0]]
  $region22: #{_lambda_.53} parent=0
    _
  %s6 = ssub.s32 1, %s4
  %s7 = scalar_select 0, %s6, %s4
  // Predicated region
  $region2: #{_lambda_.53} parent=0 // pred_check
    _
  $region3: #{_lambda_.53} parent=0 // pred_check_branch
    %9 = sbr.rel (0) target = $region5
  $region4: #{_lambda_.53} parent=0 // pred_region
    _
  $region5: #{_lambda_.53} parent=0 // pred_fallthru
    _
  // Predicated region
  $region6: #{_lambda_.53} parent=0 // pred_check
    _
  $region7: #{_lambda_.53} parent=0 // pred_check_branch
    %11 = sbr.rel (0) target = $region9
  $region8: #{_lambda_.53} parent=0 // pred_region
    _
  $region9: #{_lambda_.53} parent=0 // pred_fallthru
    _
  // Predicated region
  $region10: #{_lambda_.53} parent=0 // pred_check
    _
  $region11: #{_lambda_.53} parent=0 // pred_check_branch
    %13 = sbr.rel (0) target = $region13
  $region12: #{_lambda_.53} parent=0 // pred_region
    _
  $region13: #{_lambda_.53} parent=0 // pred_fallthru
    _
  %v14 = vld [vmem:[%s0] sm:$0xff]
  %v15 = vld [vmem:[%s0 + $0x8] sm:$0xff]
  %v16 = vld [vmem:[%s0 + $0x10] sm:$0xf]
  %v17 = vld [vmem:[%s1] sm:$0xff]
  %v18 = vld [vmem:[%s1 + $0x8] sm:$0xff]
  %v19 = vld [vmem:[%s1 + $0x10] sm:$0xff]
  %v20 = vld [vmem:[%s1 + $0x18] sm:$0xff]
  %v21 = vld [vmem:[%s1 + $0x20] sm:$0xff]
  %v22 = vld [vmem:[%s1 + $0x28] sm:$0xff]
  %v23 = vld [vmem:[%s1 + $0x30] sm:$0xff]
  %v24 = vld [vmem:[%s1 + $0x38] sm:$0xff]
  %v25 = vld [vmem:[%s1 + $0x40] sm:$0xff]
  %v26 = vld [vmem:[%s1 + $0x48] sm:$0xff]
  %v27 = vld [vmem:[%s1 + $0x50] sm:$0xff]
  %v28 = vld [vmem:[%s1 + $0x58] sm:$0xff]
  %v29 = vld [vmem:[%s1 + $0x60] sm:$0xff]
  %v30 = vld [vmem:[%s1 + $0x68] sm:$0xff]
  %v31 = vld [vmem:[%s1 + $0x70] sm:$0xff]
  %v32 = vld [vmem:[%s1 + $0x78] sm:$0xff]
  %v33 = vld [vmem:[%s2] sm:$0x1]
  %v35 = vperm.slane %v33, 0
  %37 = vmatpush.msra.mxu0 %v32
  %38 = vmatpush.msra.mxu0 %v31
  %39 = vmatpush.msra.mxu0 %v30
  %40 = vmatpush.msra.mxu0 %v29
  %41 = vmatpush.msra.mxu0 %v28
  %42 = vmatpush.msra.mxu0 %v27
  %43 = vmatpush.msra.mxu0 %v26
  %44 = vmatpush.msra.mxu0 %v25
  %45 = vmatpush.msra.mxu0 %v24
  %46 = vmatpush.msra.mxu0 %v23
  %47 = vmatpush.msra.mxu0 %v22
  %48 = vmatpush.msra.mxu0 %v21
  %49 = vmatpush.msra.mxu0 %v20
  %50 = vmatpush.msra.mxu0 %v19
  %51 = vmatpush.msra.mxu0 %v18
  %52 = vmatpush.msra.mxu0 %v17
  %53 = vmatmul.f32.gmra.mxu0 %v14
  %v54 = vpop.f32.mrf.mxu0
  %v55 = vadd.f32 %v35, %v54
  %56 = vmatmul.f32.gmra.mxu0 %v15
  %v57 = vpop.f32.mrf.mxu0
  %v58 = vadd.f32 %v35, %v57
  %59 = vmatmul.f32.gmra.mxu0 %v16
  %v60 = vpop.f32.mrf.mxu0
  %v61 = vadd.f32 %v35, %v60
  %62 = vdwg.mxu0
  %63 = vst [vmem:[%s3] sm:$0xff] %v55
  %64 = vst [vmem:[%s3 + $0x8] sm:$0xff] %v58
  %65 = vst [vmem:[%s3 + $0x10] sm:$0xf] %v61
  // Predicated region
  $region14: #{_lambda_.53} parent=0 // pred_check
    _
  $region15: #{_lambda_.53} parent=0 // pred_check_branch
    %67 = sbr.rel (0) target = $region17
  $region16: #{_lambda_.53} parent=0 // pred_region
    _
  $region17: #{_lambda_.53} parent=0 // pred_fallthru
    _
  // Predicated region
  $region18: #{_lambda_.53} parent=0 // pred_check
    _
  $region19: #{_lambda_.53} parent=0 // pred_check_branch
    %69 = sbr.rel (0) target = $region21
  $region20: #{_lambda_.53} parent=0 // pred_region
    _
  $region21: #{_lambda_.53} parent=0 // pred_fallthru
    _

// kernel: _lambda_.52
$region0: #{_lambda_.52}
  #allocation0 [shape = 'u32[]', space=smem, size = 0x4, offset = 0x4, fixed_abs, tag = 'smem constant byte address 0x4 - core index']
  #allocation1 [shape = 'u32[72,128]{1,0:T(1,128)}', space=vmem, size = 0x9000, scoped, tag = 'internal scratch']
  %s0 = inlined_call_operand.vmem [shape: f32[20,128], index: 0, kind: input, shape index: {}]
  %s1 = inlined_call_operand.vmem [shape: f32[1,128], index: 1, kind: input, shape index: {}]
  %s2 = inlined_call_operand.vmem [shape: f32[1,128], index: 2, kind: input, shape index: {}]
  %s3 = inlined_call_operand.vmem [shape: f32[20,128], index: 3, kind: output, shape index: {}]
  %s4 = sld [smem:[#allocation0]]
  $region22: #{_lambda_.52} parent=0
    _
  %s6 = ssub.s32 1, %s4
  %s7 = scalar_select 0, %s6, %s4
  // Predicated region
  $region2: #{_lambda_.52} parent=0 // pred_check
    _
  $region3: #{_lambda_.52} parent=0 // pred_check_branch
    %9 = sbr.rel (0) target = $region5
  $region4: #{_lambda_.52} parent=0 // pred_region
    _
  $region5: #{_lambda_.52} parent=0 // pred_fallthru
    _
  // Predicated region
  $region6: #{_lambda_.52} parent=0 // pred_check
    _
  $region7: #{_lambda_.52} parent=0 // pred_check_branch
    %11 = sbr.rel (0) target = $region9
  $region8: #{_lambda_.52} parent=0 // pred_region
    _
  $region9: #{_lambda_.52} parent=0 // pred_fallthru
    _
  // Predicated region
  $region10: #{_lambda_.52} parent=0 // pred_check
    _
  $region11: #{_lambda_.52} parent=0 // pred_check_branch
    %13 = sbr.rel (0) target = $region13
  $region12: #{_lambda_.52} parent=0 // pred_region
    _
  $region13: #{_lambda_.52} parent=0 // pred_fallthru
    _
  %v14 = vld [vmem:[%s0] sm:$0xff]
  %v15 = vld [vmem:[%s0 + $0x8] sm:$0xff]
  %v16 = vld [vmem:[%s0 + $0x10] sm:$0xf]
  %17 = vadd.xlane.f32.xlu0 %v14
  %v18 = vpop.xlane.xlu0 %17
  %19 = vadd.xlane.f32.xlu0 %v15
  %v20 = vpop.xlane.xlu0 %19
  %vm21 = vcmask 1043456
  %v22 = vsel %vm21, %v16, 0.0
  %23 = vadd.xlane.f32.xlu0 %v22
  %v24 = vpop.xlane.xlu0 %23
  %v25 = vrcp.pop 128.0
  %v26 = vmul.f32 128.0, %v25
  %v27 = vsub.f32 1.0, %v26
  %v28 = vmul.f32 %v25, %v27
  %v29 = vadd.f32 %v25, %v28
  %vm30 = vweird.f32 %v25
  %v31 = vsel %vm30, %v25, %v29
  %v32 = vmul.f32 %v18, %v31
  %v33 = vmul.f32 %v20, %v31
  %v34 = vmul.f32 %v24, %v31
  %v35 = vsub.f32 %v14, %v32
  %v36 = vsub.f32 %v15, %v33
  %v37 = vsub.f32 %v16, %v34
  %v38 = vmul.f32 %v35, %v35
  %v39 = vmul.f32 %v36, %v36
  %v40 = vmul.f32 %v37, %v37
  %41 = vadd.xlane.f32.xlu0 %v38
  %v42 = vpop.xlane.xlu0 %41
  %43 = vadd.xlane.f32.xlu0 %v39
  %v44 = vpop.xlane.xlu0 %43
  %v45 = vsel %vm21, %v40, 0.0
  %46 = vadd.xlane.f32.xlu0 %v45
  %v47 = vpop.xlane.xlu0 %46
  %v48 = vmul.f32 %v42, %v31
  %v49 = vmul.f32 %v44, %v31
  %v50 = vmul.f32 %v47, %v31
  %v51 = vadd.f32 %v48, 1e-05
  %v52 = vadd.f32 %v49, 1e-05
  %v53 = vadd.f32 %v50, 1e-05
  %v54 = vrsqrt.pop %v51
  %v55 = vmul.f32 %v54, %v51
  %v56 = vmul.f32 %v55, %v54
  %v57 = vmul.f32 0.5, %v56
  %v58 = vsub.f32 1.5, %v57
  %v59 = vmul.f32 %v54, %v58
  %v60 = vmul.f32 %v51, %v59
  %vm61 = vcmp.eq.f32.partialorder %v51, inf
  %v62 = vsel %vm61, %v51, %v60
  %vm63 = vcmp.eq.f32.partialorder %v51, 0.0
  %v64 = vand.u32 %v51, 2147483648
  %v65 = vsel %vm63, %v64, %v62
  %v66 = vrsqrt.pop %v52
  %v67 = vmul.f32 %v66, %v52
  %v68 = vmul.f32 %v67, %v66
  %v69 = vmul.f32 0.5, %v68
  %v70 = vsub.f32 1.5, %v69
  %v71 = vmul.f32 %v66, %v70
  %v72 = vmul.f32 %v52, %v71
  %vm73 = vcmp.eq.f32.partialorder %v52, inf
  %v74 = vsel %vm73, %v52, %v72
  %vm75 = vcmp.eq.f32.partialorder %v52, 0.0
  %v76 = vand.u32 %v52, 2147483648
  %v77 = vsel %vm75, %v76, %v74
  %v78 = vrsqrt.pop %v53
  %v79 = vmul.f32 %v78, %v53
  %v80 = vmul.f32 %v79, %v78
  %v81 = vmul.f32 0.5, %v80
  %v82 = vsub.f32 1.5, %v81
  %v83 = vmul.f32 %v78, %v82
  %v84 = vmul.f32 %v53, %v83
  %vm85 = vcmp.eq.f32.partialorder %v53, inf
  %v86 = vsel %vm85, %v53, %v84
  %vm87 = vcmp.eq.f32.partialorder %v53, 0.0
  %v88 = vand.u32 %v53, 2147483648
  %v89 = vsel %vm87, %v88, %v86
  %v90 = vrcp.pop %v65
  %v91 = vmul.f32 %v65, %v90
  %v92 = vsub.f32 1.0, %v91
  %v93 = vmul.f32 %v90, %v92
  %v94 = vadd.f32 %v90, %v93
  %vm95 = vweird.f32 %v65
  %vm96 = vweird.f32 %v90
  %vm97 = vmor %vm95, %vm96
  %v98 = vsel %vm97, %v90, %v94
  %v99 = vand.u32 2147483647, %v65
  %vm100 = vcmp.eq.f32.partialorder %v99, 8.507059e+37
  %v101 = vand.u32 %v65, 2147483648
  %v102 = vor.u32 1.1754944e-38, %v101
  %v103 = vsel %vm100, %v102, %v98
  %v104 = vmul.f32 %v35, %v103
  %v105 = vrcp.pop %v77
  %v106 = vmul.f32 %v77, %v105
  %v107 = vsub.f32 1.0, %v106
  %v108 = vmul.f32 %v105, %v107
  %v109 = vadd.f32 %v105, %v108
  %vm110 = vweird.f32 %v77
  %vm111 = vweird.f32 %v105
  %vm112 = vmor %vm110, %vm111
  %v113 = vsel %vm112, %v105, %v109
  %v114 = vand.u32 2147483647, %v77
  %vm115 = vcmp.eq.f32.partialorder %v114, 8.507059e+37
  %v116 = vand.u32 %v77, 2147483648
  %v117 = vor.u32 1.1754944e-38, %v116
  %v118 = vsel %vm115, %v117, %v113
  %v119 = vmul.f32 %v36, %v118
  %v120 = vrcp.pop %v89
  %v121 = vmul.f32 %v89, %v120
  %v122 = vsub.f32 1.0, %v121
  %v123 = vmul.f32 %v120, %v122
  %v124 = vadd.f32 %v120, %v123
  %vm125 = vweird.f32 %v89
  %vm126 = vweird.f32 %v120
  %vm127 = vmor %vm125, %vm126
  %v128 = vsel %vm127, %v120, %v124
  %v129 = vand.u32 2147483647, %v89
  %vm130 = vcmp.eq.f32.partialorder %v129, 8.507059e+37
  %v131 = vand.u32 %v89, 2147483648
  %v132 = vor.u32 1.1754944e-38, %v131
  %v133 = vsel %vm130, %v132, %v128
  %v134 = vmul.f32 %v37, %v133
  %v135 = vld [vmem:[%s1] sm:$0x1]
  %v137 = vperm.slane %v135, 0
  %v139 = vmul.f32 %v104, %v137
  %v140 = vmul.f32 %v119, %v137
  %v141 = vmul.f32 %v134, %v137
  %v142 = vld [vmem:[%s2] sm:$0x1]
  %v144 = vperm.slane %v142, 0
  %v146 = vadd.f32 %v139, %v144
  %v147 = vadd.f32 %v140, %v144
  %v148 = vadd.f32 %v141, %v144
  %149 = vst [vmem:[%s3] sm:$0xff] %v146
  %150 = vst [vmem:[%s3 + $0x8] sm:$0xff] %v147
  %151 = vst [vmem:[%s3 + $0x10] sm:$0xf] %v148
  // Predicated region
  $region14: #{_lambda_.52} parent=0 // pred_check
    _
  $region15: #{_lambda_.52} parent=0 // pred_check_branch
    %153 = sbr.rel (0) target = $region17
  $region16: #{_lambda_.52} parent=0 // pred_region
    _
  $region17: #{_lambda_.52} parent=0 // pred_fallthru
    _
  // Predicated region
  $region18: #{_lambda_.52} parent=0 // pred_check
    _
  $region19: #{_lambda_.52} parent=0 // pred_check_branch
    %155 = sbr.rel (0) target = $region21
  $region20: #{_lambda_.52} parent=0 // pred_region
    _
  $region21: #{_lambda_.52} parent=0 // pred_fallthru
    _

// kernel: _lambda_.56
$region0: #{_lambda_.56}
  #allocation0 [shape = 'u32[]', space=smem, size = 0x4, offset = 0x4, fixed_abs, tag = 'smem constant byte address 0x4 - core index']
  #allocation1 [shape = 'u32[72,128]{1,0:T(1,128)}', space=vmem, size = 0x9000, scoped, tag = 'internal scratch']
  %s0 = inlined_call_operand.vmem [shape: f32[8,10,32], index: 0, kind: input, shape index: {}]
  %s1 = inlined_call_operand.vmem [shape: f32[8,10,32], index: 1, kind: input, shape index: {}]
  %s2 = inlined_call_operand.vmem [shape: f32[8,10,32], index: 2, kind: input, shape index: {}]
  %s3 = inlined_call_operand.vmem [shape: s32[8,10,10], index: 3, kind: input, shape index: {}]
  %s4 = inlined_call_operand.vmem [shape: f32[8,10,32], index: 4, kind: output, shape index: {}]
  %s5 = sld [smem:[#allocation0]]
  $region49: #{_lambda_.56} parent=0
    _
  %s7 = ssub.s32 1, %s5
  %s8 = scalar_select 0, %s7, %s5
  loop: start=0, step=1, limit=10
  $region2: #{_lambda_.56} parent=0 // loop_pre_header
    _
  $region3: #{_lambda_.56} parent=0 // loop_header
    %s10 = sphi 0, %s14
    %p11 = scmp.ge.s32.totalorder %s10, 10
    %s20 = sphi 0, %s22
    %s23 = sphi 0, %s20
    %s24 = sphi 0, %s23
    %s40 = sphi 0, %s24
    %s46 = sphi 0, %s48
    %s49 = sphi 0, %s46
    %s50 = sphi 0, %s49
    %s66 = sphi 0, %s50
    %s72 = sphi 0, %s74
    %s75 = sphi 0, %s72
    %s76 = sphi 0, %s75
    %s92 = sphi 0, %s76
    %s98 = sphi 0, %s100
    %s101 = sphi 0, %s98
    %s102 = sphi 0, %s101
    %s118 = sphi 0, %s102
    %s124 = sphi 0, %s126
    %s127 = sphi 0, %s124
    %s128 = sphi 0, %s127
    %s144 = sphi 0, %s128
  $region4: #{_lambda_.56} parent=0 // loop_header_branch
    %13 = sbr.rel (%p11) target = $region8
  $region5: #{_lambda_.56} parent=0 // loop_body
    %s15 = ssub.s32 %s10, 1
    %s16 = ssub.s32 %s10, 2
    %s17 = sadd.s32 %s10, 1
    %s18 = ssub.s32 %s10, %s17
    %p19 = scmp.eq.s32.totalorder %s18, 0
    %s21 = sadd.s32 %s20, 1
    %s22 = scalar_select %p19, %s20, %s21
    %p25 = pneg %p19
    %p26 = scmp.eq.s32.totalorder %s10, 7
    %p27 = por %p25, %p26
    %p28 = scmp.ne.s32.totalorder %s20, %s23
    %p29 = scmp.eq.s32.totalorder %s10, 0
    %p30 = por %p28, %p29
    %p31 = scmp.ne.s32.totalorder %s20, %s23
    %p32 = scmp.eq.s32.totalorder %s15, 7
    %p33 = por %p31, %p32
    %p34 = scmp.ne.s32.totalorder %s23, %s24
    %p35 = scmp.eq.s32.totalorder %s15, 0
    %p36 = por %p34, %p35
    %p37 = scmp.ne.s32.totalorder %s23, %s24
    %p38 = scmp.eq.s32.totalorder %s16, 7
    %p39 = por %p37, %p38
    %p41 = scmp.ne.s32.totalorder %s24, %s40
    %p42 = scmp.eq.s32.totalorder %s16, 0
    %p43 = por %p41, %p42
    %s44 = ssub.s32 %s10, %s17
    %p45 = scmp.eq.s32.totalorder %s44, 0
    %s47 = sadd.s32 %s46, 1
    %s48 = scalar_select %p45, %s46, %s47
    %p51 = pneg %p45
    %p52 = scmp.eq.s32.totalorder %s10, 7
    %p53 = por %p51, %p52
    %p54 = scmp.ne.s32.totalorder %s46, %s49
    %p55 = scmp.eq.s32.totalorder %s10, 0
    %p56 = por %p54, %p55
    %p57 = scmp.ne.s32.totalorder %s46, %s49
    %p58 = scmp.eq.s32.totalorder %s15, 7
    %p59 = por %p57, %p58
    %p60 = scmp.ne.s32.totalorder %s49, %s50
    %p61 = scmp.eq.s32.totalorder %s15, 0
    %p62 = por %p60, %p61
    %p63 = scmp.ne.s32.totalorder %s49, %s50
    %p64 = scmp.eq.s32.totalorder %s16, 7
    %p65 = por %p63, %p64
    %p67 = scmp.ne.s32.totalorder %s50, %s66
    %p68 = scmp.eq.s32.totalorder %s16, 0
    %p69 = por %p67, %p68
    %s70 = ssub.s32 %s10, %s17
    %p71 = scmp.eq.s32.totalorder %s70, 0
    %s73 = sadd.s32 %s72, 1
    %s74 = scalar_select %p71, %s72, %s73
    %p77 = pneg %p71
    %p78 = scmp.eq.s32.totalorder %s10, 7
    %p79 = por %p77, %p78
    %p80 = scmp.ne.s32.totalorder %s72, %s75
    %p81 = scmp.eq.s32.totalorder %s10, 0
    %p82 = por %p80, %p81
    %p83 = scmp.ne.s32.totalorder %s72, %s75
    %p84 = scmp.eq.s32.totalorder %s15, 7
    %p85 = por %p83, %p84
    %p86 = scmp.ne.s32.totalorder %s75, %s76
    %p87 = scmp.eq.s32.totalorder %s15, 0
    %p88 = por %p86, %p87
    %p89 = scmp.ne.s32.totalorder %s75, %s76
    %p90 = scmp.eq.s32.totalorder %s16, 7
    %p91 = por %p89, %p90
    %p93 = scmp.ne.s32.totalorder %s76, %s92
    %p94 = scmp.eq.s32.totalorder %s16, 0
    %p95 = por %p93, %p94
    %s96 = ssub.s32 %s10, %s17
    %p97 = scmp.eq.s32.totalorder %s96, 0
    %s99 = sadd.s32 %s98, 1
    %s100 = scalar_select %p97, %s98, %s99
    %p103 = pneg %p97
    %p104 = scmp.eq.s32.totalorder %s10, 7
    %p105 = por %p103, %p104
    %p106 = scmp.ne.s32.totalorder %s98, %s101
    %p107 = scmp.eq.s32.totalorder %s10, 0
    %p108 = por %p106, %p107
    %p109 = scmp.ne.s32.totalorder %s98, %s101
    %p110 = scmp.eq.s32.totalorder %s15, 7
    %p111 = por %p109, %p110
    %p112 = scmp.ne.s32.totalorder %s101, %s102
    %p113 = scmp.eq.s32.totalorder %s15, 0
    %p114 = por %p112, %p113
    %p115 = scmp.ne.s32.totalorder %s101, %s102
    %p116 = scmp.eq.s32.totalorder %s16, 7
    %p117 = por %p115, %p116
    %p119 = scmp.ne.s32.totalorder %s102, %s118
    %p120 = scmp.eq.s32.totalorder %s16, 0
    %p121 = por %p119, %p120
    %s122 = ssub.s32 %s10, %s17
    %p123 = scmp.eq.s32.totalorder %s122, 0
    %s125 = sadd.s32 %s124, 1
    %s126 = scalar_select %p123, %s124, %s125
    %p129 = pneg %p123
    %p130 = scmp.eq.s32.totalorder %s10, 7
    %p131 = por %p129, %p130
    %p132 = scmp.ne.s32.totalorder %s124, %s127
    %p133 = scmp.eq.s32.totalorder %s10, 0
    %p134 = por %p132, %p133
    %p135 = scmp.ne.s32.totalorder %s124, %s127
    %p136 = scmp.eq.s32.totalorder %s15, 7
    %p137 = por %p135, %p136
    %p138 = scmp.ne.s32.totalorder %s127, %s128
    %p139 = scmp.eq.s32.totalorder %s15, 0
    %p140 = por %p138, %p139
    %p141 = scmp.ne.s32.totalorder %s127, %s128
    %p142 = scmp.eq.s32.totalorder %s16, 7
    %p143 = por %p141, %p142
    %p145 = scmp.ne.s32.totalorder %s128, %s144
    %p146 = scmp.eq.s32.totalorder %s16, 0
    %p147 = por %p145, %p146
    %p148 = scmp.le.s32.totalorder 1, %s10
    %p149 = scmp.lt.s32.totalorder %s10, 9
    %p150 = pnand %p148, %p149
    %p151 = pneg %p150
    // Predicated region
    $region9: #{_lambda_.56} parent=5 // pred_check
      _
    $region10: #{_lambda_.56} parent=5 // pred_check_branch
      %153 = sbr.rel (%p150) target = $region12
    $region11: #{_lambda_.56} parent=5 // pred_region
      %s154 = ssub.s32 %s10, 1
    $region12: #{_lambda_.56} parent=5 // pred_fallthru
      _
    %p155 = scmp.lt.s32.totalorder %s10, 8
    // Predicated region
    $region13: #{_lambda_.56} parent=5 // pred_check
      %p156 = pneg %p155
    $region14: #{_lambda_.56} parent=5 // pred_check_branch
      %158 = sbr.rel (%p156) target = $region16
    $region15: #{_lambda_.56} parent=5 // pred_region
      // Predicated region
      $region17: #{_lambda_.56} parent=15 // pred_check
        %p159 = pneg %p30
      $region18: #{_lambda_.56} parent=15 // pred_check_branch
        %161 = sbr.rel (%p159) target = $region20
      $region19: #{_lambda_.56} parent=15 // pred_region
        %p162 = scmp.lt.s32.totalorder %s10, 7
        %s163 = scalar_select %p162, %s10, 7
        %s164 = smul.addr %s163, 2
        %s165 = smul.addr %s164, 8
        %s166 = scalar_lea.vmem %s0, %s165
      $region20: #{_lambda_.56} parent=15 // pred_fallthru
        _
      // Predicated region
      $region21: #{_lambda_.56} parent=15 // pred_check
        %p167 = pneg %p56
      $region22: #{_lambda_.56} parent=15 // pred_check_branch
        %169 = sbr.rel (%p167) target = $region24
      $region23: #{_lambda_.56} parent=15 // pred_region
        %p170 = scmp.lt.s32.totalorder %s10, 7
        %s171 = scalar_select %p170, %s10, 7
        %s172 = smul.addr %s171, 2
        %s173 = smul.addr %s172, 8
        %s174 = scalar_lea.vmem %s1, %s173
      $region24: #{_lambda_.56} parent=15 // pred_fallthru
        _
      // Predicated region
      $region25: #{_lambda_.56} parent=15 // pred_check
        %p175 = pneg %p82
      $region26: #{_lambda_.56} parent=15 // pred_check_branch
        %177 = sbr.rel (%p175) target = $region28
      $region27: #{_lambda_.56} parent=15 // pred_region
        %p178 = scmp.lt.s32.totalorder %s10, 7
        %s179 = scalar_select %p178, %s10, 7
        %s180 = smul.addr %s179, 2
        %s181 = smul.addr %s180, 8
        %s182 = scalar_lea.vmem %s2, %s181
      $region28: #{_lambda_.56} parent=15 // pred_fallthru
        _
      // Predicated region
      $region29: #{_lambda_.56} parent=15 // pred_check
        %p183 = pneg %p108
      $region30: #{_lambda_.56} parent=15 // pred_check_branch
        %185 = sbr.rel (%p183) target = $region32
      $region31: #{_lambda_.56} parent=15 // pred_region
        %p186 = scmp.lt.s32.totalorder %s10, 7
        %s187 = scalar_select %p186, %s10, 7
        %s188 = smul.addr %s187, 2
        %s189 = smul.addr %s188, 8
        %s190 = scalar_lea.vmem %s3, %s189
      $region32: #{_lambda_.56} parent=15 // pred_fallthru
        _
    $region16: #{_lambda_.56} parent=5 // pred_fallthru
      _
    %p191 = scmp.le.s32.totalorder 1, %s10
    %p192 = scmp.lt.s32.totalorder %s10, 9
    %p193 = pnand %p191, %p192
    %p194 = pneg %p193
    // Predicated region
    $region33: #{_lambda_.56} parent=5 // pred_check
      _
    $region34: #{_lambda_.56} parent=5 // pred_check_branch
      %196 = sbr.rel (%p193) target = $region36
    $region35: #{_lambda_.56} parent=5 // pred_region
      %s197 = ssub.s32 %s10, 1
      %p198 = scmp.lt.s32.totalorder %s15, 7
      %s199 = scalar_select %p198, %s15, 7
      %s200 = smul.addr %s199, 2
      %s201 = smul.addr %s200, 8
      %s202 = scalar_lea.vmem %s0, %s201
      %p203 = pneg %p36
      %p204 = pneg %p33
      %p205 = scmp.lt.s32.totalorder %s15, 7
      %s206 = scalar_select %p205, %s15, 7
      %s207 = smul.addr %s206, 2
      %s208 = smul.addr %s207, 8
      %s209 = scalar_lea.vmem %s1, %s208
      %p210 = pneg %p62
      %p211 = pneg %p59
      %p212 = scmp.lt.s32.totalorder %s15, 7
      %s213 = scalar_select %p212, %s15, 7
      %s214 = smul.addr %s213, 2
      %s215 = smul.addr %s214, 8
      %s216 = scalar_lea.vmem %s2, %s215
      %p217 = pneg %p88
      %p218 = pneg %p85
      %p219 = scmp.lt.s32.totalorder %s15, 7
      %s220 = scalar_select %p219, %s15, 7
      %s221 = smul.addr %s220, 2
      %s222 = smul.addr %s221, 8
      %s223 = scalar_lea.vmem %s3, %s222
      %p224 = pneg %p114
      %p225 = pneg %p111
      %p226 = pneg %p140
      %p227 = pneg %p137
      %p228 = scmp.lt.s32.totalorder %s15, 7
      %s229 = scalar_select %p228, %s15, 7
      %s230 = smul.addr %s229, 2
      %s231 = smul.addr %s230, 8
      %s232 = scalar_lea.vmem %s4, %s231
      %p233 = scmp.lt.s32.totalorder %s15, 7
      %s234 = scalar_select %p233, %s15, 7
      %s235 = smul.addr %s234, 2
      %s236 = smul.addr %s235, 8
      %s237 = scalar_lea.vmem %s0, %s236
      %p238 = scmp.lt.s32.totalorder %s15, 7
      %s239 = scalar_select %p238, %s15, 7
      %s240 = smul.addr %s239, 2
      %s241 = smul.addr %s240, 8
      %s242 = scalar_lea.vmem %s1, %s241
      %p243 = scmp.lt.s32.totalorder %s15, 7
      %s244 = scalar_select %p243, %s15, 7
      %s245 = smul.addr %s244, 2
      %s246 = smul.addr %s245, 8
      %s247 = scalar_lea.vmem %s2, %s246
      %p248 = scmp.lt.s32.totalorder %s15, 7
      %s249 = scalar_select %p248, %s15, 7
      %s250 = smul.addr %s249, 2
      %s251 = smul.addr %s250, 8
      %s252 = scalar_lea.vmem %s3, %s251
      %p253 = scmp.lt.s32.totalorder %s15, 7
      %s254 = scalar_select %p253, %s15, 7
      %s255 = smul.addr %s254, 2
      %s256 = smul.addr %s255, 8
      %s257 = scalar_lea.vmem %s4, %s256
      %v258 = vld [vmem:[%s237] sm:$0xff]
      %v259 = vld [vmem:[%s237 + $0x8] sm:$0x3]
      %v260 = vld [vmem:[%s242] sm:$0xff]
      %v261 = vld [vmem:[%s242 + $0x8] sm:$0x3]
      %vm262 = vcmask 261120
      %v264 = vsel %vm262, %v258, 0
      %v267 = vsel %vm262, %v259, 0
      %v270 = vsel %vm262, %v260, 0
      %v273 = vsel %vm262, %v261, 0
      %275 = vmatpush.xpose.msra.mxu0 0.0
      %276 = vmatpush.xpose.msra.mxu0 0.0
      %277 = vmatpush.xpose.msra.mxu0 0.0
      %278 = vmatpush.xpose.msra.mxu0 0.0
      %279 = vmatpush.xpose.msra.mxu0 0.0
      %280 = vmatpush.xpose.msra.mxu0 0.0
      %281 = vmatpush.xpose.msra.mxu0 0.0
      %282 = vmatpush.xpose.msra.mxu0 0.0
      %283 = vmatpush.xpose.msra.mxu0 0.0
      %284 = vmatpush.xpose.msra.mxu0 0.0
      %285 = vmatpush.xpose.msra.mxu0 0.0
      %286 = vmatpush.xpose.msra.mxu0 0.0
      %287 = vmatpush.xpose.msra.mxu0 0.0
      %288 = vmatpush.xpose.msra.mxu0 0.0
      %289 = vmatpush.xpose.msra.mxu0 %v273
      %290 = vmatpush.xpose.msra.mxu0 %v270
      %291 = vmatmul.f32.gmra.mxu0 %v264
      %v292 = vpop.f32.mrf.mxu0
      %v293 = vadd.f32 0.0, %v292
      %294 = vmatmul.f32.gmra.mxu0 %v267
      %v295 = vpop.f32.mrf.mxu0
      %v296 = vadd.f32 0.0, %v295
      %297 = vdwg.mxu0
      %v298 = vmul.f32 %v293, 0.17677669
      %v299 = vmul.f32 %v296, 0.17677669
      %v300 = vld [vmem:[%s252] sm:$0xff]
      %v301 = vld [vmem:[%s252 + $0x8] sm:$0x3]
      %vm302 = vcmp.eq.s32.totalorder %v300, 0
      %vm303 = vcmp.eq.s32.totalorder %v301, 0
      %v304 = vsel %vm302, -1e+10, %v298
      %v305 = vsel %vm303, -1e+10, %v299
      %vm306 = vcmask 80896
      %v307 = vsel %vm306, %v304, -inf
      %308 = vmax.xlane.f32.xlu0 %v307
      %v309 = vpop.xlane.xlu0 %308
      %vm310 = vcmask 74752
      %v311 = vsel %vm310, %v305, -inf
      %312 = vmax.xlane.f32.xlu0 %v311
      %v313 = vpop.xlane.xlu0 %312
      %v314 = vsub.f32 %v304, %v309
      %v315 = vsub.f32 %v305, %v313
      %v316 = vmul.f32 %v314, 1.442695
      %v317 = vpow.pop %v316
      %v318 = vmul.f32 %v315, 1.442695
      %v319 = vpow.pop %v318
      %v320 = vsel %vm306, %v317, 0.0
      %321 = vadd.xlane.f32.xlu0 %v320
      %v322 = vpop.xlane.xlu0 %321
      %v323 = vsel %vm310, %v319, 0.0
      %324 = vadd.xlane.f32.xlu0 %v323
      %v325 = vpop.xlane.xlu0 %324
      %v326 = vrcp.pop %v322
      %v327 = vmul.f32 %v322, %v326
      %v328 = vsub.f32 1.0, %v327
      %v329 = vmul.f32 %v326, %v328
      %v330 = vadd.f32 %v326, %v329
      %vm331 = vweird.f32 %v322
      %vm332 = vweird.f32 %v326
      %vm333 = vmor %vm331, %vm332
      %v334 = vsel %vm333, %v326, %v330
      %v335 = vand.u32 2147483647, %v322
      %vm336 = vcmp.eq.f32.partialorder %v335, 8.507059e+37
      %v337 = vand.u32 %v322, 2147483648
      %v338 = vor.u32 1.1754944e-38, %v337
      %v339 = vsel %vm336, %v338, %v334
      %v340 = vmul.f32 %v317, %v339
      %v341 = vrcp.pop %v325
      %v342 = vmul.f32 %v325, %v341
      %v343 = vsub.f32 1.0, %v342
      %v344 = vmul.f32 %v341, %v343
      %v345 = vadd.f32 %v341, %v344
      %vm346 = vweird.f32 %v325
      %vm347 = vweird.f32 %v341
      %vm348 = vmor %vm346, %vm347
      %v349 = vsel %vm348, %v341, %v345
      %v350 = vand.u32 2147483647, %v325
      %vm351 = vcmp.eq.f32.partialorder %v350, 8.507059e+37
      %v352 = vand.u32 %v325, 2147483648
      %v353 = vor.u32 1.1754944e-38, %v352
      %v354 = vsel %vm351, %v353, %v349
      %v355 = vmul.f32 %v319, %v354
      %v356 = vld [vmem:[%s247] sm:$0xff]
      %v357 = vld [vmem:[%s247 + $0x8] sm:$0x3]
      %v359 = vsel %vm306, %v340, 0
      %v362 = vsel %vm306, %v355, 0
      %vm364 = vcmask 1041408
      %v366 = vsel %vm364, %v357, 0
      %368 = vmatpush.msra.mxu0 0.0
      %369 = vmatpush.msra.mxu0 0.0
      %370 = vmatpush.msra.mxu0 0.0
      %371 = vmatpush.msra.mxu0 0.0
      %372 = vmatpush.msra.mxu0 0.0
      %373 = vmatpush.msra.mxu0 0.0
      %374 = vmatpush.msra.mxu0 0.0
      %375 = vmatpush.msra.mxu0 0.0
      %376 = vmatpush.msra.mxu0 0.0
      %377 = vmatpush.msra.mxu0 0.0
      %378 = vmatpush.msra.mxu0 0.0
      %379 = vmatpush.msra.mxu0 0.0
      %380 = vmatpush.msra.mxu0 0.0
      %381 = vmatpush.msra.mxu0 0.0
      %382 = vmatpush.msra.mxu0 %v366
      %383 = vmatpush.msra.mxu0 %v356
      %384 = vmatmul.f32.gmra.mxu0 %v359
      %v385 = vpop.f32.mrf.mxu0
      %v386 = vadd.f32 0.0, %v385
      %387 = vmatmul.f32.gmra.mxu0 %v362
      %v388 = vpop.f32.mrf.mxu0
      %v389 = vadd.f32 0.0, %v388
      %390 = vdwg.mxu0
      %391 = vst.msk [vmem:[%s257] sm:$0xff] %vm262, %v386
      %vm392 = vcmask 254976
      %393 = vst.msk [vmem:[%s257 + $0x8] sm:$0x3] %vm392, %v389
      %p394 = scmp.lt.s32.totalorder %s15, 7
      %s395 = scalar_select %p394, %s15, 7
      %s396 = smul.addr %s395, 2
      %s397 = smul.addr %s396, 8
      %s398 = scalar_lea.vmem %s4, %s397
      // Predicated region
      $region37: #{_lambda_.56} parent=35 // pred_check
        %p399 = pneg %p137
      $region38: #{_lambda_.56} parent=35 // pred_check_branch
        %401 = sbr.rel (%p399) target = $region40
      $region39: #{_lambda_.56} parent=35 // pred_region
        _
      $region40: #{_lambda_.56} parent=35 // pred_fallthru
        _
    $region36: #{_lambda_.56} parent=5 // pred_fallthru
      _
    %p402 = scmp.le.s32.totalorder 2, %s10
    // Predicated region
    $region41: #{_lambda_.56} parent=5 // pred_check
      %p403 = pneg %p402
    $region42: #{_lambda_.56} parent=5 // pred_check_branch
      %405 = sbr.rel (%p403) target = $region44
    $region43: #{_lambda_.56} parent=5 // pred_region
      %s406 = ssub.s32 %s10, 2
      // Predicated region
      $region45: #{_lambda_.56} parent=43 // pred_check
        %p407 = pneg %p143
      $region46: #{_lambda_.56} parent=43 // pred_check_branch
        %409 = sbr.rel (%p407) target = $region48
      $region47: #{_lambda_.56} parent=43 // pred_region
        %p410 = scmp.lt.s32.totalorder %s16, 7
        %s411 = scalar_select %p410, %s16, 7
        %s412 = smul.addr %s411, 2
        %s413 = smul.addr %s412, 8
        %s414 = scalar_lea.vmem %s4, %s413
      $region48: #{_lambda_.56} parent=43 // pred_fallthru
        _
    $region44: #{_lambda_.56} parent=5 // pred_fallthru
      _
  $region6: #{_lambda_.56} parent=0 // loop_footer
    %s14 = sadd.s32 1, %s10
  $region7: #{_lambda_.56} parent=0 // loop_footer_branch
    %9 = sbr.rel target = $region3
  $region8: #{_lambda_.56} parent=0 // loop_exit
    _

// kernel: _lambda_.60
$region0: #{_lambda_.60}
  #allocation0 [shape = 'u32[]', space=smem, size = 0x4, offset = 0x4, fixed_abs, tag = 'smem constant byte address 0x4 - core index']
  #allocation1 [shape = 'u32[72,128]{1,0:T(1,128)}', space=vmem, size = 0x9000, scoped, tag = 'internal scratch']
  %s0 = inlined_call_operand.vmem [shape: f32[20,256], index: 0, kind: input, shape index: {}]
  %s1 = inlined_call_operand.vmem [shape: f32[256,128], index: 1, kind: input, shape index: {}]
  %s2 = inlined_call_operand.vmem [shape: f32[1,128], index: 2, kind: input, shape index: {}]
  %s3 = inlined_call_operand.vmem [shape: f32[20,128], index: 3, kind: output, shape index: {}]
  %s4 = sld [smem:[#allocation0]]
  $region22: #{_lambda_.60} parent=0
    _
  %s6 = ssub.s32 1, %s4
  %s7 = scalar_select 0, %s6, %s4
  // Predicated region
  $region2: #{_lambda_.60} parent=0 // pred_check
    _
  $region3: #{_lambda_.60} parent=0 // pred_check_branch
    %9 = sbr.rel (0) target = $region5
  $region4: #{_lambda_.60} parent=0 // pred_region
    _
  $region5: #{_lambda_.60} parent=0 // pred_fallthru
    _
  // Predicated region
  $region6: #{_lambda_.60} parent=0 // pred_check
    _
  $region7: #{_lambda_.60} parent=0 // pred_check_branch
    %11 = sbr.rel (0) target = $region9
  $region8: #{_lambda_.60} parent=0 // pred_region
    _
  $region9: #{_lambda_.60} parent=0 // pred_fallthru
    _
  // Predicated region
  $region10: #{_lambda_.60} parent=0 // pred_check
    _
  $region11: #{_lambda_.60} parent=0 // pred_check_branch
    %13 = sbr.rel (0) target = $region13
  $region12: #{_lambda_.60} parent=0 // pred_region
    _
  $region13: #{_lambda_.60} parent=0 // pred_fallthru
    _
  %v14 = vld [vmem:[%s0] sm:$0xff]
  %v15 = vld [vmem:[%s0 + $0x8] sm:$0xff]
  %v16 = vld [vmem:[%s0 + $0x10] sm:$0xff]
  %v17 = vld [vmem:[%s0 + $0x18] sm:$0xff]
  %v18 = vld [vmem:[%s0 + $0x20] sm:$0xf]
  %v19 = vld [vmem:[%s0 + $0x28] sm:$0xf]
  %v20 = vld [vmem:[%s1] sm:$0xff]
  %v21 = vld [vmem:[%s1 + $0x8] sm:$0xff]
  %v22 = vld [vmem:[%s1 + $0x10] sm:$0xff]
  %v23 = vld [vmem:[%s1 + $0x18] sm:$0xff]
  %v24 = vld [vmem:[%s1 + $0x20] sm:$0xff]
  %v25 = vld [vmem:[%s1 + $0x28] sm:$0xff]
  %v26 = vld [vmem:[%s1 + $0x30] sm:$0xff]
  %v27 = vld [vmem:[%s1 + $0x38] sm:$0xff]
  %v28 = vld [vmem:[%s1 + $0x40] sm:$0xff]
  %v29 = vld [vmem:[%s1 + $0x48] sm:$0xff]
  %v30 = vld [vmem:[%s1 + $0x50] sm:$0xff]
  %v31 = vld [vmem:[%s1 + $0x58] sm:$0xff]
  %v32 = vld [vmem:[%s1 + $0x60] sm:$0xff]
  %v33 = vld [vmem:[%s1 + $0x68] sm:$0xff]
  %v34 = vld [vmem:[%s1 + $0x70] sm:$0xff]
  %v35 = vld [vmem:[%s1 + $0x78] sm:$0xff]
  %v36 = vld [vmem:[%s1 + $0x80] sm:$0xff]
  %v37 = vld [vmem:[%s1 + $0x88] sm:$0xff]
  %v38 = vld [vmem:[%s1 + $0x90] sm:$0xff]
  %v39 = vld [vmem:[%s1 + $0x98] sm:$0xff]
  %v40 = vld [vmem:[%s1 + $0xa0] sm:$0xff]
  %v41 = vld [vmem:[%s1 + $0xa8] sm:$0xff]
  %v42 = vld [vmem:[%s1 + $0xb0] sm:$0xff]
  %v43 = vld [vmem:[%s1 + $0xb8] sm:$0xff]
  %v44 = vld [vmem:[%s1 + $0xc0] sm:$0xff]
  %v45 = vld [vmem:[%s1 + $0xc8] sm:$0xff]
  %v46 = vld [vmem:[%s1 + $0xd0] sm:$0xff]
  %v47 = vld [vmem:[%s1 + $0xd8] sm:$0xff]
  %v48 = vld [vmem:[%s1 + $0xe0] sm:$0xff]
  %v49 = vld [vmem:[%s1 + $0xe8] sm:$0xff]
  %v50 = vld [vmem:[%s1 + $0xf0] sm:$0xff]
  %v51 = vld [vmem:[%s1 + $0xf8] sm:$0xff]
  %v52 = vld [vmem:[%s2] sm:$0x1]
  %v54 = vperm.slane %v52, 0
  %56 = vmatpush.msra.mxu0 %v35
  %57 = vmatpush.msra.mxu0 %v34
  %58 = vmatpush.msra.mxu0 %v33
  %59 = vmatpush.msra.mxu0 %v32
  %60 = vmatpush.msra.mxu0 %v31
  %61 = vmatpush.msra.mxu0 %v30
  %62 = vmatpush.msra.mxu0 %v29
  %63 = vmatpush.msra.mxu0 %v28
  %64 = vmatpush.msra.mxu0 %v27
  %65 = vmatpush.msra.mxu0 %v26
  %66 = vmatpush.msra.mxu0 %v25
  %67 = vmatpush.msra.mxu0 %v24
  %68 = vmatpush.msra.mxu0 %v23
  %69 = vmatpush.msra.mxu0 %v22
  %70 = vmatpush.msra.mxu0 %v21
  %71 = vmatpush.msra.mxu0 %v20
  %72 = vmatmul.f32.gmra.mxu0 %v14
  %v73 = vpop.f32.mrf.mxu0
  %v74 = vadd.f32 %v54, %v73
  %75 = vmatmul.f32.gmra.mxu0 %v16
  %v76 = vpop.f32.mrf.mxu0
  %v77 = vadd.f32 %v54, %v76
  %78 = vmatmul.f32.gmra.mxu0 %v18
  %v79 = vpop.f32.mrf.mxu0
  %v80 = vadd.f32 %v54, %v79
  %81 = vdwg.mxu0
  %82 = vmatpush.msra.mxu0 %v51
  %83 = vmatpush.msra.mxu0 %v50
  %84 = vmatpush.msra.mxu0 %v49
  %85 = vmatpush.msra.mxu0 %v48
  %86 = vmatpush.msra.mxu0 %v47
  %87 = vmatpush.msra.mxu0 %v46
  %88 = vmatpush.msra.mxu0 %v45
  %89 = vmatpush.msra.mxu0 %v44
  %90 = vmatpush.msra.mxu0 %v43
  %91 = vmatpush.msra.mxu0 %v42
  %92 = vmatpush.msra.mxu0 %v41
  %93 = vmatpush.msra.mxu0 %v40
  %94 = vmatpush.msra.mxu0 %v39
  %95 = vmatpush.msra.mxu0 %v38
  %96 = vmatpush.msra.mxu0 %v37
  %97 = vmatpush.msra.mxu0 %v36
  %98 = vmatmul.f32.gmra.mxu0 %v15
  %v99 = vpop.f32.mrf.mxu0
  %v100 = vadd.f32 %v74, %v99
  %101 = vmatmul.f32.gmra.mxu0 %v17
  %v102 = vpop.f32.mrf.mxu0
  %v103 = vadd.f32 %v77, %v102
  %104 = vmatmul.f32.gmra.mxu0 %v19
  %v105 = vpop.f32.mrf.mxu0
  %v106 = vadd.f32 %v80, %v105
  %107 = vdwg.mxu0
  %108 = vst [vmem:[%s3] sm:$0xff] %v100
  %109 = vst [vmem:[%s3 + $0x8] sm:$0xff] %v103
  %110 = vst [vmem:[%s3 + $0x10] sm:$0xf] %v106
  // Predicated region
  $region14: #{_lambda_.60} parent=0 // pred_check
    _
  $region15: #{_lambda_.60} parent=0 // pred_check_branch
    %112 = sbr.rel (0) target = $region17
  $region16: #{_lambda_.60} parent=0 // pred_region
    _
  $region17: #{_lambda_.60} parent=0 // pred_fallthru
    _
  // Predicated region
  $region18: #{_lambda_.60} parent=0 // pred_check
    _
  $region19: #{_lambda_.60} parent=0 // pred_check_branch
    %114 = sbr.rel (0) target = $region21
  $region20: #{_lambda_.60} parent=0 // pred_region
    _
  $region21: #{_lambda_.60} parent=0 // pred_fallthru
    _

// kernel: _lambda_.59
$region0: #{_lambda_.59}
  #allocation0 [shape = 'u32[]', space=smem, size = 0x4, offset = 0x4, fixed_abs, tag = 'smem constant byte address 0x4 - core index']
  #allocation1 [shape = 'u32[72,128]{1,0:T(1,128)}', space=vmem, size = 0x9000, scoped, tag = 'internal scratch']
  %s0 = inlined_call_operand.vmem [shape: f32[20,128], index: 0, kind: input, shape index: {}]
  %s1 = inlined_call_operand.vmem [shape: f32[128,256], index: 1, kind: input, shape index: {}]
  %s2 = inlined_call_operand.vmem [shape: f32[1,256], index: 2, kind: input, shape index: {}]
  %s3 = inlined_call_operand.vmem [shape: f32[20,256], index: 3, kind: output, shape index: {}]
  %s4 = sld [smem:[#allocation0]]
  $region22: #{_lambda_.59} parent=0
    _
  %s6 = ssub.s32 1, %s4
  %s7 = scalar_select 0, %s6, %s4
  // Predicated region
  $region2: #{_lambda_.59} parent=0 // pred_check
    _
  $region3: #{_lambda_.59} parent=0 // pred_check_branch
    %9 = sbr.rel (0) target = $region5
  $region4: #{_lambda_.59} parent=0 // pred_region
    _
  $region5: #{_lambda_.59} parent=0 // pred_fallthru
    _
  // Predicated region
  $region6: #{_lambda_.59} parent=0 // pred_check
    _
  $region7: #{_lambda_.59} parent=0 // pred_check_branch
    %11 = sbr.rel (0) target = $region9
  $region8: #{_lambda_.59} parent=0 // pred_region
    _
  $region9: #{_lambda_.59} parent=0 // pred_fallthru
    _
  // Predicated region
  $region10: #{_lambda_.59} parent=0 // pred_check
    _
  $region11: #{_lambda_.59} parent=0 // pred_check_branch
    %13 = sbr.rel (0) target = $region13
  $region12: #{_lambda_.59} parent=0 // pred_region
    _
  $region13: #{_lambda_.59} parent=0 // pred_fallthru
    _
  %v14 = vld [vmem:[%s0] sm:$0xff]
  %v15 = vld [vmem:[%s0 + $0x8] sm:$0xff]
  %v16 = vld [vmem:[%s0 + $0x10] sm:$0xf]
  %v17 = vld [vmem:[%s1] sm:$0xff]
  %v18 = vld [vmem:[%s1 + $0x8] sm:$0xff]
  %v19 = vld [vmem:[%s1 + $0x10] sm:$0xff]
  %v20 = vld [vmem:[%s1 + $0x18] sm:$0xff]
  %v21 = vld [vmem:[%s1 + $0x20] sm:$0xff]
  %v22 = vld [vmem:[%s1 + $0x28] sm:$0xff]
  %v23 = vld [vmem:[%s1 + $0x30] sm:$0xff]
  %v24 = vld [vmem:[%s1 + $0x38] sm:$0xff]
  %v25 = vld [vmem:[%s1 + $0x40] sm:$0xff]
  %v26 = vld [vmem:[%s1 + $0x48] sm:$0xff]
  %v27 = vld [vmem:[%s1 + $0x50] sm:$0xff]
  %v28 = vld [vmem:[%s1 + $0x58] sm:$0xff]
  %v29 = vld [vmem:[%s1 + $0x60] sm:$0xff]
  %v30 = vld [vmem:[%s1 + $0x68] sm:$0xff]
  %v31 = vld [vmem:[%s1 + $0x70] sm:$0xff]
  %v32 = vld [vmem:[%s1 + $0x78] sm:$0xff]
  %v33 = vld [vmem:[%s1 + $0x80] sm:$0xff]
  %v34 = vld [vmem:[%s1 + $0x88] sm:$0xff]
  %v35 = vld [vmem:[%s1 + $0x90] sm:$0xff]
  %v36 = vld [vmem:[%s1 + $0x98] sm:$0xff]
  %v37 = vld [vmem:[%s1 + $0xa0] sm:$0xff]
  %v38 = vld [vmem:[%s1 + $0xa8] sm:$0xff]
  %v39 = vld [vmem:[%s1 + $0xb0] sm:$0xff]
  %v40 = vld [vmem:[%s1 + $0xb8] sm:$0xff]
  %v41 = vld [vmem:[%s1 + $0xc0] sm:$0xff]
  %v42 = vld [vmem:[%s1 + $0xc8] sm:$0xff]
  %v43 = vld [vmem:[%s1 + $0xd0] sm:$0xff]
  %v44 = vld [vmem:[%s1 + $0xd8] sm:$0xff]
  %v45 = vld [vmem:[%s1 + $0xe0] sm:$0xff]
  %v46 = vld [vmem:[%s1 + $0xe8] sm:$0xff]
  %v47 = vld [vmem:[%s1 + $0xf0] sm:$0xff]
  %v48 = vld [vmem:[%s1 + $0xf8] sm:$0xff]
  %v49 = vld [vmem:[%s2] sm:$0x3]
  %v51 = vperm.slane %v49, 0
  %v52 = vperm.slane %v49, 1
  %55 = vmatpush.msra.mxu0 %v47
  %56 = vmatpush.msra.mxu0 %v45
  %57 = vmatpush.msra.mxu0 %v43
  %58 = vmatpush.msra.mxu0 %v41
  %59 = vmatpush.msra.mxu0 %v39
  %60 = vmatpush.msra.mxu0 %v37
  %61 = vmatpush.msra.mxu0 %v35
  %62 = vmatpush.msra.mxu0 %v33
  %63 = vmatpush.msra.mxu0 %v31
  %64 = vmatpush.msra.mxu0 %v29
  %65 = vmatpush.msra.mxu0 %v27
  %66 = vmatpush.msra.mxu0 %v25
  %67 = vmatpush.msra.mxu0 %v23
  %68 = vmatpush.msra.mxu0 %v21
  %69 = vmatpush.msra.mxu0 %v19
  %70 = vmatpush.msra.mxu0 %v17
  %71 = vmatmul.f32.gmra.mxu0 %v14
  %v72 = vpop.f32.mrf.mxu0
  %v73 = vadd.f32 %v51, %v72
  %74 = vmatmul.f32.gmra.mxu0 %v15
  %v75 = vpop.f32.mrf.mxu0
  %v76 = vadd.f32 %v51, %v75
  %77 = vmatmul.f32.gmra.mxu0 %v16
  %v78 = vpop.f32.mrf.mxu0
  %v79 = vadd.f32 %v51, %v78
  %80 = vdwg.mxu0
  %81 = vmatpush.msra.mxu0 %v48
  %82 = vmatpush.msra.mxu0 %v46
  %83 = vmatpush.msra.mxu0 %v44
  %84 = vmatpush.msra.mxu0 %v42
  %85 = vmatpush.msra.mxu0 %v40
  %86 = vmatpush.msra.mxu0 %v38
  %87 = vmatpush.msra.mxu0 %v36
  %88 = vmatpush.msra.mxu0 %v34
  %89 = vmatpush.msra.mxu0 %v32
  %90 = vmatpush.msra.mxu0 %v30
  %91 = vmatpush.msra.mxu0 %v28
  %92 = vmatpush.msra.mxu0 %v26
  %93 = vmatpush.msra.mxu0 %v24
  %94 = vmatpush.msra.mxu0 %v22
  %95 = vmatpush.msra.mxu0 %v20
  %96 = vmatpush.msra.mxu0 %v18
  %97 = vmatmul.f32.gmra.mxu0 %v14
  %v98 = vpop.f32.mrf.mxu0
  %v99 = vadd.f32 %v52, %v98
  %100 = vmatmul.f32.gmra.mxu0 %v15
  %v101 = vpop.f32.mrf.mxu0
  %v102 = vadd.f32 %v52, %v101
  %103 = vmatmul.f32.gmra.mxu0 %v16
  %v104 = vpop.f32.mrf.mxu0
  %v105 = vadd.f32 %v52, %v104
  %106 = vdwg.mxu0
  %v107 = vmax.f32 %v73, 0.0
  %v108 = vmax.f32 %v99, 0.0
  %v109 = vmax.f32 %v76, 0.0
  %v110 = vmax.f32 %v102, 0.0
  %v111 = vmax.f32 %v79, 0.0
  %v112 = vmax.f32 %v105, 0.0
  %113 = vst [vmem:[%s3] sm:$0xff] %v107
  %114 = vst [vmem:[%s3 + $0x8] sm:$0xff] %v108
  %115 = vst [vmem:[%s3 + $0x10] sm:$0xff] %v109
  %116 = vst [vmem:[%s3 + $0x18] sm:$0xff] %v110
  %117 = vst [vmem:[%s3 + $0x20] sm:$0xf] %v111
  %118 = vst [vmem:[%s3 + $0x28] sm:$0xf] %v112
  // Predicated region
  $region14: #{_lambda_.59} parent=0 // pred_check
    _
  $region15: #{_lambda_.59} parent=0 // pred_check_branch
    %120 = sbr.rel (0) target = $region17
  $region16: #{_lambda_.59} parent=0 // pred_region
    _
  $region17: #{_lambda_.59} parent=0 // pred_fallthru
    _
  // Predicated region
  $region18: #{_lambda_.59} parent=0 // pred_check
    _
  $region19: #{_lambda_.59} parent=0 // pred_check_branch
    %122 = sbr.rel (0) target = $region21
  $region20: #{_lambda_.59} parent=0 // pred_region
    _
  $region21: #{_lambda_.59} parent=0 // pred_fallthru
    _

// kernel: _lambda_.70
$region0: #{_lambda_.70}
  #allocation0 [shape = 'u32[]', space=smem, size = 0x4, offset = 0x4, fixed_abs, tag = 'smem constant byte address 0x4 - core index']
  #allocation1 [shape = 'u32[72,128]{1,0:T(1,128)}', space=vmem, size = 0x9000, scoped, tag = 'internal scratch']
  %s0 = inlined_call_operand.vmem [shape: f32[20,128], index: 0, kind: input, shape index: {}]
  %s1 = inlined_call_operand.vmem [shape: f32[1,128], index: 1, kind: input, shape index: {}]
  %s2 = inlined_call_operand.vmem [shape: f32[1,128], index: 2, kind: input, shape index: {}]
  %s3 = inlined_call_operand.vmem [shape: f32[20,128], index: 3, kind: output, shape index: {}]
  %s4 = sld [smem:[#allocation0]]
  $region22: #{_lambda_.70} parent=0
    _
  %s6 = ssub.s32 1, %s4
  %s7 = scalar_select 0, %s6, %s4
  // Predicated region
  $region2: #{_lambda_.70} parent=0 // pred_check
    _
  $region3: #{_lambda_.70} parent=0 // pred_check_branch
    %9 = sbr.rel (0) target = $region5
  $region4: #{_lambda_.70} parent=0 // pred_region
    _
  $region5: #{_lambda_.70} parent=0 // pred_fallthru
    _
  // Predicated region
  $region6: #{_lambda_.70} parent=0 // pred_check
    _
  $region7: #{_lambda_.70} parent=0 // pred_check_branch
    %11 = sbr.rel (0) target = $region9
  $region8: #{_lambda_.70} parent=0 // pred_region
    _
  $region9: #{_lambda_.70} parent=0 // pred_fallthru
    _
  // Predicated region
  $region10: #{_lambda_.70} parent=0 // pred_check
    _
  $region11: #{_lambda_.70} parent=0 // pred_check_branch
    %13 = sbr.rel (0) target = $region13
  $region12: #{_lambda_.70} parent=0 // pred_region
    _
  $region13: #{_lambda_.70} parent=0 // pred_fallthru
    _
  %v14 = vld [vmem:[%s0] sm:$0xff]
  %v15 = vld [vmem:[%s0 + $0x8] sm:$0xff]
  %v16 = vld [vmem:[%s0 + $0x10] sm:$0xf]
  %17 = vadd.xlane.f32.xlu0 %v14
  %v18 = vpop.xlane.xlu0 %17
  %19 = vadd.xlane.f32.xlu0 %v15
  %v20 = vpop.xlane.xlu0 %19
  %vm21 = vcmask 1043456
  %v22 = vsel %vm21, %v16, 0.0
  %23 = vadd.xlane.f32.xlu0 %v22
  %v24 = vpop.xlane.xlu0 %23
  %v25 = vrcp.pop 128.0
  %v26 = vmul.f32 128.0, %v25
  %v27 = vsub.f32 1.0, %v26
  %v28 = vmul.f32 %v25, %v27
  %v29 = vadd.f32 %v25, %v28
  %vm30 = vweird.f32 %v25
  %v31 = vsel %vm30, %v25, %v29
  %v32 = vmul.f32 %v18, %v31
  %v33 = vmul.f32 %v20, %v31
  %v34 = vmul.f32 %v24, %v31
  %v35 = vsub.f32 %v14, %v32
  %v36 = vsub.f32 %v15, %v33
  %v37 = vsub.f32 %v16, %v34
  %v38 = vmul.f32 %v35, %v35
  %v39 = vmul.f32 %v36, %v36
  %v40 = vmul.f32 %v37, %v37
  %41 = vadd.xlane.f32.xlu0 %v38
  %v42 = vpop.xlane.xlu0 %41
  %43 = vadd.xlane.f32.xlu0 %v39
  %v44 = vpop.xlane.xlu0 %43
  %v45 = vsel %vm21, %v40, 0.0
  %46 = vadd.xlane.f32.xlu0 %v45
  %v47 = vpop.xlane.xlu0 %46
  %v48 = vrcp.pop 127.0
  %v49 = vmul.f32 127.0, %v48
  %v50 = vsub.f32 1.0, %v49
  %v51 = vmul.f32 %v48, %v50
  %v52 = vadd.f32 %v48, %v51
  %vm53 = vweird.f32 %v48
  %v54 = vsel %vm53, %v48, %v52
  %v55 = vmul.f32 %v42, %v54
  %v56 = vmul.f32 %v44, %v54
  %v57 = vmul.f32 %v47, %v54
  %v58 = vrsqrt.pop %v55
  %v59 = vmul.f32 %v58, %v55
  %v60 = vmul.f32 %v59, %v58
  %v61 = vmul.f32 0.5, %v60
  %v62 = vsub.f32 1.5, %v61
  %v63 = vmul.f32 %v58, %v62
  %v64 = vmul.f32 %v55, %v63
  %vm65 = vcmp.eq.f32.partialorder %v55, inf
  %v66 = vsel %vm65, %v55, %v64
  %vm67 = vcmp.eq.f32.partialorder %v55, 0.0
  %v68 = vand.u32 %v55, 2147483648
  %v69 = vsel %vm67, %v68, %v66
  %v70 = vrsqrt.pop %v56
  %v71 = vmul.f32 %v70, %v56
  %v72 = vmul.f32 %v71, %v70
  %v73 = vmul.f32 0.5, %v72
  %v74 = vsub.f32 1.5, %v73
  %v75 = vmul.f32 %v70, %v74
  %v76 = vmul.f32 %v56, %v75
  %vm77 = vcmp.eq.f32.partialorder %v56, inf
  %v78 = vsel %vm77, %v56, %v76
  %vm79 = vcmp.eq.f32.partialorder %v56, 0.0
  %v80 = vand.u32 %v56, 2147483648
  %v81 = vsel %vm79, %v80, %v78
  %v82 = vrsqrt.pop %v57
  %v83 = vmul.f32 %v82, %v57
  %v84 = vmul.f32 %v83, %v82
  %v85 = vmul.f32 0.5, %v84
  %v86 = vsub.f32 1.5, %v85
  %v87 = vmul.f32 %v82, %v86
  %v88 = vmul.f32 %v57, %v87
  %vm89 = vcmp.eq.f32.partialorder %v57, inf
  %v90 = vsel %vm89, %v57, %v88
  %vm91 = vcmp.eq.f32.partialorder %v57, 0.0
  %v92 = vand.u32 %v57, 2147483648
  %v93 = vsel %vm91, %v92, %v90
  %v94 = vld [vmem:[%s1] sm:$0x1]
  %v96 = vperm.slane %v94, 0
  %v98 = vmul.f32 %v96, %v35
  %v99 = vmul.f32 %v96, %v36
  %v100 = vmul.f32 %v96, %v37
  %v101 = vadd.f32 %v69, 1e-06
  %v102 = vadd.f32 %v81, 1e-06
  %v103 = vadd.f32 %v93, 1e-06
  %v104 = vrcp.pop %v101
  %v105 = vmul.f32 %v101, %v104
  %v106 = vsub.f32 1.0, %v105
  %v107 = vmul.f32 %v104, %v106
  %v108 = vadd.f32 %v104, %v107
  %vm109 = vweird.f32 %v101
  %vm110 = vweird.f32 %v104
  %vm111 = vmor %vm109, %vm110
  %v112 = vsel %vm111, %v104, %v108
  %v113 = vand.u32 2147483647, %v101
  %vm114 = vcmp.eq.f32.partialorder %v113, 8.507059e+37
  %v115 = vand.u32 %v101, 2147483648
  %v116 = vor.u32 1.1754944e-38, %v115
  %v117 = vsel %vm114, %v116, %v112
  %v118 = vmul.f32 %v98, %v117
  %v119 = vrcp.pop %v102
  %v120 = vmul.f32 %v102, %v119
  %v121 = vsub.f32 1.0, %v120
  %v122 = vmul.f32 %v119, %v121
  %v123 = vadd.f32 %v119, %v122
  %vm124 = vweird.f32 %v102
  %vm125 = vweird.f32 %v119
  %vm126 = vmor %vm124, %vm125
  %v127 = vsel %vm126, %v119, %v123
  %v128 = vand.u32 2147483647, %v102
  %vm129 = vcmp.eq.f32.partialorder %v128, 8.507059e+37
  %v130 = vand.u32 %v102, 2147483648
  %v131 = vor.u32 1.1754944e-38, %v130
  %v132 = vsel %vm129, %v131, %v127
  %v133 = vmul.f32 %v99, %v132
  %v134 = vrcp.pop %v103
  %v135 = vmul.f32 %v103, %v134
  %v136 = vsub.f32 1.0, %v135
  %v137 = vmul.f32 %v134, %v136
  %v138 = vadd.f32 %v134, %v137
  %vm139 = vweird.f32 %v103
  %vm140 = vweird.f32 %v134
  %vm141 = vmor %vm139, %vm140
  %v142 = vsel %vm141, %v134, %v138
  %v143 = vand.u32 2147483647, %v103
  %vm144 = vcmp.eq.f32.partialorder %v143, 8.507059e+37
  %v145 = vand.u32 %v103, 2147483648
  %v146 = vor.u32 1.1754944e-38, %v145
  %v147 = vsel %vm144, %v146, %v142
  %v148 = vmul.f32 %v100, %v147
  %v149 = vld [vmem:[%s2] sm:$0x1]
  %v151 = vperm.slane %v149, 0
  %v153 = vadd.f32 %v118, %v151
  %v154 = vadd.f32 %v133, %v151
  %v155 = vadd.f32 %v148, %v151
  %156 = vst [vmem:[%s3] sm:$0xff] %v153
  %157 = vst [vmem:[%s3 + $0x8] sm:$0xff] %v154
  %158 = vst [vmem:[%s3 + $0x10] sm:$0xf] %v155
  // Predicated region
  $region14: #{_lambda_.70} parent=0 // pred_check
    _
  $region15: #{_lambda_.70} parent=0 // pred_check_branch
    %160 = sbr.rel (0) target = $region17
  $region16: #{_lambda_.70} parent=0 // pred_region
    _
  $region17: #{_lambda_.70} parent=0 // pred_fallthru
    _
  // Predicated region
  $region18: #{_lambda_.70} parent=0 // pred_check
    _
  $region19: #{_lambda_.70} parent=0 // pred_check_branch
    %162 = sbr.rel (0) target = $region21
  $region20: #{_lambda_.70} parent=0 // pred_region
    _
  $region21: #{_lambda_.70} parent=0 // pred_fallthru
    _

// kernel: _lambda_.72
$region0: #{_lambda_.72}
  #allocation0 [shape = 'u32[]', space=smem, size = 0x4, offset = 0x4, fixed_abs, tag = 'smem constant byte address 0x4 - core index']
  #allocation1 [shape = 'u32[72,128]{1,0:T(1,128)}', space=vmem, size = 0x9000, scoped, tag = 'internal scratch']
  %s0 = inlined_call_operand.vmem [shape: f32[16,128], index: 0, kind: input, shape index: {}]
  %s1 = inlined_call_operand.vmem [shape: f32[1,128], index: 1, kind: input, shape index: {}]
  %s2 = inlined_call_operand.vmem [shape: f32[1,128], index: 2, kind: input, shape index: {}]
  %s3 = inlined_call_operand.vmem [shape: f32[16,128], index: 3, kind: output, shape index: {}]
  %s4 = sld [smem:[#allocation0]]
  $region22: #{_lambda_.72} parent=0
    _
  %s6 = ssub.s32 1, %s4
  %s7 = scalar_select 0, %s6, %s4
  // Predicated region
  $region2: #{_lambda_.72} parent=0 // pred_check
    _
  $region3: #{_lambda_.72} parent=0 // pred_check_branch
    %9 = sbr.rel (0) target = $region5
  $region4: #{_lambda_.72} parent=0 // pred_region
    _
  $region5: #{_lambda_.72} parent=0 // pred_fallthru
    _
  // Predicated region
  $region6: #{_lambda_.72} parent=0 // pred_check
    _
  $region7: #{_lambda_.72} parent=0 // pred_check_branch
    %11 = sbr.rel (0) target = $region9
  $region8: #{_lambda_.72} parent=0 // pred_region
    _
  $region9: #{_lambda_.72} parent=0 // pred_fallthru
    _
  // Predicated region
  $region10: #{_lambda_.72} parent=0 // pred_check
    _
  $region11: #{_lambda_.72} parent=0 // pred_check_branch
    %13 = sbr.rel (0) target = $region13
  $region12: #{_lambda_.72} parent=0 // pred_region
    _
  $region13: #{_lambda_.72} parent=0 // pred_fallthru
    _
  %v14 = vld [vmem:[%s0] sm:$0xff]
  %v15 = vld [vmem:[%s0 + $0x8] sm:$0xff]
  %16 = vadd.xlane.f32.xlu0 %v14
  %v17 = vpop.xlane.xlu0 %16
  %18 = vadd.xlane.f32.xlu0 %v15
  %v19 = vpop.xlane.xlu0 %18
  %v20 = vrcp.pop 128.0
  %v21 = vmul.f32 128.0, %v20
  %v22 = vsub.f32 1.0, %v21
  %v23 = vmul.f32 %v20, %v22
  %v24 = vadd.f32 %v20, %v23
  %vm25 = vweird.f32 %v20
  %v26 = vsel %vm25, %v20, %v24
  %v27 = vmul.f32 %v17, %v26
  %v28 = vmul.f32 %v19, %v26
  %v29 = vsub.f32 %v14, %v27
  %v30 = vsub.f32 %v15, %v28
  %v31 = vmul.f32 %v29, %v29
  %v32 = vmul.f32 %v30, %v30
  %33 = vadd.xlane.f32.xlu0 %v31
  %v34 = vpop.xlane.xlu0 %33
  %35 = vadd.xlane.f32.xlu0 %v32
  %v36 = vpop.xlane.xlu0 %35
  %v37 = vmul.f32 %v34, %v26
  %v38 = vmul.f32 %v36, %v26
  %v39 = vadd.f32 %v37, 1e-05
  %v40 = vadd.f32 %v38, 1e-05
  %v41 = vrsqrt.pop %v39
  %v42 = vmul.f32 %v41, %v39
  %v43 = vmul.f32 %v42, %v41
  %v44 = vmul.f32 0.5, %v43
  %v45 = vsub.f32 1.5, %v44
  %v46 = vmul.f32 %v41, %v45
  %v47 = vmul.f32 %v39, %v46
  %vm48 = vcmp.eq.f32.partialorder %v39, inf
  %v49 = vsel %vm48, %v39, %v47
  %vm50 = vcmp.eq.f32.partialorder %v39, 0.0
  %v51 = vand.u32 %v39, 2147483648
  %v52 = vsel %vm50, %v51, %v49
  %v53 = vrsqrt.pop %v40
  %v54 = vmul.f32 %v53, %v40
  %v55 = vmul.f32 %v54, %v53
  %v56 = vmul.f32 0.5, %v55
  %v57 = vsub.f32 1.5, %v56
  %v58 = vmul.f32 %v53, %v57
  %v59 = vmul.f32 %v40, %v58
  %vm60 = vcmp.eq.f32.partialorder %v40, inf
  %v61 = vsel %vm60, %v40, %v59
  %vm62 = vcmp.eq.f32.partialorder %v40, 0.0
  %v63 = vand.u32 %v40, 2147483648
  %v64 = vsel %vm62, %v63, %v61
  %v65 = vrcp.pop %v52
  %v66 = vmul.f32 %v52, %v65
  %v67 = vsub.f32 1.0, %v66
  %v68 = vmul.f32 %v65, %v67
  %v69 = vadd.f32 %v65, %v68
  %vm70 = vweird.f32 %v52
  %vm71 = vweird.f32 %v65
  %vm72 = vmor %vm70, %vm71
  %v73 = vsel %vm72, %v65, %v69
  %v74 = vand.u32 2147483647, %v52
  %vm75 = vcmp.eq.f32.partialorder %v74, 8.507059e+37
  %v76 = vand.u32 %v52, 2147483648
  %v77 = vor.u32 1.1754944e-38, %v76
  %v78 = vsel %vm75, %v77, %v73
  %v79 = vmul.f32 %v29, %v78
  %v80 = vrcp.pop %v64
  %v81 = vmul.f32 %v64, %v80
  %v82 = vsub.f32 1.0, %v81
  %v83 = vmul.f32 %v80, %v82
  %v84 = vadd.f32 %v80, %v83
  %vm85 = vweird.f32 %v64
  %vm86 = vweird.f32 %v80
  %vm87 = vmor %vm85, %vm86
  %v88 = vsel %vm87, %v80, %v84
  %v89 = vand.u32 2147483647, %v64
  %vm90 = vcmp.eq.f32.partialorder %v89, 8.507059e+37
  %v91 = vand.u32 %v64, 2147483648
  %v92 = vor.u32 1.1754944e-38, %v91
  %v93 = vsel %vm90, %v92, %v88
  %v94 = vmul.f32 %v30, %v93
  %v95 = vld [vmem:[%s1] sm:$0x1]
  %v97 = vperm.slane %v95, 0
  %v99 = vmul.f32 %v79, %v97
  %v100 = vmul.f32 %v94, %v97
  %v101 = vld [vmem:[%s2] sm:$0x1]
  %v103 = vperm.slane %v101, 0
  %v105 = vadd.f32 %v99, %v103
  %v106 = vadd.f32 %v100, %v103
  %107 = vst [vmem:[%s3] sm:$0xff] %v105
  %108 = vst [vmem:[%s3 + $0x8] sm:$0xff] %v106
  // Predicated region
  $region14: #{_lambda_.72} parent=0 // pred_check
    _
  $region15: #{_lambda_.72} parent=0 // pred_check_branch
    %110 = sbr.rel (0) target = $region17
  $region16: #{_lambda_.72} parent=0 // pred_region
    _
  $region17: #{_lambda_.72} parent=0 // pred_fallthru
    _
  // Predicated region
  $region18: #{_lambda_.72} parent=0 // pred_check
    _
  $region19: #{_lambda_.72} parent=0 // pred_check_branch
    %112 = sbr.rel (0) target = $region21
  $region20: #{_lambda_.72} parent=0 // pred_region
    _
  $region21: #{_lambda_.72} parent=0 // pred_fallthru
    _

// kernel: _lambda_.75
$region0: #{_lambda_.75}
  #allocation0 [shape = 'u32[]', space=smem, size = 0x4, offset = 0x4, fixed_abs, tag = 'smem constant byte address 0x4 - core index']
  #allocation1 [shape = 'u32[72,128]{1,0:T(1,128)}', space=vmem, size = 0x9000, scoped, tag = 'internal scratch']
  %s0 = inlined_call_operand.vmem [shape: f32[16,128], index: 0, kind: input, shape index: {}]
  %s1 = inlined_call_operand.vmem [shape: f32[128,128], index: 1, kind: input, shape index: {}]
  %s2 = inlined_call_operand.vmem [shape: f32[1,128], index: 2, kind: input, shape index: {}]
  %s3 = inlined_call_operand.vmem [shape: f32[16,128], index: 3, kind: output, shape index: {}]
  %s4 = sld [smem:[#allocation0]]
  $region22: #{_lambda_.75} parent=0
    _
  %s6 = ssub.s32 1, %s4
  %s7 = scalar_select 0, %s6, %s4
  // Predicated region
  $region2: #{_lambda_.75} parent=0 // pred_check
    _
  $region3: #{_lambda_.75} parent=0 // pred_check_branch
    %9 = sbr.rel (0) target = $region5
  $region4: #{_lambda_.75} parent=0 // pred_region
    _
  $region5: #{_lambda_.75} parent=0 // pred_fallthru
    _
  // Predicated region
  $region6: #{_lambda_.75} parent=0 // pred_check
    _
  $region7: #{_lambda_.75} parent=0 // pred_check_branch
    %11 = sbr.rel (0) target = $region9
  $region8: #{_lambda_.75} parent=0 // pred_region
    _
  $region9: #{_lambda_.75} parent=0 // pred_fallthru
    _
  // Predicated region
  $region10: #{_lambda_.75} parent=0 // pred_check
    _
  $region11: #{_lambda_.75} parent=0 // pred_check_branch
    %13 = sbr.rel (0) target = $region13
  $region12: #{_lambda_.75} parent=0 // pred_region
    _
  $region13: #{_lambda_.75} parent=0 // pred_fallthru
    _
  %v14 = vld [vmem:[%s0] sm:$0xff]
  %v15 = vld [vmem:[%s0 + $0x8] sm:$0xff]
  %v16 = vld [vmem:[%s1] sm:$0xff]
  %v17 = vld [vmem:[%s1 + $0x8] sm:$0xff]
  %v18 = vld [vmem:[%s1 + $0x10] sm:$0xff]
  %v19 = vld [vmem:[%s1 + $0x18] sm:$0xff]
  %v20 = vld [vmem:[%s1 + $0x20] sm:$0xff]
  %v21 = vld [vmem:[%s1 + $0x28] sm:$0xff]
  %v22 = vld [vmem:[%s1 + $0x30] sm:$0xff]
  %v23 = vld [vmem:[%s1 + $0x38] sm:$0xff]
  %v24 = vld [vmem:[%s1 + $0x40] sm:$0xff]
  %v25 = vld [vmem:[%s1 + $0x48] sm:$0xff]
  %v26 = vld [vmem:[%s1 + $0x50] sm:$0xff]
  %v27 = vld [vmem:[%s1 + $0x58] sm:$0xff]
  %v28 = vld [vmem:[%s1 + $0x60] sm:$0xff]
  %v29 = vld [vmem:[%s1 + $0x68] sm:$0xff]
  %v30 = vld [vmem:[%s1 + $0x70] sm:$0xff]
  %v31 = vld [vmem:[%s1 + $0x78] sm:$0xff]
  %v32 = vld [vmem:[%s2] sm:$0x1]
  %v34 = vperm.slane %v32, 0
  %36 = vmatpush.msra.mxu0 %v31
  %37 = vmatpush.msra.mxu0 %v30
  %38 = vmatpush.msra.mxu0 %v29
  %39 = vmatpush.msra.mxu0 %v28
  %40 = vmatpush.msra.mxu0 %v27
  %41 = vmatpush.msra.mxu0 %v26
  %42 = vmatpush.msra.mxu0 %v25
  %43 = vmatpush.msra.mxu0 %v24
  %44 = vmatpush.msra.mxu0 %v23
  %45 = vmatpush.msra.mxu0 %v22
  %46 = vmatpush.msra.mxu0 %v21
  %47 = vmatpush.msra.mxu0 %v20
  %48 = vmatpush.msra.mxu0 %v19
  %49 = vmatpush.msra.mxu0 %v18
  %50 = vmatpush.msra.mxu0 %v17
  %51 = vmatpush.msra.mxu0 %v16
  %52 = vmatmul.f32.gmra.mxu0 %v14
  %v53 = vpop.f32.mrf.mxu0
  %v54 = vadd.f32 %v34, %v53
  %55 = vmatmul.f32.gmra.mxu0 %v15
  %v56 = vpop.f32.mrf.mxu0
  %v57 = vadd.f32 %v34, %v56
  %58 = vdwg.mxu0
  %59 = vst [vmem:[%s3] sm:$0xff] %v54
  %60 = vst [vmem:[%s3 + $0x8] sm:$0xff] %v57
  // Predicated region
  $region14: #{_lambda_.75} parent=0 // pred_check
    _
  $region15: #{_lambda_.75} parent=0 // pred_check_branch
    %62 = sbr.rel (0) target = $region17
  $region16: #{_lambda_.75} parent=0 // pred_region
    _
  $region17: #{_lambda_.75} parent=0 // pred_fallthru
    _
  // Predicated region
  $region18: #{_lambda_.75} parent=0 // pred_check
    _
  $region19: #{_lambda_.75} parent=0 // pred_check_branch
    %64 = sbr.rel (0) target = $region21
  $region20: #{_lambda_.75} parent=0 // pred_region
    _
  $region21: #{_lambda_.75} parent=0 // pred_fallthru
    _

// kernel: _lambda_.71
$region0: #{_lambda_.71}
  #allocation0 [shape = 'u32[]', space=smem, size = 0x4, offset = 0x4, fixed_abs, tag = 'smem constant byte address 0x4 - core index']
  #allocation1 [shape = 'u32[72,128]{1,0:T(1,128)}', space=vmem, size = 0x9000, scoped, tag = 'internal scratch']
  #allocation2 [shape = 's32[1]{0}', space=sflag, size = 0x4, scoped, tag = 'scoped memory for _lambda_.71']
  #allocation3 [shape = 'u8[512]{0}', space=smem, size = 0x200, scoped, tag = 'prefetched SMEM operand 0']
  %s0 = inlined_call_operand.vmem [shape: s32[16], index: 0, kind: input, shape index: {}]
  %s1 = inlined_call_operand.vmem [shape: f32[64,128], index: 1, kind: input, shape index: {}]
  %s2 = inlined_call_operand.vmem [shape: f32[16,128], index: 2, kind: output, shape index: {}]
  %s3 = sld [smem:[#allocation0]]
  $region14: #{_lambda_.71} parent=0
    _
  %s5 = ssub.s32 1, %s3
  %s6 = scalar_select 0, %s5, %s3
  %s8 = sshll.u32 %s0, 4
  %s9 = int_to_ptr.vmem [resolvable:$true] %s8
  %11 = dma.vmem_to_smem %s9, 16, [#allocation3], [#allocation2]
  %13 = dma.done [#allocation2], 16
  %14 = sfence
  // Predicated region
  $region2: #{_lambda_.71} parent=0 // pred_check
    _
  $region3: #{_lambda_.71} parent=0 // pred_check_branch
    %16 = sbr.rel (0) target = $region5
  $region4: #{_lambda_.71} parent=0 // pred_region
    _
  $region5: #{_lambda_.71} parent=0 // pred_fallthru
    _
  %s17 = smul.u32 0, 16
  %s18 = sld [smem:[#allocation3 + %s17]]
  %s19 = scalar_lea.vmem %s1, %s18
  %v20 = vld [vmem:[%s19] sm:$0x1]
  %v21 = vmul.f32 %v20, 11.313708
  %22 = vst [vmem:[%s2] sm:$0x1] %v21
  %s23 = sadd.s32 %s17, 1
  %s24 = sld [smem:[#allocation3 + %s23]]
  %s25 = scalar_lea.vmem %s1, %s24
  %v26 = vld [vmem:[%s25] sm:$0x1]
  %v27 = vmul.f32 %v26, 11.313708
  %28 = vst [vmem:[%s2 + $0x1] sm:$0x1] %v27
  %s29 = sadd.s32 %s17, 2
  %s30 = sld [smem:[#allocation3 + %s29]]
  %s31 = scalar_lea.vmem %s1, %s30
  %v32 = vld [vmem:[%s31] sm:$0x1]
  %v33 = vmul.f32 %v32, 11.313708
  %34 = vst [vmem:[%s2 + $0x2] sm:$0x1] %v33
  %s35 = sadd.s32 %s17, 3
  %s36 = sld [smem:[#allocation3 + %s35]]
  %s37 = scalar_lea.vmem %s1, %s36
  %v38 = vld [vmem:[%s37] sm:$0x1]
  %v39 = vmul.f32 %v38, 11.313708
  %40 = vst [vmem:[%s2 + $0x3] sm:$0x1] %v39
  %s41 = sadd.s32 %s17, 4
  %s42 = sld [smem:[#allocation3 + %s41]]
  %s43 = scalar_lea.vmem %s1, %s42
  %v44 = vld [vmem:[%s43] sm:$0x1]
  %v45 = vmul.f32 %v44, 11.313708
  %46 = vst [vmem:[%s2 + $0x4] sm:$0x1] %v45
  %s47 = sadd.s32 %s17, 5
  %s48 = sld [smem:[#allocation3 + %s47]]
  %s49 = scalar_lea.vmem %s1, %s48
  %v50 = vld [vmem:[%s49] sm:$0x1]
  %v51 = vmul.f32 %v50, 11.313708
  %52 = vst [vmem:[%s2 + $0x5] sm:$0x1] %v51
  %s53 = sadd.s32 %s17, 6
  %s54 = sld [smem:[#allocation3 + %s53]]
  %s55 = scalar_lea.vmem %s1, %s54
  %v56 = vld [vmem:[%s55] sm:$0x1]
  %v57 = vmul.f32 %v56, 11.313708
  %58 = vst [vmem:[%s2 + $0x6] sm:$0x1] %v57
  %s59 = sadd.s32 %s17, 7
  %s60 = sld [smem:[#allocation3 + %s59]]
  %s61 = scalar_lea.vmem %s1, %s60
  %v62 = vld [vmem:[%s61] sm:$0x1]
  %v63 = vmul.f32 %v62, 11.313708
  %64 = vst [vmem:[%s2 + $0x7] sm:$0x1] %v63
  %s65 = sadd.s32 %s17, 8
  %s66 = sld [smem:[#allocation3 + %s65]]
  %s67 = scalar_lea.vmem %s1, %s66
  %v68 = vld [vmem:[%s67] sm:$0x1]
  %v69 = vmul.f32 %v68, 11.313708
  %70 = vst [vmem:[%s2 + $0x8] sm:$0x1] %v69
  %s71 = sadd.s32 %s17, 9
  %s72 = sld [smem:[#allocation3 + %s71]]
  %s73 = scalar_lea.vmem %s1, %s72
  %v74 = vld [vmem:[%s73] sm:$0x1]
  %v75 = vmul.f32 %v74, 11.313708
  %76 = vst [vmem:[%s2 + $0x9] sm:$0x1] %v75
  %s77 = sadd.s32 %s17, 10
  %s78 = sld [smem:[#allocation3 + %s77]]
  %s79 = scalar_lea.vmem %s1, %s78
  %v80 = vld [vmem:[%s79] sm:$0x1]
  %v81 = vmul.f32 %v80, 11.313708
  %82 = vst [vmem:[%s2 + $0xa] sm:$0x1] %v81
  %s83 = sadd.s32 %s17, 11
  %s84 = sld [smem:[#allocation3 + %s83]]
  %s85 = scalar_lea.vmem %s1, %s84
  %v86 = vld [vmem:[%s85] sm:$0x1]
  %v87 = vmul.f32 %v86, 11.313708
  %88 = vst [vmem:[%s2 + $0xb] sm:$0x1] %v87
  %s89 = sadd.s32 %s17, 12
  %s90 = sld [smem:[#allocation3 + %s89]]
  %s91 = scalar_lea.vmem %s1, %s90
  %v92 = vld [vmem:[%s91] sm:$0x1]
  %v93 = vmul.f32 %v92, 11.313708
  %94 = vst [vmem:[%s2 + $0xc] sm:$0x1] %v93
  %s95 = sadd.s32 %s17, 13
  %s96 = sld [smem:[#allocation3 + %s95]]
  %s97 = scalar_lea.vmem %s1, %s96
  %v98 = vld [vmem:[%s97] sm:$0x1]
  %v99 = vmul.f32 %v98, 11.313708
  %100 = vst [vmem:[%s2 + $0xd] sm:$0x1] %v99
  %s101 = sadd.s32 %s17, 14
  %s102 = sld [smem:[#allocation3 + %s101]]
  %s103 = scalar_lea.vmem %s1, %s102
  %v104 = vld [vmem:[%s103] sm:$0x1]
  %v105 = vmul.f32 %v104, 11.313708
  %106 = vst [vmem:[%s2 + $0xe] sm:$0x1] %v105
  %s107 = sadd.s32 %s17, 15
  %s108 = sld [smem:[#allocation3 + %s107]]
  %s109 = scalar_lea.vmem %s1, %s108
  %v110 = vld [vmem:[%s109] sm:$0x1]
  %v111 = vmul.f32 %v110, 11.313708
  %112 = vst [vmem:[%s2 + $0xf] sm:$0x1] %v111
  // Predicated region
  $region6: #{_lambda_.71} parent=0 // pred_check
    _
  $region7: #{_lambda_.71} parent=0 // pred_check_branch
    %114 = sbr.rel (0) target = $region9
  $region8: #{_lambda_.71} parent=0 // pred_region
    _
  $region9: #{_lambda_.71} parent=0 // pred_fallthru
    _
  // Predicated region
  $region10: #{_lambda_.71} parent=0 // pred_check
    _
  $region11: #{_lambda_.71} parent=0 // pred_check_branch
    %116 = sbr.rel (0) target = $region13
  $region12: #{_lambda_.71} parent=0 // pred_region
    _
  $region13: #{_lambda_.71} parent=0 // pred_fallthru
    _

// kernel: _lambda_.76
$region0: #{_lambda_.76}
  #allocation0 [shape = 'u32[]', space=smem, size = 0x4, offset = 0x4, fixed_abs, tag = 'smem constant byte address 0x4 - core index']
  #allocation1 [shape = 'u32[72,128]{1,0:T(1,128)}', space=vmem, size = 0x9000, scoped, tag = 'internal scratch']
  %s0 = inlined_call_operand.vmem [shape: f32[8,8,32], index: 0, kind: input, shape index: {}]
  %s1 = inlined_call_operand.vmem [shape: f32[8,8,32], index: 1, kind: input, shape index: {}]
  %s2 = inlined_call_operand.vmem [shape: f32[8,8,32], index: 2, kind: input, shape index: {}]
  %s3 = inlined_call_operand.vmem [shape: s32[8,8,8], index: 3, kind: input, shape index: {}]
  %s4 = inlined_call_operand.vmem [shape: f32[8,8,32], index: 4, kind: output, shape index: {}]
  %s5 = sld [smem:[#allocation0]]
  $region49: #{_lambda_.76} parent=0
    _
  %s7 = ssub.s32 1, %s5
  %s8 = scalar_select 0, %s7, %s5
  loop: start=0, step=1, limit=10
  $region2: #{_lambda_.76} parent=0 // loop_pre_header
    _
  $region3: #{_lambda_.76} parent=0 // loop_header
    %s10 = sphi 0, %s14
    %p11 = scmp.ge.s32.totalorder %s10, 10
    %s20 = sphi 0, %s22
    %s23 = sphi 0, %s20
    %s24 = sphi 0, %s23
    %s40 = sphi 0, %s24
    %s46 = sphi 0, %s48
    %s49 = sphi 0, %s46
    %s50 = sphi 0, %s49
    %s66 = sphi 0, %s50
    %s72 = sphi 0, %s74
    %s75 = sphi 0, %s72
    %s76 = sphi 0, %s75
    %s92 = sphi 0, %s76
    %s98 = sphi 0, %s100
    %s101 = sphi 0, %s98
    %s102 = sphi 0, %s101
    %s118 = sphi 0, %s102
    %s124 = sphi 0, %s126
    %s127 = sphi 0, %s124
    %s128 = sphi 0, %s127
    %s144 = sphi 0, %s128
  $region4: #{_lambda_.76} parent=0 // loop_header_branch
    %13 = sbr.rel (%p11) target = $region8
  $region5: #{_lambda_.76} parent=0 // loop_body
    %s15 = ssub.s32 %s10, 1
    %s16 = ssub.s32 %s10, 2
    %s17 = sadd.s32 %s10, 1
    %s18 = ssub.s32 %s10, %s17
    %p19 = scmp.eq.s32.totalorder %s18, 0
    %s21 = sadd.s32 %s20, 1
    %s22 = scalar_select %p19, %s20, %s21
    %p25 = pneg %p19
    %p26 = scmp.eq.s32.totalorder %s10, 7
    %p27 = por %p25, %p26
    %p28 = scmp.ne.s32.totalorder %s20, %s23
    %p29 = scmp.eq.s32.totalorder %s10, 0
    %p30 = por %p28, %p29
    %p31 = scmp.ne.s32.totalorder %s20, %s23
    %p32 = scmp.eq.s32.totalorder %s15, 7
    %p33 = por %p31, %p32
    %p34 = scmp.ne.s32.totalorder %s23, %s24
    %p35 = scmp.eq.s32.totalorder %s15, 0
    %p36 = por %p34, %p35
    %p37 = scmp.ne.s32.totalorder %s23, %s24
    %p38 = scmp.eq.s32.totalorder %s16, 7
    %p39 = por %p37, %p38
    %p41 = scmp.ne.s32.totalorder %s24, %s40
    %p42 = scmp.eq.s32.totalorder %s16, 0
    %p43 = por %p41, %p42
    %s44 = ssub.s32 %s10, %s17
    %p45 = scmp.eq.s32.totalorder %s44, 0
    %s47 = sadd.s32 %s46, 1
    %s48 = scalar_select %p45, %s46, %s47
    %p51 = pneg %p45
    %p52 = scmp.eq.s32.totalorder %s10, 7
    %p53 = por %p51, %p52
    %p54 = scmp.ne.s32.totalorder %s46, %s49
    %p55 = scmp.eq.s32.totalorder %s10, 0
    %p56 = por %p54, %p55
    %p57 = scmp.ne.s32.totalorder %s46, %s49
    %p58 = scmp.eq.s32.totalorder %s15, 7
    %p59 = por %p57, %p58
    %p60 = scmp.ne.s32.totalorder %s49, %s50
    %p61 = scmp.eq.s32.totalorder %s15, 0
    %p62 = por %p60, %p61
    %p63 = scmp.ne.s32.totalorder %s49, %s50
    %p64 = scmp.eq.s32.totalorder %s16, 7
    %p65 = por %p63, %p64
    %p67 = scmp.ne.s32.totalorder %s50, %s66
    %p68 = scmp.eq.s32.totalorder %s16, 0
    %p69 = por %p67, %p68
    %s70 = ssub.s32 %s10, %s17
    %p71 = scmp.eq.s32.totalorder %s70, 0
    %s73 = sadd.s32 %s72, 1
    %s74 = scalar_select %p71, %s72, %s73
    %p77 = pneg %p71
    %p78 = scmp.eq.s32.totalorder %s10, 7
    %p79 = por %p77, %p78
    %p80 = scmp.ne.s32.totalorder %s72, %s75
    %p81 = scmp.eq.s32.totalorder %s10, 0
    %p82 = por %p80, %p81
    %p83 = scmp.ne.s32.totalorder %s72, %s75
    %p84 = scmp.eq.s32.totalorder %s15, 7
    %p85 = por %p83, %p84
    %p86 = scmp.ne.s32.totalorder %s75, %s76
    %p87 = scmp.eq.s32.totalorder %s15, 0
    %p88 = por %p86, %p87
    %p89 = scmp.ne.s32.totalorder %s75, %s76
    %p90 = scmp.eq.s32.totalorder %s16, 7
    %p91 = por %p89, %p90
    %p93 = scmp.ne.s32.totalorder %s76, %s92
    %p94 = scmp.eq.s32.totalorder %s16, 0
    %p95 = por %p93, %p94
    %s96 = ssub.s32 %s10, %s17
    %p97 = scmp.eq.s32.totalorder %s96, 0
    %s99 = sadd.s32 %s98, 1
    %s100 = scalar_select %p97, %s98, %s99
    %p103 = pneg %p97
    %p104 = scmp.eq.s32.totalorder %s10, 7
    %p105 = por %p103, %p104
    %p106 = scmp.ne.s32.totalorder %s98, %s101
    %p107 = scmp.eq.s32.totalorder %s10, 0
    %p108 = por %p106, %p107
    %p109 = scmp.ne.s32.totalorder %s98, %s101
    %p110 = scmp.eq.s32.totalorder %s15, 7
    %p111 = por %p109, %p110
    %p112 = scmp.ne.s32.totalorder %s101, %s102
    %p113 = scmp.eq.s32.totalorder %s15, 0
    %p114 = por %p112, %p113
    %p115 = scmp.ne.s32.totalorder %s101, %s102
    %p116 = scmp.eq.s32.totalorder %s16, 7
    %p117 = por %p115, %p116
    %p119 = scmp.ne.s32.totalorder %s102, %s118
    %p120 = scmp.eq.s32.totalorder %s16, 0
    %p121 = por %p119, %p120
    %s122 = ssub.s32 %s10, %s17
    %p123 = scmp.eq.s32.totalorder %s122, 0
    %s125 = sadd.s32 %s124, 1
    %s126 = scalar_select %p123, %s124, %s125
    %p129 = pneg %p123
    %p130 = scmp.eq.s32.totalorder %s10, 7
    %p131 = por %p129, %p130
    %p132 = scmp.ne.s32.totalorder %s124, %s127
    %p133 = scmp.eq.s32.totalorder %s10, 0
    %p134 = por %p132, %p133
    %p135 = scmp.ne.s32.totalorder %s124, %s127
    %p136 = scmp.eq.s32.totalorder %s15, 7
    %p137 = por %p135, %p136
    %p138 = scmp.ne.s32.totalorder %s127, %s128
    %p139 = scmp.eq.s32.totalorder %s15, 0
    %p140 = por %p138, %p139
    %p141 = scmp.ne.s32.totalorder %s127, %s128
    %p142 = scmp.eq.s32.totalorder %s16, 7
    %p143 = por %p141, %p142
    %p145 = scmp.ne.s32.totalorder %s128, %s144
    %p146 = scmp.eq.s32.totalorder %s16, 0
    %p147 = por %p145, %p146
    %p148 = scmp.le.s32.totalorder 1, %s10
    %p149 = scmp.lt.s32.totalorder %s10, 9
    %p150 = pnand %p148, %p149
    %p151 = pneg %p150
    // Predicated region
    $region9: #{_lambda_.76} parent=5 // pred_check
      _
    $region10: #{_lambda_.76} parent=5 // pred_check_branch
      %153 = sbr.rel (%p150) target = $region12
    $region11: #{_lambda_.76} parent=5 // pred_region
      %s154 = ssub.s32 %s10, 1
    $region12: #{_lambda_.76} parent=5 // pred_fallthru
      _
    %p155 = scmp.lt.s32.totalorder %s10, 8
    // Predicated region
    $region13: #{_lambda_.76} parent=5 // pred_check
      %p156 = pneg %p155
    $region14: #{_lambda_.76} parent=5 // pred_check_branch
      %158 = sbr.rel (%p156) target = $region16
    $region15: #{_lambda_.76} parent=5 // pred_region
      // Predicated region
      $region17: #{_lambda_.76} parent=15 // pred_check
        %p159 = pneg %p30
      $region18: #{_lambda_.76} parent=15 // pred_check_branch
        %161 = sbr.rel (%p159) target = $region20
      $region19: #{_lambda_.76} parent=15 // pred_region
        %p162 = scmp.lt.s32.totalorder %s10, 7
        %s163 = scalar_select %p162, %s10, 7
        %s164 = smul.addr %s163, 8
        %s165 = scalar_lea.vmem %s0, %s164
      $region20: #{_lambda_.76} parent=15 // pred_fallthru
        _
      // Predicated region
      $region21: #{_lambda_.76} parent=15 // pred_check
        %p166 = pneg %p56
      $region22: #{_lambda_.76} parent=15 // pred_check_branch
        %168 = sbr.rel (%p166) target = $region24
      $region23: #{_lambda_.76} parent=15 // pred_region
        %p169 = scmp.lt.s32.totalorder %s10, 7
        %s170 = scalar_select %p169, %s10, 7
        %s171 = smul.addr %s170, 8
        %s172 = scalar_lea.vmem %s1, %s171
      $region24: #{_lambda_.76} parent=15 // pred_fallthru
        _
      // Predicated region
      $region25: #{_lambda_.76} parent=15 // pred_check
        %p173 = pneg %p82
      $region26: #{_lambda_.76} parent=15 // pred_check_branch
        %175 = sbr.rel (%p173) target = $region28
      $region27: #{_lambda_.76} parent=15 // pred_region
        %p176 = scmp.lt.s32.totalorder %s10, 7
        %s177 = scalar_select %p176, %s10, 7
        %s178 = smul.addr %s177, 8
        %s179 = scalar_lea.vmem %s2, %s178
      $region28: #{_lambda_.76} parent=15 // pred_fallthru
        _
      // Predicated region
      $region29: #{_lambda_.76} parent=15 // pred_check
        %p180 = pneg %p108
      $region30: #{_lambda_.76} parent=15 // pred_check_branch
        %182 = sbr.rel (%p180) target = $region32
      $region31: #{_lambda_.76} parent=15 // pred_region
        %p183 = scmp.lt.s32.totalorder %s10, 7
        %s184 = scalar_select %p183, %s10, 7
        %s185 = smul.addr %s184, 8
        %s186 = scalar_lea.vmem %s3, %s185
      $region32: #{_lambda_.76} parent=15 // pred_fallthru
        _
    $region16: #{_lambda_.76} parent=5 // pred_fallthru
      _
    %p187 = scmp.le.s32.totalorder 1, %s10
    %p188 = scmp.lt.s32.totalorder %s10, 9
    %p189 = pnand %p187, %p188
    %p190 = pneg %p189
    // Predicated region
    $region33: #{_lambda_.76} parent=5 // pred_check
      _
    $region34: #{_lambda_.76} parent=5 // pred_check_branch
      %192 = sbr.rel (%p189) target = $region36
    $region35: #{_lambda_.76} parent=5 // pred_region
      %s193 = ssub.s32 %s10, 1
      %p194 = scmp.lt.s32.totalorder %s15, 7
      %s195 = scalar_select %p194, %s15, 7
      %s196 = smul.addr %s195, 8
      %s197 = scalar_lea.vmem %s0, %s196
      %p198 = pneg %p36
      %p199 = pneg %p33
      %p200 = scmp.lt.s32.totalorder %s15, 7
      %s201 = scalar_select %p200, %s15, 7
      %s202 = smul.addr %s201, 8
      %s203 = scalar_lea.vmem %s1, %s202
      %p204 = pneg %p62
      %p205 = pneg %p59
      %p206 = scmp.lt.s32.totalorder %s15, 7
      %s207 = scalar_select %p206, %s15, 7
      %s208 = smul.addr %s207, 8
      %s209 = scalar_lea.vmem %s2, %s208
      %p210 = pneg %p88
      %p211 = pneg %p85
      %p212 = scmp.lt.s32.totalorder %s15, 7
      %s213 = scalar_select %p212, %s15, 7
      %s214 = smul.addr %s213, 8
      %s215 = scalar_lea.vmem %s3, %s214
      %p216 = pneg %p114
      %p217 = pneg %p111
      %p218 = pneg %p140
      %p219 = pneg %p137
      %p220 = scmp.lt.s32.totalorder %s15, 7
      %s221 = scalar_select %p220, %s15, 7
      %s222 = smul.addr %s221, 8
      %s223 = scalar_lea.vmem %s4, %s222
      %p224 = scmp.lt.s32.totalorder %s15, 7
      %s225 = scalar_select %p224, %s15, 7
      %s226 = smul.addr %s225, 8
      %s227 = scalar_lea.vmem %s0, %s226
      %p228 = scmp.lt.s32.totalorder %s15, 7
      %s229 = scalar_select %p228, %s15, 7
      %s230 = smul.addr %s229, 8
      %s231 = scalar_lea.vmem %s1, %s230
      %p232 = scmp.lt.s32.totalorder %s15, 7
      %s233 = scalar_select %p232, %s15, 7
      %s234 = smul.addr %s233, 8
      %s235 = scalar_lea.vmem %s2, %s234
      %p236 = scmp.lt.s32.totalorder %s15, 7
      %s237 = scalar_select %p236, %s15, 7
      %s238 = smul.addr %s237, 8
      %s239 = scalar_lea.vmem %s3, %s238
      %p240 = scmp.lt.s32.totalorder %s15, 7
      %s241 = scalar_select %p240, %s15, 7
      %s242 = smul.addr %s241, 8
      %s243 = scalar_lea.vmem %s4, %s242
      %v244 = vld [vmem:[%s227] sm:$0xff]
      %v245 = vld [vmem:[%s231] sm:$0xff]
      %vm246 = vcmask 261120
      %v248 = vsel %vm246, %v244, 0
      %v251 = vsel %vm246, %v245, 0
      %253 = vmatpush.xpose.msra.mxu0 0.0
      %254 = vmatpush.xpose.msra.mxu0 0.0
      %255 = vmatpush.xpose.msra.mxu0 0.0
      %256 = vmatpush.xpose.msra.mxu0 0.0
      %257 = vmatpush.xpose.msra.mxu0 0.0
      %258 = vmatpush.xpose.msra.mxu0 0.0
      %259 = vmatpush.xpose.msra.mxu0 0.0
      %260 = vmatpush.xpose.msra.mxu0 0.0
      %261 = vmatpush.xpose.msra.mxu0 0.0
      %262 = vmatpush.xpose.msra.mxu0 0.0
      %263 = vmatpush.xpose.msra.mxu0 0.0
      %264 = vmatpush.xpose.msra.mxu0 0.0
      %265 = vmatpush.xpose.msra.mxu0 0.0
      %266 = vmatpush.xpose.msra.mxu0 0.0
      %267 = vmatpush.xpose.msra.mxu0 0.0
      %268 = vmatpush.xpose.msra.mxu0 %v251
      %269 = vmatmul.f32.gmra.mxu0 %v248
      %v270 = vpop.f32.mrf.mxu0
      %v271 = vadd.f32 0.0, %v270
      %272 = vdwg.mxu0
      %v273 = vmul.f32 %v271, 0.17677669
      %v274 = vld [vmem:[%s239] sm:$0xff]
      %vm275 = vcmp.eq.s32.totalorder %v274, 0
      %v276 = vsel %vm275, -1e+10, %v273
      %vm277 = vcmask 64512
      %v278 = vsel %vm277, %v276, -inf
      %279 = vmax.xlane.f32.xlu0 %v278
      %v280 = vpop.xlane.xlu0 %279
      %v281 = vsub.f32 %v276, %v280
      %v282 = vmul.f32 %v281, 1.442695
      %v283 = vpow.pop %v282
      %v284 = vsel %vm277, %v283, 0.0
      %285 = vadd.xlane.f32.xlu0 %v284
      %v286 = vpop.xlane.xlu0 %285
      %v287 = vrcp.pop %v286
      %v288 = vmul.f32 %v286, %v287
      %v289 = vsub.f32 1.0, %v288
      %v290 = vmul.f32 %v287, %v289
      %v291 = vadd.f32 %v287, %v290
      %vm292 = vweird.f32 %v286
      %vm293 = vweird.f32 %v287
      %vm294 = vmor %vm292, %vm293
      %v295 = vsel %vm294, %v287, %v291
      %v296 = vand.u32 2147483647, %v286
      %vm297 = vcmp.eq.f32.partialorder %v296, 8.507059e+37
      %v298 = vand.u32 %v286, 2147483648
      %v299 = vor.u32 1.1754944e-38, %v298
      %v300 = vsel %vm297, %v299, %v295
      %v301 = vmul.f32 %v283, %v300
      %v302 = vld [vmem:[%s235] sm:$0xff]
      %v304 = vsel %vm277, %v301, 0
      %306 = vmatpush.msra.mxu0 0.0
      %307 = vmatpush.msra.mxu0 0.0
      %308 = vmatpush.msra.mxu0 0.0
      %309 = vmatpush.msra.mxu0 0.0
      %310 = vmatpush.msra.mxu0 0.0
      %311 = vmatpush.msra.mxu0 0.0
      %312 = vmatpush.msra.mxu0 0.0
      %313 = vmatpush.msra.mxu0 0.0
      %314 = vmatpush.msra.mxu0 0.0
      %315 = vmatpush.msra.mxu0 0.0
      %316 = vmatpush.msra.mxu0 0.0
      %317 = vmatpush.msra.mxu0 0.0
      %318 = vmatpush.msra.mxu0 0.0
      %319 = vmatpush.msra.mxu0 0.0
      %320 = vmatpush.msra.mxu0 0.0
      %321 = vmatpush.msra.mxu0 %v302
      %322 = vmatmul.f32.gmra.mxu0 %v304
      %v323 = vpop.f32.mrf.mxu0
      %v324 = vadd.f32 0.0, %v323
      %325 = vdwg.mxu0
      %326 = vst.msk [vmem:[%s243] sm:$0xff] %vm246, %v324
      %p327 = scmp.lt.s32.totalorder %s15, 7
      %s328 = scalar_select %p327, %s15, 7
      %s329 = smul.addr %s328, 8
      %s330 = scalar_lea.vmem %s4, %s329
      // Predicated region
      $region37: #{_lambda_.76} parent=35 // pred_check
        %p331 = pneg %p137
      $region38: #{_lambda_.76} parent=35 // pred_check_branch
        %333 = sbr.rel (%p331) target = $region40
      $region39: #{_lambda_.76} parent=35 // pred_region
        _
      $region40: #{_lambda_.76} parent=35 // pred_fallthru
        _
    $region36: #{_lambda_.76} parent=5 // pred_fallthru
      _
    %p334 = scmp.le.s32.totalorder 2, %s10
    // Predicated region
    $region41: #{_lambda_.76} parent=5 // pred_check
      %p335 = pneg %p334
    $region42: #{_lambda_.76} parent=5 // pred_check_branch
      %337 = sbr.rel (%p335) target = $region44
    $region43: #{_lambda_.76} parent=5 // pred_region
      %s338 = ssub.s32 %s10, 2
      // Predicated region
      $region45: #{_lambda_.76} parent=43 // pred_check
        %p339 = pneg %p143
      $region46: #{_lambda_.76} parent=43 // pred_check_branch
        %341 = sbr.rel (%p339) target = $region48
      $region47: #{_lambda_.76} parent=43 // pred_region
        %p342 = scmp.lt.s32.totalorder %s16, 7
        %s343 = scalar_select %p342, %s16, 7
        %s344 = smul.addr %s343, 8
        %s345 = scalar_lea.vmem %s4, %s344
      $region48: #{_lambda_.76} parent=43 // pred_fallthru
        _
    $region44: #{_lambda_.76} parent=5 // pred_fallthru
      _
  $region6: #{_lambda_.76} parent=0 // loop_footer
    %s14 = sadd.s32 1, %s10
  $region7: #{_lambda_.76} parent=0 // loop_footer_branch
    %9 = sbr.rel target = $region3
  $region8: #{_lambda_.76} parent=0 // loop_exit
    _

// kernel: _lambda_.86
$region0: #{_lambda_.86}
  #allocation0 [shape = 'u32[]', space=smem, size = 0x4, offset = 0x4, fixed_abs, tag = 'smem constant byte address 0x4 - core index']
  #allocation1 [shape = 'u32[72,128]{1,0:T(1,128)}', space=vmem, size = 0x9000, scoped, tag = 'internal scratch']
  %s0 = inlined_call_operand.vmem [shape: f32[16,256], index: 0, kind: input, shape index: {}]
  %s1 = inlined_call_operand.vmem [shape: f32[256,128], index: 1, kind: input, shape index: {}]
  %s2 = inlined_call_operand.vmem [shape: f32[1,128], index: 2, kind: input, shape index: {}]
  %s3 = inlined_call_operand.vmem [shape: f32[16,128], index: 3, kind: output, shape index: {}]
  %s4 = sld [smem:[#allocation0]]
  $region22: #{_lambda_.86} parent=0
    _
  %s6 = ssub.s32 1, %s4
  %s7 = scalar_select 0, %s6, %s4
  // Predicated region
  $region2: #{_lambda_.86} parent=0 // pred_check
    _
  $region3: #{_lambda_.86} parent=0 // pred_check_branch
    %9 = sbr.rel (0) target = $region5
  $region4: #{_lambda_.86} parent=0 // pred_region
    _
  $region5: #{_lambda_.86} parent=0 // pred_fallthru
    _
  // Predicated region
  $region6: #{_lambda_.86} parent=0 // pred_check
    _
  $region7: #{_lambda_.86} parent=0 // pred_check_branch
    %11 = sbr.rel (0) target = $region9
  $region8: #{_lambda_.86} parent=0 // pred_region
    _
  $region9: #{_lambda_.86} parent=0 // pred_fallthru
    _
  // Predicated region
  $region10: #{_lambda_.86} parent=0 // pred_check
    _
  $region11: #{_lambda_.86} parent=0 // pred_check_branch
    %13 = sbr.rel (0) target = $region13
  $region12: #{_lambda_.86} parent=0 // pred_region
    _
  $region13: #{_lambda_.86} parent=0 // pred_fallthru
    _
  %v14 = vld [vmem:[%s0] sm:$0xff]
  %v15 = vld [vmem:[%s0 + $0x8] sm:$0xff]
  %v16 = vld [vmem:[%s0 + $0x10] sm:$0xff]
  %v17 = vld [vmem:[%s0 + $0x18] sm:$0xff]
  %v18 = vld [vmem:[%s1] sm:$0xff]
  %v19 = vld [vmem:[%s1 + $0x8] sm:$0xff]
  %v20 = vld [vmem:[%s1 + $0x10] sm:$0xff]
  %v21 = vld [vmem:[%s1 + $0x18] sm:$0xff]
  %v22 = vld [vmem:[%s1 + $0x20] sm:$0xff]
  %v23 = vld [vmem:[%s1 + $0x28] sm:$0xff]
  %v24 = vld [vmem:[%s1 + $0x30] sm:$0xff]
  %v25 = vld [vmem:[%s1 + $0x38] sm:$0xff]
  %v26 = vld [vmem:[%s1 + $0x40] sm:$0xff]
  %v27 = vld [vmem:[%s1 + $0x48] sm:$0xff]
  %v28 = vld [vmem:[%s1 + $0x50] sm:$0xff]
  %v29 = vld [vmem:[%s1 + $0x58] sm:$0xff]
  %v30 = vld [vmem:[%s1 + $0x60] sm:$0xff]
  %v31 = vld [vmem:[%s1 + $0x68] sm:$0xff]
  %v32 = vld [vmem:[%s1 + $0x70] sm:$0xff]
  %v33 = vld [vmem:[%s1 + $0x78] sm:$0xff]
  %v34 = vld [vmem:[%s1 + $0x80] sm:$0xff]
  %v35 = vld [vmem:[%s1 + $0x88] sm:$0xff]
  %v36 = vld [vmem:[%s1 + $0x90] sm:$0xff]
  %v37 = vld [vmem:[%s1 + $0x98] sm:$0xff]
  %v38 = vld [vmem:[%s1 + $0xa0] sm:$0xff]
  %v39 = vld [vmem:[%s1 + $0xa8] sm:$0xff]
  %v40 = vld [vmem:[%s1 + $0xb0] sm:$0xff]
  %v41 = vld [vmem:[%s1 + $0xb8] sm:$0xff]
  %v42 = vld [vmem:[%s1 + $0xc0] sm:$0xff]
  %v43 = vld [vmem:[%s1 + $0xc8] sm:$0xff]
  %v44 = vld [vmem:[%s1 + $0xd0] sm:$0xff]
  %v45 = vld [vmem:[%s1 + $0xd8] sm:$0xff]
  %v46 = vld [vmem:[%s1 + $0xe0] sm:$0xff]
  %v47 = vld [vmem:[%s1 + $0xe8] sm:$0xff]
  %v48 = vld [vmem:[%s1 + $0xf0] sm:$0xff]
  %v49 = vld [vmem:[%s1 + $0xf8] sm:$0xff]
  %v50 = vld [vmem:[%s2] sm:$0x1]
  %v52 = vperm.slane %v50, 0
  %54 = vmatpush.msra.mxu0 %v33
  %55 = vmatpush.msra.mxu0 %v32
  %56 = vmatpush.msra.mxu0 %v31
  %57 = vmatpush.msra.mxu0 %v30
  %58 = vmatpush.msra.mxu0 %v29
  %59 = vmatpush.msra.mxu0 %v28
  %60 = vmatpush.msra.mxu0 %v27
  %61 = vmatpush.msra.mxu0 %v26
  %62 = vmatpush.msra.mxu0 %v25
  %63 = vmatpush.msra.mxu0 %v24
  %64 = vmatpush.msra.mxu0 %v23
  %65 = vmatpush.msra.mxu0 %v22
  %66 = vmatpush.msra.mxu0 %v21
  %67 = vmatpush.msra.mxu0 %v20
  %68 = vmatpush.msra.mxu0 %v19
  %69 = vmatpush.msra.mxu0 %v18
  %70 = vmatmul.f32.gmra.mxu0 %v14
  %v71 = vpop.f32.mrf.mxu0
  %v72 = vadd.f32 %v52, %v71
  %73 = vmatmul.f32.gmra.mxu0 %v16
  %v74 = vpop.f32.mrf.mxu0
  %v75 = vadd.f32 %v52, %v74
  %76 = vdwg.mxu0
  %77 = vmatpush.msra.mxu0 %v49
  %78 = vmatpush.msra.mxu0 %v48
  %79 = vmatpush.msra.mxu0 %v47
  %80 = vmatpush.msra.mxu0 %v46
  %81 = vmatpush.msra.mxu0 %v45
  %82 = vmatpush.msra.mxu0 %v44
  %83 = vmatpush.msra.mxu0 %v43
  %84 = vmatpush.msra.mxu0 %v42
  %85 = vmatpush.msra.mxu0 %v41
  %86 = vmatpush.msra.mxu0 %v40
  %87 = vmatpush.msra.mxu0 %v39
  %88 = vmatpush.msra.mxu0 %v38
  %89 = vmatpush.msra.mxu0 %v37
  %90 = vmatpush.msra.mxu0 %v36
  %91 = vmatpush.msra.mxu0 %v35
  %92 = vmatpush.msra.mxu0 %v34
  %93 = vmatmul.f32.gmra.mxu0 %v15
  %v94 = vpop.f32.mrf.mxu0
  %v95 = vadd.f32 %v72, %v94
  %96 = vmatmul.f32.gmra.mxu0 %v17
  %v97 = vpop.f32.mrf.mxu0
  %v98 = vadd.f32 %v75, %v97
  %99 = vdwg.mxu0
  %100 = vst [vmem:[%s3] sm:$0xff] %v95
  %101 = vst [vmem:[%s3 + $0x8] sm:$0xff] %v98
  // Predicated region
  $region14: #{_lambda_.86} parent=0 // pred_check
    _
  $region15: #{_lambda_.86} parent=0 // pred_check_branch
    %103 = sbr.rel (0) target = $region17
  $region16: #{_lambda_.86} parent=0 // pred_region
    _
  $region17: #{_lambda_.86} parent=0 // pred_fallthru
    _
  // Predicated region
  $region18: #{_lambda_.86} parent=0 // pred_check
    _
  $region19: #{_lambda_.86} parent=0 // pred_check_branch
    %105 = sbr.rel (0) target = $region21
  $region20: #{_lambda_.86} parent=0 // pred_region
    _
  $region21: #{_lambda_.86} parent=0 // pred_fallthru
    _

// kernel: _lambda_.85
$region0: #{_lambda_.85}
  #allocation0 [shape = 'u32[]', space=smem, size = 0x4, offset = 0x4, fixed_abs, tag = 'smem constant byte address 0x4 - core index']
  #allocation1 [shape = 'u32[72,128]{1,0:T(1,128)}', space=vmem, size = 0x9000, scoped, tag = 'internal scratch']
  %s0 = inlined_call_operand.vmem [shape: f32[16,128], index: 0, kind: input, shape index: {}]
  %s1 = inlined_call_operand.vmem [shape: f32[128,256], index: 1, kind: input, shape index: {}]
  %s2 = inlined_call_operand.vmem [shape: f32[1,256], index: 2, kind: input, shape index: {}]
  %s3 = inlined_call_operand.vmem [shape: f32[16,256], index: 3, kind: output, shape index: {}]
  %s4 = sld [smem:[#allocation0]]
  $region22: #{_lambda_.85} parent=0
    _
  %s6 = ssub.s32 1, %s4
  %s7 = scalar_select 0, %s6, %s4
  // Predicated region
  $region2: #{_lambda_.85} parent=0 // pred_check
    _
  $region3: #{_lambda_.85} parent=0 // pred_check_branch
    %9 = sbr.rel (0) target = $region5
  $region4: #{_lambda_.85} parent=0 // pred_region
    _
  $region5: #{_lambda_.85} parent=0 // pred_fallthru
    _
  // Predicated region
  $region6: #{_lambda_.85} parent=0 // pred_check
    _
  $region7: #{_lambda_.85} parent=0 // pred_check_branch
    %11 = sbr.rel (0) target = $region9
  $region8: #{_lambda_.85} parent=0 // pred_region
    _
  $region9: #{_lambda_.85} parent=0 // pred_fallthru
    _
  // Predicated region
  $region10: #{_lambda_.85} parent=0 // pred_check
    _
  $region11: #{_lambda_.85} parent=0 // pred_check_branch
    %13 = sbr.rel (0) target = $region13
  $region12: #{_lambda_.85} parent=0 // pred_region
    _
  $region13: #{_lambda_.85} parent=0 // pred_fallthru
    _
  %v14 = vld [vmem:[%s0] sm:$0xff]
  %v15 = vld [vmem:[%s0 + $0x8] sm:$0xff]
  %v16 = vld [vmem:[%s1] sm:$0xff]
  %v17 = vld [vmem:[%s1 + $0x8] sm:$0xff]
  %v18 = vld [vmem:[%s1 + $0x10] sm:$0xff]
  %v19 = vld [vmem:[%s1 + $0x18] sm:$0xff]
  %v20 = vld [vmem:[%s1 + $0x20] sm:$0xff]
  %v21 = vld [vmem:[%s1 + $0x28] sm:$0xff]
  %v22 = vld [vmem:[%s1 + $0x30] sm:$0xff]
  %v23 = vld [vmem:[%s1 + $0x38] sm:$0xff]
  %v24 = vld [vmem:[%s1 + $0x40] sm:$0xff]
  %v25 = vld [vmem:[%s1 + $0x48] sm:$0xff]
  %v26 = vld [vmem:[%s1 + $0x50] sm:$0xff]
  %v27 = vld [vmem:[%s1 + $0x58] sm:$0xff]
  %v28 = vld [vmem:[%s1 + $0x60] sm:$0xff]
  %v29 = vld [vmem:[%s1 + $0x68] sm:$0xff]
  %v30 = vld [vmem:[%s1 + $0x70] sm:$0xff]
  %v31 = vld [vmem:[%s1 + $0x78] sm:$0xff]
  %v32 = vld [vmem:[%s1 + $0x80] sm:$0xff]
  %v33 = vld [vmem:[%s1 + $0x88] sm:$0xff]
  %v34 = vld [vmem:[%s1 + $0x90] sm:$0xff]
  %v35 = vld [vmem:[%s1 + $0x98] sm:$0xff]
  %v36 = vld [vmem:[%s1 + $0xa0] sm:$0xff]
  %v37 = vld [vmem:[%s1 + $0xa8] sm:$0xff]
  %v38 = vld [vmem:[%s1 + $0xb0] sm:$0xff]
  %v39 = vld [vmem:[%s1 + $0xb8] sm:$0xff]
  %v40 = vld [vmem:[%s1 + $0xc0] sm:$0xff]
  %v41 = vld [vmem:[%s1 + $0xc8] sm:$0xff]
  %v42 = vld [vmem:[%s1 + $0xd0] sm:$0xff]
  %v43 = vld [vmem:[%s1 + $0xd8] sm:$0xff]
  %v44 = vld [vmem:[%s1 + $0xe0] sm:$0xff]
  %v45 = vld [vmem:[%s1 + $0xe8] sm:$0xff]
  %v46 = vld [vmem:[%s1 + $0xf0] sm:$0xff]
  %v47 = vld [vmem:[%s1 + $0xf8] sm:$0xff]
  %v48 = vld [vmem:[%s2] sm:$0x3]
  %v50 = vperm.slane %v48, 0
  %v51 = vperm.slane %v48, 1
  %54 = vmatpush.msra.mxu0 %v46
  %55 = vmatpush.msra.mxu0 %v44
  %56 = vmatpush.msra.mxu0 %v42
  %57 = vmatpush.msra.mxu0 %v40
  %58 = vmatpush.msra.mxu0 %v38
  %59 = vmatpush.msra.mxu0 %v36
  %60 = vmatpush.msra.mxu0 %v34
  %61 = vmatpush.msra.mxu0 %v32
  %62 = vmatpush.msra.mxu0 %v30
  %63 = vmatpush.msra.mxu0 %v28
  %64 = vmatpush.msra.mxu0 %v26
  %65 = vmatpush.msra.mxu0 %v24
  %66 = vmatpush.msra.mxu0 %v22
  %67 = vmatpush.msra.mxu0 %v20
  %68 = vmatpush.msra.mxu0 %v18
  %69 = vmatpush.msra.mxu0 %v16
  %70 = vmatmul.f32.gmra.mxu0 %v14
  %v71 = vpop.f32.mrf.mxu0
  %v72 = vadd.f32 %v50, %v71
  %73 = vmatmul.f32.gmra.mxu0 %v15
  %v74 = vpop.f32.mrf.mxu0
  %v75 = vadd.f32 %v50, %v74
  %76 = vdwg.mxu0
  %77 = vmatpush.msra.mxu0 %v47
  %78 = vmatpush.msra.mxu0 %v45
  %79 = vmatpush.msra.mxu0 %v43
  %80 = vmatpush.msra.mxu0 %v41
  %81 = vmatpush.msra.mxu0 %v39
  %82 = vmatpush.msra.mxu0 %v37
  %83 = vmatpush.msra.mxu0 %v35
  %84 = vmatpush.msra.mxu0 %v33
  %85 = vmatpush.msra.mxu0 %v31
  %86 = vmatpush.msra.mxu0 %v29
  %87 = vmatpush.msra.mxu0 %v27
  %88 = vmatpush.msra.mxu0 %v25
  %89 = vmatpush.msra.mxu0 %v23
  %90 = vmatpush.msra.mxu0 %v21
  %91 = vmatpush.msra.mxu0 %v19
  %92 = vmatpush.msra.mxu0 %v17
  %93 = vmatmul.f32.gmra.mxu0 %v14
  %v94 = vpop.f32.mrf.mxu0
  %v95 = vadd.f32 %v51, %v94
  %96 = vmatmul.f32.gmra.mxu0 %v15
  %v97 = vpop.f32.mrf.mxu0
  %v98 = vadd.f32 %v51, %v97
  %99 = vdwg.mxu0
  %v100 = vmax.f32 %v72, 0.0
  %v101 = vmax.f32 %v95, 0.0
  %v102 = vmax.f32 %v75, 0.0
  %v103 = vmax.f32 %v98, 0.0
  %104 = vst [vmem:[%s3] sm:$0xff] %v100
  %105 = vst [vmem:[%s3 + $0x8] sm:$0xff] %v101
  %106 = vst [vmem:[%s3 + $0x10] sm:$0xff] %v102
  %107 = vst [vmem:[%s3 + $0x18] sm:$0xff] %v103
  // Predicated region
  $region14: #{_lambda_.85} parent=0 // pred_check
    _
  $region15: #{_lambda_.85} parent=0 // pred_check_branch
    %109 = sbr.rel (0) target = $region17
  $region16: #{_lambda_.85} parent=0 // pred_region
    _
  $region17: #{_lambda_.85} parent=0 // pred_fallthru
    _
  // Predicated region
  $region18: #{_lambda_.85} parent=0 // pred_check
    _
  $region19: #{_lambda_.85} parent=0 // pred_check_branch
    %111 = sbr.rel (0) target = $region21
  $region20: #{_lambda_.85} parent=0 // pred_region
    _
  $region21: #{_lambda_.85} parent=0 // pred_fallthru
    _

// kernel: _lambda_.82
$region0: #{_lambda_.82}
  #allocation0 [shape = 'u32[]', space=smem, size = 0x4, offset = 0x4, fixed_abs, tag = 'smem constant byte address 0x4 - core index']
  #allocation1 [shape = 'u32[72,128]{1,0:T(1,128)}', space=vmem, size = 0x9000, scoped, tag = 'internal scratch']
  %s0 = inlined_call_operand.vmem [shape: f32[8,8,32], index: 0, kind: input, shape index: {}]
  %s1 = inlined_call_operand.vmem [shape: f32[8,10,32], index: 1, kind: input, shape index: {}]
  %s2 = inlined_call_operand.vmem [shape: f32[8,10,32], index: 2, kind: input, shape index: {}]
  %s3 = inlined_call_operand.vmem [shape: s32[8,8,10], index: 3, kind: input, shape index: {}]
  %s4 = inlined_call_operand.vmem [shape: f32[8,8,32], index: 4, kind: output, shape index: {}]
  %s5 = sld [smem:[#allocation0]]
  $region49: #{_lambda_.82} parent=0
    _
  %s7 = ssub.s32 1, %s5
  %s8 = scalar_select 0, %s7, %s5
  loop: start=0, step=1, limit=10
  $region2: #{_lambda_.82} parent=0 // loop_pre_header
    _
  $region3: #{_lambda_.82} parent=0 // loop_header
    %s10 = sphi 0, %s14
    %p11 = scmp.ge.s32.totalorder %s10, 10
    %s20 = sphi 0, %s22
    %s23 = sphi 0, %s20
    %s24 = sphi 0, %s23
    %s40 = sphi 0, %s24
    %s46 = sphi 0, %s48
    %s49 = sphi 0, %s46
    %s50 = sphi 0, %s49
    %s66 = sphi 0, %s50
    %s72 = sphi 0, %s74
    %s75 = sphi 0, %s72
    %s76 = sphi 0, %s75
    %s92 = sphi 0, %s76
    %s98 = sphi 0, %s100
    %s101 = sphi 0, %s98
    %s102 = sphi 0, %s101
    %s118 = sphi 0, %s102
    %s124 = sphi 0, %s126
    %s127 = sphi 0, %s124
    %s128 = sphi 0, %s127
    %s144 = sphi 0, %s128
  $region4: #{_lambda_.82} parent=0 // loop_header_branch
    %13 = sbr.rel (%p11) target = $region8
  $region5: #{_lambda_.82} parent=0 // loop_body
    %s15 = ssub.s32 %s10, 1
    %s16 = ssub.s32 %s10, 2
    %s17 = sadd.s32 %s10, 1
    %s18 = ssub.s32 %s10, %s17
    %p19 = scmp.eq.s32.totalorder %s18, 0
    %s21 = sadd.s32 %s20, 1
    %s22 = scalar_select %p19, %s20, %s21
    %p25 = pneg %p19
    %p26 = scmp.eq.s32.totalorder %s10, 7
    %p27 = por %p25, %p26
    %p28 = scmp.ne.s32.totalorder %s20, %s23
    %p29 = scmp.eq.s32.totalorder %s10, 0
    %p30 = por %p28, %p29
    %p31 = scmp.ne.s32.totalorder %s20, %s23
    %p32 = scmp.eq.s32.totalorder %s15, 7
    %p33 = por %p31, %p32
    %p34 = scmp.ne.s32.totalorder %s23, %s24
    %p35 = scmp.eq.s32.totalorder %s15, 0
    %p36 = por %p34, %p35
    %p37 = scmp.ne.s32.totalorder %s23, %s24
    %p38 = scmp.eq.s32.totalorder %s16, 7
    %p39 = por %p37, %p38
    %p41 = scmp.ne.s32.totalorder %s24, %s40
    %p42 = scmp.eq.s32.totalorder %s16, 0
    %p43 = por %p41, %p42
    %s44 = ssub.s32 %s10, %s17
    %p45 = scmp.eq.s32.totalorder %s44, 0
    %s47 = sadd.s32 %s46, 1
    %s48 = scalar_select %p45, %s46, %s47
    %p51 = pneg %p45
    %p52 = scmp.eq.s32.totalorder %s10, 7
    %p53 = por %p51, %p52
    %p54 = scmp.ne.s32.totalorder %s46, %s49
    %p55 = scmp.eq.s32.totalorder %s10, 0
    %p56 = por %p54, %p55
    %p57 = scmp.ne.s32.totalorder %s46, %s49
    %p58 = scmp.eq.s32.totalorder %s15, 7
    %p59 = por %p57, %p58
    %p60 = scmp.ne.s32.totalorder %s49, %s50
    %p61 = scmp.eq.s32.totalorder %s15, 0
    %p62 = por %p60, %p61
    %p63 = scmp.ne.s32.totalorder %s49, %s50
    %p64 = scmp.eq.s32.totalorder %s16, 7
    %p65 = por %p63, %p64
    %p67 = scmp.ne.s32.totalorder %s50, %s66
    %p68 = scmp.eq.s32.totalorder %s16, 0
    %p69 = por %p67, %p68
    %s70 = ssub.s32 %s10, %s17
    %p71 = scmp.eq.s32.totalorder %s70, 0
    %s73 = sadd.s32 %s72, 1
    %s74 = scalar_select %p71, %s72, %s73
    %p77 = pneg %p71
    %p78 = scmp.eq.s32.totalorder %s10, 7
    %p79 = por %p77, %p78
    %p80 = scmp.ne.s32.totalorder %s72, %s75
    %p81 = scmp.eq.s32.totalorder %s10, 0
    %p82 = por %p80, %p81
    %p83 = scmp.ne.s32.totalorder %s72, %s75
    %p84 = scmp.eq.s32.totalorder %s15, 7
    %p85 = por %p83, %p84
    %p86 = scmp.ne.s32.totalorder %s75, %s76
    %p87 = scmp.eq.s32.totalorder %s15, 0
    %p88 = por %p86, %p87
    %p89 = scmp.ne.s32.totalorder %s75, %s76
    %p90 = scmp.eq.s32.totalorder %s16, 7
    %p91 = por %p89, %p90
    %p93 = scmp.ne.s32.totalorder %s76, %s92
    %p94 = scmp.eq.s32.totalorder %s16, 0
    %p95 = por %p93, %p94
    %s96 = ssub.s32 %s10, %s17
    %p97 = scmp.eq.s32.totalorder %s96, 0
    %s99 = sadd.s32 %s98, 1
    %s100 = scalar_select %p97, %s98, %s99
    %p103 = pneg %p97
    %p104 = scmp.eq.s32.totalorder %s10, 7
    %p105 = por %p103, %p104
    %p106 = scmp.ne.s32.totalorder %s98, %s101
    %p107 = scmp.eq.s32.totalorder %s10, 0
    %p108 = por %p106, %p107
    %p109 = scmp.ne.s32.totalorder %s98, %s101
    %p110 = scmp.eq.s32.totalorder %s15, 7
    %p111 = por %p109, %p110
    %p112 = scmp.ne.s32.totalorder %s101, %s102
    %p113 = scmp.eq.s32.totalorder %s15, 0
    %p114 = por %p112, %p113
    %p115 = scmp.ne.s32.totalorder %s101, %s102
    %p116 = scmp.eq.s32.totalorder %s16, 7
    %p117 = por %p115, %p116
    %p119 = scmp.ne.s32.totalorder %s102, %s118
    %p120 = scmp.eq.s32.totalorder %s16, 0
    %p121 = por %p119, %p120
    %s122 = ssub.s32 %s10, %s17
    %p123 = scmp.eq.s32.totalorder %s122, 0
    %s125 = sadd.s32 %s124, 1
    %s126 = scalar_select %p123, %s124, %s125
    %p129 = pneg %p123
    %p130 = scmp.eq.s32.totalorder %s10, 7
    %p131 = por %p129, %p130
    %p132 = scmp.ne.s32.totalorder %s124, %s127
    %p133 = scmp.eq.s32.totalorder %s10, 0
    %p134 = por %p132, %p133
    %p135 = scmp.ne.s32.totalorder %s124, %s127
    %p136 = scmp.eq.s32.totalorder %s15, 7
    %p137 = por %p135, %p136
    %p138 = scmp.ne.s32.totalorder %s127, %s128
    %p139 = scmp.eq.s32.totalorder %s15, 0
    %p140 = por %p138, %p139
    %p141 = scmp.ne.s32.totalorder %s127, %s128
    %p142 = scmp.eq.s32.totalorder %s16, 7
    %p143 = por %p141, %p142
    %p145 = scmp.ne.s32.totalorder %s128, %s144
    %p146 = scmp.eq.s32.totalorder %s16, 0
    %p147 = por %p145, %p146
    %p148 = scmp.le.s32.totalorder 1, %s10
    %p149 = scmp.lt.s32.totalorder %s10, 9
    %p150 = pnand %p148, %p149
    %p151 = pneg %p150
    // Predicated region
    $region9: #{_lambda_.82} parent=5 // pred_check
      _
    $region10: #{_lambda_.82} parent=5 // pred_check_branch
      %153 = sbr.rel (%p150) target = $region12
    $region11: #{_lambda_.82} parent=5 // pred_region
      %s154 = ssub.s32 %s10, 1
    $region12: #{_lambda_.82} parent=5 // pred_fallthru
      _
    %p155 = scmp.lt.s32.totalorder %s10, 8
    // Predicated region
    $region13: #{_lambda_.82} parent=5 // pred_check
      %p156 = pneg %p155
    $region14: #{_lambda_.82} parent=5 // pred_check_branch
      %158 = sbr.rel (%p156) target = $region16
    $region15: #{_lambda_.82} parent=5 // pred_region
      // Predicated region
      $region17: #{_lambda_.82} parent=15 // pred_check
        %p159 = pneg %p30
      $region18: #{_lambda_.82} parent=15 // pred_check_branch
        %161 = sbr.rel (%p159) target = $region20
      $region19: #{_lambda_.82} parent=15 // pred_region
        %p162 = scmp.lt.s32.totalorder %s10, 7
        %s163 = scalar_select %p162, %s10, 7
        %s164 = smul.addr %s163, 8
        %s165 = scalar_lea.vmem %s0, %s164
      $region20: #{_lambda_.82} parent=15 // pred_fallthru
        _
      // Predicated region
      $region21: #{_lambda_.82} parent=15 // pred_check
        %p166 = pneg %p56
      $region22: #{_lambda_.82} parent=15 // pred_check_branch
        %168 = sbr.rel (%p166) target = $region24
      $region23: #{_lambda_.82} parent=15 // pred_region
        %p169 = scmp.lt.s32.totalorder %s10, 7
        %s170 = scalar_select %p169, %s10, 7
        %s171 = smul.addr %s170, 2
        %s172 = smul.addr %s171, 8
        %s173 = scalar_lea.vmem %s1, %s172
      $region24: #{_lambda_.82} parent=15 // pred_fallthru
        _
      // Predicated region
      $region25: #{_lambda_.82} parent=15 // pred_check
        %p174 = pneg %p82
      $region26: #{_lambda_.82} parent=15 // pred_check_branch
        %176 = sbr.rel (%p174) target = $region28
      $region27: #{_lambda_.82} parent=15 // pred_region
        %p177 = scmp.lt.s32.totalorder %s10, 7
        %s178 = scalar_select %p177, %s10, 7
        %s179 = smul.addr %s178, 2
        %s180 = smul.addr %s179, 8
        %s181 = scalar_lea.vmem %s2, %s180
      $region28: #{_lambda_.82} parent=15 // pred_fallthru
        _
      // Predicated region
      $region29: #{_lambda_.82} parent=15 // pred_check
        %p182 = pneg %p108
      $region30: #{_lambda_.82} parent=15 // pred_check_branch
        %184 = sbr.rel (%p182) target = $region32
      $region31: #{_lambda_.82} parent=15 // pred_region
        %p185 = scmp.lt.s32.totalorder %s10, 7
        %s186 = scalar_select %p185, %s10, 7
        %s187 = smul.addr %s186, 8
        %s188 = scalar_lea.vmem %s3, %s187
      $region32: #{_lambda_.82} parent=15 // pred_fallthru
        _
    $region16: #{_lambda_.82} parent=5 // pred_fallthru
      _
    %p189 = scmp.le.s32.totalorder 1, %s10
    %p190 = scmp.lt.s32.totalorder %s10, 9
    %p191 = pnand %p189, %p190
    %p192 = pneg %p191
    // Predicated region
    $region33: #{_lambda_.82} parent=5 // pred_check
      _
    $region34: #{_lambda_.82} parent=5 // pred_check_branch
      %194 = sbr.rel (%p191) target = $region36
    $region35: #{_lambda_.82} parent=5 // pred_region
      %s195 = ssub.s32 %s10, 1
      %p196 = scmp.lt.s32.totalorder %s15, 7
      %s197 = scalar_select %p196, %s15, 7
      %s198 = smul.addr %s197, 8
      %s199 = scalar_lea.vmem %s0, %s198
      %p200 = pneg %p36
      %p201 = pneg %p33
      %p202 = scmp.lt.s32.totalorder %s15, 7
      %s203 = scalar_select %p202, %s15, 7
      %s204 = smul.addr %s203, 2
      %s205 = smul.addr %s204, 8
      %s206 = scalar_lea.vmem %s1, %s205
      %p207 = pneg %p62
      %p208 = pneg %p59
      %p209 = scmp.lt.s32.totalorder %s15, 7
      %s210 = scalar_select %p209, %s15, 7
      %s211 = smul.addr %s210, 2
      %s212 = smul.addr %s211, 8
      %s213 = scalar_lea.vmem %s2, %s212
      %p214 = pneg %p88
      %p215 = pneg %p85
      %p216 = scmp.lt.s32.totalorder %s15, 7
      %s217 = scalar_select %p216, %s15, 7
      %s218 = smul.addr %s217, 8
      %s219 = scalar_lea.vmem %s3, %s218
      %p220 = pneg %p114
      %p221 = pneg %p111
      %p222 = pneg %p140
      %p223 = pneg %p137
      %p224 = scmp.lt.s32.totalorder %s15, 7
      %s225 = scalar_select %p224, %s15, 7
      %s226 = smul.addr %s225, 8
      %s227 = scalar_lea.vmem %s4, %s226
      %p228 = scmp.lt.s32.totalorder %s15, 7
      %s229 = scalar_select %p228, %s15, 7
      %s230 = smul.addr %s229, 8
      %s231 = scalar_lea.vmem %s0, %s230
      %p232 = scmp.lt.s32.totalorder %s15, 7
      %s233 = scalar_select %p232, %s15, 7
      %s234 = smul.addr %s233, 2
      %s235 = smul.addr %s234, 8
      %s236 = scalar_lea.vmem %s1, %s235
      %p237 = scmp.lt.s32.totalorder %s15, 7
      %s238 = scalar_select %p237, %s15, 7
      %s239 = smul.addr %s238, 2
      %s240 = smul.addr %s239, 8
      %s241 = scalar_lea.vmem %s2, %s240
      %p242 = scmp.lt.s32.totalorder %s15, 7
      %s243 = scalar_select %p242, %s15, 7
      %s244 = smul.addr %s243, 8
      %s245 = scalar_lea.vmem %s3, %s244
      %p246 = scmp.lt.s32.totalorder %s15, 7
      %s247 = scalar_select %p246, %s15, 7
      %s248 = smul.addr %s247, 8
      %s249 = scalar_lea.vmem %s4, %s248
      %v250 = vld [vmem:[%s231] sm:$0xff]
      %v251 = vld [vmem:[%s236] sm:$0xff]
      %v252 = vld [vmem:[%s236 + $0x8] sm:$0x3]
      %vm253 = vcmask 261120
      %v255 = vsel %vm253, %v250, 0
      %v258 = vsel %vm253, %v251, 0
      %v261 = vsel %vm253, %v252, 0
      %263 = vmatpush.xpose.msra.mxu0 0.0
      %264 = vmatpush.xpose.msra.mxu0 0.0
      %265 = vmatpush.xpose.msra.mxu0 0.0
      %266 = vmatpush.xpose.msra.mxu0 0.0
      %267 = vmatpush.xpose.msra.mxu0 0.0
      %268 = vmatpush.xpose.msra.mxu0 0.0
      %269 = vmatpush.xpose.msra.mxu0 0.0
      %270 = vmatpush.xpose.msra.mxu0 0.0
      %271 = vmatpush.xpose.msra.mxu0 0.0
      %272 = vmatpush.xpose.msra.mxu0 0.0
      %273 = vmatpush.xpose.msra.mxu0 0.0
      %274 = vmatpush.xpose.msra.mxu0 0.0
      %275 = vmatpush.xpose.msra.mxu0 0.0
      %276 = vmatpush.xpose.msra.mxu0 0.0
      %277 = vmatpush.xpose.msra.mxu0 %v261
      %278 = vmatpush.xpose.msra.mxu0 %v258
      %279 = vmatmul.f32.gmra.mxu0 %v255
      %v280 = vpop.f32.mrf.mxu0
      %v281 = vadd.f32 0.0, %v280
      %282 = vdwg.mxu0
      %v283 = vmul.f32 %v281, 0.17677669
      %v284 = vld [vmem:[%s245] sm:$0xff]
      %vm285 = vcmp.eq.s32.totalorder %v284, 0
      %v286 = vsel %vm285, -1e+10, %v283
      %vm287 = vcmask 80896
      %v288 = vsel %vm287, %v286, -inf
      %289 = vmax.xlane.f32.xlu0 %v288
      %v290 = vpop.xlane.xlu0 %289
      %v291 = vsub.f32 %v286, %v290
      %v292 = vmul.f32 %v291, 1.442695
      %v293 = vpow.pop %v292
      %v294 = vsel %vm287, %v293, 0.0
      %295 = vadd.xlane.f32.xlu0 %v294
      %v296 = vpop.xlane.xlu0 %295
      %v297 = vrcp.pop %v296
      %v298 = vmul.f32 %v296, %v297
      %v299 = vsub.f32 1.0, %v298
      %v300 = vmul.f32 %v297, %v299
      %v301 = vadd.f32 %v297, %v300
      %vm302 = vweird.f32 %v296
      %vm303 = vweird.f32 %v297
      %vm304 = vmor %vm302, %vm303
      %v305 = vsel %vm304, %v297, %v301
      %v306 = vand.u32 2147483647, %v296
      %vm307 = vcmp.eq.f32.partialorder %v306, 8.507059e+37
      %v308 = vand.u32 %v296, 2147483648
      %v309 = vor.u32 1.1754944e-38, %v308
      %v310 = vsel %vm307, %v309, %v305
      %v311 = vmul.f32 %v293, %v310
      %v312 = vld [vmem:[%s241] sm:$0xff]
      %v313 = vld [vmem:[%s241 + $0x8] sm:$0x3]
      %v315 = vsel %vm287, %v311, 0
      %vm317 = vcmask 1041408
      %v319 = vsel %vm317, %v313, 0
      %321 = vmatpush.msra.mxu0 0.0
      %322 = vmatpush.msra.mxu0 0.0
      %323 = vmatpush.msra.mxu0 0.0
      %324 = vmatpush.msra.mxu0 0.0
      %325 = vmatpush.msra.mxu0 0.0
      %326 = vmatpush.msra.mxu0 0.0
      %327 = vmatpush.msra.mxu0 0.0
      %328 = vmatpush.msra.mxu0 0.0
      %329 = vmatpush.msra.mxu0 0.0
      %330 = vmatpush.msra.mxu0 0.0
      %331 = vmatpush.msra.mxu0 0.0
      %332 = vmatpush.msra.mxu0 0.0
      %333 = vmatpush.msra.mxu0 0.0
      %334 = vmatpush.msra.mxu0 0.0
      %335 = vmatpush.msra.mxu0 %v319
      %336 = vmatpush.msra.mxu0 %v312
      %337 = vmatmul.f32.gmra.mxu0 %v315
      %v338 = vpop.f32.mrf.mxu0
      %v339 = vadd.f32 0.0, %v338
      %340 = vdwg.mxu0
      %341 = vst.msk [vmem:[%s249] sm:$0xff] %vm253, %v339
      %p342 = scmp.lt.s32.totalorder %s15, 7
      %s343 = scalar_select %p342, %s15, 7
      %s344 = smul.addr %s343, 8
      %s345 = scalar_lea.vmem %s4, %s344
      // Predicated region
      $region37: #{_lambda_.82} parent=35 // pred_check
        %p346 = pneg %p137
      $region38: #{_lambda_.82} parent=35 // pred_check_branch
        %348 = sbr.rel (%p346) target = $region40
      $region39: #{_lambda_.82} parent=35 // pred_region
        _
      $region40: #{_lambda_.82} parent=35 // pred_fallthru
        _
    $region36: #{_lambda_.82} parent=5 // pred_fallthru
      _
    %p349 = scmp.le.s32.totalorder 2, %s10
    // Predicated region
    $region41: #{_lambda_.82} parent=5 // pred_check
      %p350 = pneg %p349
    $region42: #{_lambda_.82} parent=5 // pred_check_branch
      %352 = sbr.rel (%p350) target = $region44
    $region43: #{_lambda_.82} parent=5 // pred_region
      %s353 = ssub.s32 %s10, 2
      // Predicated region
      $region45: #{_lambda_.82} parent=43 // pred_check
        %p354 = pneg %p143
      $region46: #{_lambda_.82} parent=43 // pred_check_branch
        %356 = sbr.rel (%p354) target = $region48
      $region47: #{_lambda_.82} parent=43 // pred_region
        %p357 = scmp.lt.s32.totalorder %s16, 7
        %s358 = scalar_select %p357, %s16, 7
        %s359 = smul.addr %s358, 8
        %s360 = scalar_lea.vmem %s4, %s359
      $region48: #{_lambda_.82} parent=43 // pred_fallthru
        _
    $region44: #{_lambda_.82} parent=5 // pred_fallthru
      _
  $region6: #{_lambda_.82} parent=0 // loop_footer
    %s14 = sadd.s32 1, %s10
  $region7: #{_lambda_.82} parent=0 // loop_footer_branch
    %9 = sbr.rel target = $region3
  $region8: #{_lambda_.82} parent=0 // loop_exit
    _

// kernel: _lambda_.102
$region0: #{_lambda_.102}
  #allocation0 [shape = 'u32[]', space=smem, size = 0x4, offset = 0x4, fixed_abs, tag = 'smem constant byte address 0x4 - core index']
  #allocation1 [shape = 'u32[72,128]{1,0:T(1,128)}', space=vmem, size = 0x9000, scoped, tag = 'internal scratch']
  %s0 = inlined_call_operand.vmem [shape: f32[16,128], index: 0, kind: input, shape index: {}]
  %s1 = inlined_call_operand.vmem [shape: f32[1,128], index: 1, kind: input, shape index: {}]
  %s2 = inlined_call_operand.vmem [shape: f32[1,128], index: 2, kind: input, shape index: {}]
  %s3 = inlined_call_operand.vmem [shape: f32[16,128], index: 3, kind: output, shape index: {}]
  %s4 = sld [smem:[#allocation0]]
  $region22: #{_lambda_.102} parent=0
    _
  %s6 = ssub.s32 1, %s4
  %s7 = scalar_select 0, %s6, %s4
  // Predicated region
  $region2: #{_lambda_.102} parent=0 // pred_check
    _
  $region3: #{_lambda_.102} parent=0 // pred_check_branch
    %9 = sbr.rel (0) target = $region5
  $region4: #{_lambda_.102} parent=0 // pred_region
    _
  $region5: #{_lambda_.102} parent=0 // pred_fallthru
    _
  // Predicated region
  $region6: #{_lambda_.102} parent=0 // pred_check
    _
  $region7: #{_lambda_.102} parent=0 // pred_check_branch
    %11 = sbr.rel (0) target = $region9
  $region8: #{_lambda_.102} parent=0 // pred_region
    _
  $region9: #{_lambda_.102} parent=0 // pred_fallthru
    _
  // Predicated region
  $region10: #{_lambda_.102} parent=0 // pred_check
    _
  $region11: #{_lambda_.102} parent=0 // pred_check_branch
    %13 = sbr.rel (0) target = $region13
  $region12: #{_lambda_.102} parent=0 // pred_region
    _
  $region13: #{_lambda_.102} parent=0 // pred_fallthru
    _
  %v14 = vld [vmem:[%s0] sm:$0xff]
  %v15 = vld [vmem:[%s0 + $0x8] sm:$0xff]
  %16 = vadd.xlane.f32.xlu0 %v14
  %v17 = vpop.xlane.xlu0 %16
  %18 = vadd.xlane.f32.xlu0 %v15
  %v19 = vpop.xlane.xlu0 %18
  %v20 = vrcp.pop 128.0
  %v21 = vmul.f32 128.0, %v20
  %v22 = vsub.f32 1.0, %v21
  %v23 = vmul.f32 %v20, %v22
  %v24 = vadd.f32 %v20, %v23
  %vm25 = vweird.f32 %v20
  %v26 = vsel %vm25, %v20, %v24
  %v27 = vmul.f32 %v17, %v26
  %v28 = vmul.f32 %v19, %v26
  %v29 = vsub.f32 %v14, %v27
  %v30 = vsub.f32 %v15, %v28
  %v31 = vmul.f32 %v29, %v29
  %v32 = vmul.f32 %v30, %v30
  %33 = vadd.xlane.f32.xlu0 %v31
  %v34 = vpop.xlane.xlu0 %33
  %35 = vadd.xlane.f32.xlu0 %v32
  %v36 = vpop.xlane.xlu0 %35
  %v37 = vrcp.pop 127.0
  %v38 = vmul.f32 127.0, %v37
  %v39 = vsub.f32 1.0, %v38
  %v40 = vmul.f32 %v37, %v39
  %v41 = vadd.f32 %v37, %v40
  %vm42 = vweird.f32 %v37
  %v43 = vsel %vm42, %v37, %v41
  %v44 = vmul.f32 %v34, %v43
  %v45 = vmul.f32 %v36, %v43
  %v46 = vrsqrt.pop %v44
  %v47 = vmul.f32 %v46, %v44
  %v48 = vmul.f32 %v47, %v46
  %v49 = vmul.f32 0.5, %v48
  %v50 = vsub.f32 1.5, %v49
  %v51 = vmul.f32 %v46, %v50
  %v52 = vmul.f32 %v44, %v51
  %vm53 = vcmp.eq.f32.partialorder %v44, inf
  %v54 = vsel %vm53, %v44, %v52
  %vm55 = vcmp.eq.f32.partialorder %v44, 0.0
  %v56 = vand.u32 %v44, 2147483648
  %v57 = vsel %vm55, %v56, %v54
  %v58 = vrsqrt.pop %v45
  %v59 = vmul.f32 %v58, %v45
  %v60 = vmul.f32 %v59, %v58
  %v61 = vmul.f32 0.5, %v60
  %v62 = vsub.f32 1.5, %v61
  %v63 = vmul.f32 %v58, %v62
  %v64 = vmul.f32 %v45, %v63
  %vm65 = vcmp.eq.f32.partialorder %v45, inf
  %v66 = vsel %vm65, %v45, %v64
  %vm67 = vcmp.eq.f32.partialorder %v45, 0.0
  %v68 = vand.u32 %v45, 2147483648
  %v69 = vsel %vm67, %v68, %v66
  %v70 = vld [vmem:[%s1] sm:$0x1]
  %v72 = vperm.slane %v70, 0
  %v74 = vmul.f32 %v72, %v29
  %v75 = vmul.f32 %v72, %v30
  %v76 = vadd.f32 %v57, 1e-06
  %v77 = vadd.f32 %v69, 1e-06
  %v78 = vrcp.pop %v76
  %v79 = vmul.f32 %v76, %v78
  %v80 = vsub.f32 1.0, %v79
  %v81 = vmul.f32 %v78, %v80
  %v82 = vadd.f32 %v78, %v81
  %vm83 = vweird.f32 %v76
  %vm84 = vweird.f32 %v78
  %vm85 = vmor %vm83, %vm84
  %v86 = vsel %vm85, %v78, %v82
  %v87 = vand.u32 2147483647, %v76
  %vm88 = vcmp.eq.f32.partialorder %v87, 8.507059e+37
  %v89 = vand.u32 %v76, 2147483648
  %v90 = vor.u32 1.1754944e-38, %v89
  %v91 = vsel %vm88, %v90, %v86
  %v92 = vmul.f32 %v74, %v91
  %v93 = vrcp.pop %v77
  %v94 = vmul.f32 %v77, %v93
  %v95 = vsub.f32 1.0, %v94
  %v96 = vmul.f32 %v93, %v95
  %v97 = vadd.f32 %v93, %v96
  %vm98 = vweird.f32 %v77
  %vm99 = vweird.f32 %v93
  %vm100 = vmor %vm98, %vm99
  %v101 = vsel %vm100, %v93, %v97
  %v102 = vand.u32 2147483647, %v77
  %vm103 = vcmp.eq.f32.partialorder %v102, 8.507059e+37
  %v104 = vand.u32 %v77, 2147483648
  %v105 = vor.u32 1.1754944e-38, %v104
  %v106 = vsel %vm103, %v105, %v101
  %v107 = vmul.f32 %v75, %v106
  %v108 = vld [vmem:[%s2] sm:$0x1]
  %v110 = vperm.slane %v108, 0
  %v112 = vadd.f32 %v92, %v110
  %v113 = vadd.f32 %v107, %v110
  %114 = vst [vmem:[%s3] sm:$0xff] %v112
  %115 = vst [vmem:[%s3 + $0x8] sm:$0xff] %v113
  // Predicated region
  $region14: #{_lambda_.102} parent=0 // pred_check
    _
  $region15: #{_lambda_.102} parent=0 // pred_check_branch
    %117 = sbr.rel (0) target = $region17
  $region16: #{_lambda_.102} parent=0 // pred_region
    _
  $region17: #{_lambda_.102} parent=0 // pred_fallthru
    _
  // Predicated region
  $region18: #{_lambda_.102} parent=0 // pred_check
    _
  $region19: #{_lambda_.102} parent=0 // pred_check_branch
    %119 = sbr.rel (0) target = $region21
  $region20: #{_lambda_.102} parent=0 // pred_region
    _
  $region21: #{_lambda_.102} parent=0 // pred_fallthru
    _

// kernel: _lambda_.103
$region0: #{_lambda_.103}
  #allocation0 [shape = 'u32[]', space=smem, size = 0x4, offset = 0x4, fixed_abs, tag = 'smem constant byte address 0x4 - core index']
  #allocation1 [shape = 'u32[72,128]{1,0:T(1,128)}', space=vmem, size = 0x9000, scoped, tag = 'internal scratch']
  %s0 = inlined_call_operand.vmem [shape: f32[16,128], index: 0, kind: input, shape index: {}]
  %s1 = inlined_call_operand.vmem [shape: f32[128,64], index: 1, kind: input, shape index: {}]
  %s2 = inlined_call_operand.vmem [shape: f32[1,64], index: 2, kind: input, shape index: {}]
  %s3 = inlined_call_operand.vmem [shape: f32[64,64], index: 3, kind: input, shape index: {}]
  %s4 = inlined_call_operand.vmem [shape: f32[1,64], index: 4, kind: input, shape index: {}]
  %s5 = inlined_call_operand.hbm [shape: f32[16,64], index: 5, kind: output, shape index: {}]
  %s6 = sld [smem:[#allocation0]]
  $region30: #{_lambda_.103} parent=0
    _
  %s8 = ssub.s32 1, %s6
  %s9 = scalar_select 0, %s8, %s6
  $region1: #{_lambda_.103} parent=0
    #allocation2 [shape = 'u8[8192]{0}', space=vmem, size = 0x2000, scoped, tag = 'output window, operand 0, single buffered']
    #allocation3 [shape = 's32[1]{0}', space=sflag, size = 0x4, scoped, tag = 'scoped memory for _lambda_.103']
    %10 = vsyncpa [#allocation3], 0
    // Predicated region
    $region2: #{_lambda_.103} parent=1 // pred_check
      _
    $region3: #{_lambda_.103} parent=1 // pred_check_branch
      %12 = sbr.rel (0) target = $region5
    $region4: #{_lambda_.103} parent=1 // pred_region
      _
    $region5: #{_lambda_.103} parent=1 // pred_fallthru
      _
    // Predicated region
    $region6: #{_lambda_.103} parent=1 // pred_check
      _
    $region7: #{_lambda_.103} parent=1 // pred_check_branch
      %14 = sbr.rel (0) target = $region9
    $region8: #{_lambda_.103} parent=1 // pred_region
      _
    $region9: #{_lambda_.103} parent=1 // pred_fallthru
      _
    // Predicated region
    $region10: #{_lambda_.103} parent=1 // pred_check
      _
    $region11: #{_lambda_.103} parent=1 // pred_check_branch
      %16 = sbr.rel (0) target = $region13
    $region12: #{_lambda_.103} parent=1 // pred_region
      _
    $region13: #{_lambda_.103} parent=1 // pred_fallthru
      _
    // Predicated region
    $region14: #{_lambda_.103} parent=1 // pred_check
      _
    $region15: #{_lambda_.103} parent=1 // pred_check_branch
      %18 = sbr.rel (0) target = $region17
    $region16: #{_lambda_.103} parent=1 // pred_region
      _
    $region17: #{_lambda_.103} parent=1 // pred_fallthru
      _
    // Predicated region
    $region18: #{_lambda_.103} parent=1 // pred_check
      _
    $region19: #{_lambda_.103} parent=1 // pred_check_branch
      %20 = sbr.rel (0) target = $region21
    $region20: #{_lambda_.103} parent=1 // pred_region
      _
    $region21: #{_lambda_.103} parent=1 // pred_fallthru
      _
    %v21 = vld [vmem:[%s0] sm:$0xff]
    %v22 = vld [vmem:[%s0 + $0x8] sm:$0xff]
    %v23 = vld [vmem:[%s1] sm:$0xff]
    %v24 = vld [vmem:[%s1 + $0x8] sm:$0xff]
    %v25 = vld [vmem:[%s1 + $0x10] sm:$0xff]
    %v26 = vld [vmem:[%s1 + $0x18] sm:$0xff]
    %v27 = vld [vmem:[%s1 + $0x20] sm:$0xff]
    %v28 = vld [vmem:[%s1 + $0x28] sm:$0xff]
    %v29 = vld [vmem:[%s1 + $0x30] sm:$0xff]
    %v30 = vld [vmem:[%s1 + $0x38] sm:$0xff]
    %v31 = vld [vmem:[%s1 + $0x40] sm:$0xff]
    %v32 = vld [vmem:[%s1 + $0x48] sm:$0xff]
    %v33 = vld [vmem:[%s1 + $0x50] sm:$0xff]
    %v34 = vld [vmem:[%s1 + $0x58] sm:$0xff]
    %v35 = vld [vmem:[%s1 + $0x60] sm:$0xff]
    %v36 = vld [vmem:[%s1 + $0x68] sm:$0xff]
    %v37 = vld [vmem:[%s1 + $0x70] sm:$0xff]
    %v38 = vld [vmem:[%s1 + $0x78] sm:$0xff]
    %v39 = vld [vmem:[%s2] sm:$0x1]
    %v41 = vperm.slane %v39, 0
    %43 = vmatpush.msra.mxu0 %v38
    %44 = vmatpush.msra.mxu0 %v37
    %45 = vmatpush.msra.mxu0 %v36
    %46 = vmatpush.msra.mxu0 %v35
    %47 = vmatpush.msra.mxu0 %v34
    %48 = vmatpush.msra.mxu0 %v33
    %49 = vmatpush.msra.mxu0 %v32
    %50 = vmatpush.msra.mxu0 %v31
    %51 = vmatpush.msra.mxu0 %v30
    %52 = vmatpush.msra.mxu0 %v29
    %53 = vmatpush.msra.mxu0 %v28
    %54 = vmatpush.msra.mxu0 %v27
    %55 = vmatpush.msra.mxu0 %v26
    %56 = vmatpush.msra.mxu0 %v25
    %57 = vmatpush.msra.mxu0 %v24
    %58 = vmatpush.msra.mxu0 %v23
    %59 = vmatmul.f32.gmra.mxu0 %v21
    %v60 = vpop.f32.mrf.mxu0
    %v61 = vadd.f32 %v41, %v60
    %62 = vmatmul.f32.gmra.mxu0 %v22
    %v63 = vpop.f32.mrf.mxu0
    %v64 = vadd.f32 %v41, %v63
    %65 = vdwg.mxu0
    %v66 = vmax.f32 %v61, 0.0
    %v67 = vmax.f32 %v64, 0.0
    %v68 = vld [vmem:[%s3] sm:$0xff]
    %v69 = vld [vmem:[%s3 + $0x8] sm:$0xff]
    %v70 = vld [vmem:[%s3 + $0x10] sm:$0xff]
    %v71 = vld [vmem:[%s3 + $0x18] sm:$0xff]
    %v72 = vld [vmem:[%s3 + $0x20] sm:$0xff]
    %v73 = vld [vmem:[%s3 + $0x28] sm:$0xff]
    %v74 = vld [vmem:[%s3 + $0x30] sm:$0xff]
    %v75 = vld [vmem:[%s3 + $0x38] sm:$0xff]
    %v76 = vld [vmem:[%s4] sm:$0x1]
    %v78 = vperm.slane %v76, 0
    %vm80 = vcmask 523264
    %v82 = vsel %vm80, %v66, 0
    %v85 = vsel %vm80, %v67, 0
    %87 = vmatpush.msra.mxu0 0.0
    %88 = vmatpush.msra.mxu0 0.0
    %89 = vmatpush.msra.mxu0 0.0
    %90 = vmatpush.msra.mxu0 0.0
    %91 = vmatpush.msra.mxu0 0.0
    %92 = vmatpush.msra.mxu0 0.0
    %93 = vmatpush.msra.mxu0 0.0
    %94 = vmatpush.msra.mxu0 0.0
    %95 = vmatpush.msra.mxu0 %v75
    %96 = vmatpush.msra.mxu0 %v74
    %97 = vmatpush.msra.mxu0 %v73
    %98 = vmatpush.msra.mxu0 %v72
    %99 = vmatpush.msra.mxu0 %v71
    %100 = vmatpush.msra.mxu0 %v70
    %101 = vmatpush.msra.mxu0 %v69
    %102 = vmatpush.msra.mxu0 %v68
    %103 = vmatmul.f32.gmra.mxu0 %v82
    %v104 = vpop.f32.mrf.mxu0
    %v105 = vadd.f32 %v78, %v104
    %106 = vmatmul.f32.gmra.mxu0 %v85
    %v107 = vpop.f32.mrf.mxu0
    %v108 = vadd.f32 %v78, %v107
    %109 = vdwg.mxu0
    %v110 = vsel %vm80, %v105, -inf
    %111 = vmax.xlane.f32.xlu0 %v110
    %v112 = vpop.xlane.xlu0 %111
    %v113 = vsel %vm80, %v108, -inf
    %114 = vmax.xlane.f32.xlu0 %v113
    %v115 = vpop.xlane.xlu0 %114
    %v116 = vsub.f32 %v105, %v112
    %v117 = vsub.f32 %v108, %v115
    %v118 = vmul.f32 %v116, 1.442695
    %v119 = vpow.pop %v118
    %v120 = vmul.f32 %v117, 1.442695
    %v121 = vpow.pop %v120
    %v122 = vsel %vm80, %v119, 0.0
    %123 = vadd.xlane.f32.xlu0 %v122
    %v124 = vpop.xlane.xlu0 %123
    %v125 = vsel %vm80, %v121, 0.0
    %126 = vadd.xlane.f32.xlu0 %v125
    %v127 = vpop.xlane.xlu0 %126
    %v128 = vlog2.pop %v124
    %v129 = vmul.f32 %v128, 0.6931472
    %v130 = vlog2.pop %v127
    %v131 = vmul.f32 %v130, 0.6931472
    %v132 = vsub.f32 %v116, %v129
    %v133 = vsub.f32 %v117, %v131
    %134 = vst.msk [vmem:[#allocation2] sm:$0xff] %vm80, %v132
    %135 = vst.msk [vmem:[#allocation2 + $0x8] sm:$0xff] %vm80, %v133
    // Predicated region
    $region22: #{_lambda_.103} parent=1 // pred_check
      _
    $region23: #{_lambda_.103} parent=1 // pred_check_branch
      %137 = sbr.rel (0) target = $region25
    $region24: #{_lambda_.103} parent=1 // pred_region
      %139 = vsyncadd [#allocation3], 0
      %s140 = sshll.u32 [#allocation2], 4
      %s141 = int_to_ptr.vmem [resolvable:$true] %s140
      %s142 = sshll.u32 %s5, 4
      %s143 = int_to_ptr.hbm [resolvable:$true] %s142
      %148 = dma.vmem_to_hbm [thread:$0]  %s141, 256, %s143, [#allocation3], 128, 128, 8
    $region25: #{_lambda_.103} parent=1 // pred_fallthru
      _
    // Predicated region
    $region26: #{_lambda_.103} parent=1 // pred_check
      _
    $region27: #{_lambda_.103} parent=1 // pred_check_branch
      %150 = sbr.rel (0) target = $region29
    $region28: #{_lambda_.103} parent=1 // pred_region
      %152 = dma.done [#allocation3], 256
    $region29: #{_lambda_.103} parent=1 // pred_fallthru
      _
    %153 = vsyncpa [#allocation3], 1

</llo_original>
